<compile_context>
chip_gen: v5e
topology: v5e:2x2
jax: 0.10.0
libtpu: 0.0.40
codegen_flags: <defaults>
</compile_context>

<pallas_src>
import math
import functools

import jax
import jax.numpy as jnp
from jax.experimental import pallas as pl
from jax.experimental.pallas import tpu as pltpu


# ------------------------------ fused kernel -------------------------------

def _fused_forward_kernel(src_ref, emb_w_ref, emb_b_ref, pe_ref,
                          wq_ref, wk_ref, wv_ref, bq_ref, bk_ref, bv_ref,
                          wo_ref, bo_ref, ln1_g_ref, ln1_b_ref,
                          w1_ref, b1_ref, w2_ref, b2_ref, ln2_g_ref, ln2_b_ref,
                          head_w_ref, head_b_ref, out_ref,
                          *, batch, input_dim, nhead, num_layers, eps):
    D = emb_w_ref.shape[1]
    Dh = D // nhead
    scale = 1.0 / math.sqrt(Dh)
    Npad = head_w_ref.shape[1]

    pe = pe_ref[...]            # (S, D)
    emb_w = emb_w_ref[...]      # (Din, D)
    emb_b = emb_b_ref[...]      # (1, D)
    head_w = head_w_ref[...]    # (D, Npad)
    head_b = head_b_ref[...]    # (1, Npad)

    # TODO(synk): dropout (attention / FFN / encoder-layer) is identity here
    # (eval-mode semantics); train-mode dropout is not implemented.
    for b in range(batch):                                   # static unroll
        # src is (S, B*Din); batch b occupies columns [b*Din, (b+1)*Din)
        src_b = src_ref[:, b * input_dim:(b + 1) * input_dim]            # (S, Din)
        x = jnp.dot(src_b, emb_w, preferred_element_type=jnp.float32)
        x = x + emb_b + pe                                               # (S, D)

        for li in range(num_layers):                         # static unroll
            # ---------- multi-head self-attention + residual + LayerNorm1 ----
            y = x + bo_ref[li]                               # residual + out-proj bias
            for h in range(nhead):                           # static unroll
                q = jnp.dot(x, wq_ref[li, h],
                            preferred_element_type=jnp.float32) + bq_ref[li, h]
                k = jnp.dot(x, wk_ref[li, h],
                            preferred_element_type=jnp.float32) + bk_ref[li, h]
                v = jnp.dot(x, wv_ref[li, h],
                            preferred_element_type=jnp.float32) + bv_ref[li, h]
                # scores: contract last dims directly (no in-kernel transpose)
                s = jax.lax.dot_general(q, k, (((1,), (1,)), ((), ())),
                                        preferred_element_type=jnp.float32) * scale
                s = s - jnp.max(s, axis=-1, keepdims=True)
                p = jnp.exp(s)
                p = p * pl.reciprocal(jnp.sum(p, axis=-1, keepdims=True),
                                      approx=True)
                o = jnp.dot(p, v, preferred_element_type=jnp.float32)    # (S, Dh)
                # accumulate per-head output projection (no concatenate)
                y = y + jnp.dot(o, wo_ref[li, h],
                                preferred_element_type=jnp.float32)      # (S, D)
            mean = jnp.mean(y, axis=-1, keepdims=True)
            c = y - mean
            var = jnp.mean(c * c, axis=-1, keepdims=True)
            x = c * jax.lax.rsqrt(var + eps) * ln1_g_ref[li] + ln1_b_ref[li]

            # ---------- FFN + residual + LayerNorm2 ---------------------------
            hdn = jnp.dot(x, w1_ref[li],
                          preferred_element_type=jnp.float32) + b1_ref[li]
            hdn = jnp.maximum(hdn, 0.0)
            y = x + jnp.dot(hdn, w2_ref[li],
                            preferred_element_type=jnp.float32) + b2_ref[li]
            mean = jnp.mean(y, axis=-1, keepdims=True)
            c = y - mean
            var = jnp.mean(c * c, axis=-1, keepdims=True)
            x = c * jax.lax.rsqrt(var + eps) * ln2_g_ref[li] + ln2_b_ref[li]

        # packed, lane-padded heads: [energy | user | anomaly | zero-pad]
        out_b = jnp.dot(x, head_w, preferred_element_type=jnp.float32) + head_b
        out_ref[:, b * Npad:(b + 1) * Npad] = out_b          # 128-aligned lane store


# ------------------------------ pallas wrapper ------------------------------

def _full_spec(shape):
    nd = len(shape)
    return pl.BlockSpec(shape, lambda i, _nd=nd: (0,) * _nd)


def fused_forward(src2, params, *, seq, batch, input_dim, nhead, num_layers,
                  eps=1e-5):
    D = params["emb_w"].shape[1]
    Npad = params["head_w"].shape[1]

    kernel = functools.partial(
        _fused_forward_kernel, batch=batch, input_dim=input_dim,
        nhead=nhead, num_layers=num_layers, eps=eps)

    in_arrays = [
        src2,
        params["emb_w"], params["emb_b"], params["pe"],
        params["wq"], params["wk"], params["wv"],
        params["bq"], params["bk"], params["bv"],
        params["wo"], params["bo"], params["ln1_g"], params["ln1_b"],
        params["w1"], params["b1"], params["w2"], params["b2"],
        params["ln2_g"], params["ln2_b"],
        params["head_w"], params["head_b"],
    ]
    pe_array = params["pe"]
    in_specs = []
    for a in in_arrays:
        if a is pe_array:
            # only the first (seq, D) block of the (max_len, D) PE table is DMA'd
            in_specs.append(pl.BlockSpec((seq, D), lambda i: (0, 0)))
        else:
            in_specs.append(_full_spec(a.shape))

    return pl.pallas_call(
        kernel,
        grid=(1,),
        in_specs=in_specs,
        out_specs=pl.BlockSpec((seq, batch * Npad), lambda i: (0, 0)),
        out_shape=jax.ShapeDtypeStruct((seq, batch * Npad), jnp.float32),
        compiler_params=pltpu.CompilerParams(dimension_semantics=("arbitrary",)),
    )(*in_arrays)


@functools.partial(jax.jit, static_argnames=("nhead", "num_layers", "num_users"))
def smart_home_transformer(params, src, *, nhead, num_layers, num_users):
    """src: (S, B, input_dim) -> (energy (S,B,1), user (S,B,U), anomaly (S,B,1))."""
    S, B, Din = src.shape
    # free minor-dim flatten (bitcast) -- no transpose / copy kernel
    src2 = src.reshape(S, B * Din)
    out = fused_forward(src2, params, seq=S, batch=B, input_dim=Din,
                        nhead=nhead, num_layers=num_layers)
    Npad = params["head_b"].shape[1]
    out3 = out.reshape(S, B, Npad)                           # free (bitcast)
    energy = out3[:, :, 0:1]
    user = out3[:, :, 1:1 + num_users]
    anomaly = out3[:, :, 1 + num_users:2 + num_users]
    return energy, user, anomaly


# --------------------------- parameter creation -----------------------------

def make_positional_encoding(d_model, max_len=5000):
    position = jnp.arange(max_len, dtype=jnp.float32)[:, None]
    div_term = jnp.exp(
        jnp.arange(0, d_model, 2, dtype=jnp.float32) * (-math.log(10000.0) / d_model)
    )
    pe = jnp.zeros((max_len, d_model), dtype=jnp.float32)
    pe = pe.at[:, 0::2].set(jnp.sin(position * div_term))
    pe = pe.at[:, 1::2].set(jnp.cos(position * div_term))
    return pe  # (max_len, d_model)


def init_params(key, input_dim, d_model, nhead, num_layers, dim_ff, num_users,
                head_pad=128):
    Dh = d_model // nhead
    L, H = num_layers, nhead

    def uniform(k, shape, fan_in):
        s = 1.0 / math.sqrt(fan_in)
        return jax.random.uniform(k, shape, jnp.float32, -s, s)

    keys = iter(jax.random.split(key, 64))
    p = {}
    p["emb_w"] = uniform(next(keys), (input_dim, d_model), input_dim)
    p["emb_b"] = uniform(next(keys), (1, d_model), input_dim)
    p["pe"] = make_positional_encoding(d_model)

    # per-head stacked attention weights (host-side reordering, free at init)
    p["wq"] = uniform(next(keys), (L, H, d_model, Dh), d_model)
    p["wk"] = uniform(next(keys), (L, H, d_model, Dh), d_model)
    p["wv"] = uniform(next(keys), (L, H, d_model, Dh), d_model)
    p["bq"] = uniform(next(keys), (L, H, 1, Dh), d_model)
    p["bk"] = uniform(next(keys), (L, H, 1, Dh), d_model)
    p["bv"] = uniform(next(keys), (L, H, 1, Dh), d_model)
    p["wo"] = uniform(next(keys), (L, H, Dh, d_model), d_model)
    p["bo"] = uniform(next(keys), (L, 1, d_model), d_model)
    p["ln1_g"] = jnp.ones((L, 1, d_model), jnp.float32)
    p["ln1_b"] = jnp.zeros((L, 1, d_model), jnp.float32)
    p["w1"] = uniform(next(keys), (L, d_model, dim_ff), d_model)
    p["b1"] = uniform(next(keys), (L, 1, dim_ff), d_model)
    p["w2"] = uniform(next(keys), (L, dim_ff, d_model), dim_ff)
    p["b2"] = uniform(next(keys), (L, 1, d_model), dim_ff)
    p["ln2_g"] = jnp.ones((L, 1, d_model), jnp.float32)
    p["ln2_b"] = jnp.zeros((L, 1, d_model), jnp.float32)

    # packed + lane-padded output heads: columns [energy(1) | user(U) | anomaly(1) | 0]
    n_out = 2 + num_users
    assert head_pad >= n_out
    e_w = uniform(next(keys), (d_model, 1), d_model)
    e_b = uniform(next(keys), (1, 1), d_model)
    u_w = uniform(next(keys), (d_model, num_users), d_model)
    u_b = uniform(next(keys), (1, num_users), d_model)
    a_w = uniform(next(keys), (d_model, 1), d_model)
    a_b = uniform(next(keys), (1, 1), d_model)
    hw = jnp.zeros((d_model, head_pad), jnp.float32)
    hb = jnp.zeros((1, head_pad), jnp.float32)
    hw = hw.at[:, 0:1].set(e_w).at[:, 1:1 + num_users].set(u_w) \
           .at[:, 1 + num_users:n_out].set(a_w)
    hb = hb.at[:, 0:1].set(e_b).at[:, 1:1 + num_users].set(u_b) \
           .at[:, 1 + num_users:n_out].set(a_b)
    p["head_w"] = hw
    p["head_b"] = hb
    return p


# --------------------------------- driver -----------------------------------

if __name__ == "__main__":
    # SmartHomeTransformer(input_dim=8, d_model=32, nhead=4, num_layers=2,
    #                      dim_feedforward=64, num_users=5)
    input_dim, d_model, nhead, num_layers, dim_ff, num_users = 8, 32, 4, 2, 64, 5
    S, B = 8, 2

    key = jax.random.PRNGKey(0)
    k_params, k_src = jax.random.split(key)
    params = init_params(k_params, input_dim, d_model, nhead, num_layers,
                         dim_ff, num_users)
    src = jax.random.normal(k_src, (S, B, input_dim), dtype=jnp.float32)

    energy, user, anomaly = smart_home_transformer(
        params, src, nhead=nhead, num_layers=num_layers, num_users=num_users)
    jax.block_until_ready((energy, user, anomaly))

    assert energy.shape == (S, B, 1)
    assert user.shape == (S, B, num_users)
    assert anomaly.shape == (S, B, 1)
    assert bool(jnp.all(jnp.isfinite(energy)))
    assert bool(jnp.all(jnp.isfinite(user)))
    assert bool(jnp.all(jnp.isfinite(anomaly)))
    print("KERNEL_OK")
</pallas_src>

<mosaic_0001>
module attributes {stable_mosaic.version = 11 : i64} {
  func.func @_fused_forward_kernel(%arg0: i32, %arg1: memref<8x16xf32, #tpu.memory_space<vmem>>, %arg2: memref<8x32xf32, #tpu.memory_space<vmem>>, %arg3: memref<1x32xf32, #tpu.memory_space<vmem>>, %arg4: memref<8x32xf32, #tpu.memory_space<vmem>>, %arg5: memref<2x4x32x8xf32, #tpu.memory_space<vmem>>, %arg6: memref<2x4x32x8xf32, #tpu.memory_space<vmem>>, %arg7: memref<2x4x32x8xf32, #tpu.memory_space<vmem>>, %arg8: memref<2x4x1x8xf32, #tpu.memory_space<vmem>>, %arg9: memref<2x4x1x8xf32, #tpu.memory_space<vmem>>, %arg10: memref<2x4x1x8xf32, #tpu.memory_space<vmem>>, %arg11: memref<2x4x8x32xf32, #tpu.memory_space<vmem>>, %arg12: memref<2x1x32xf32, #tpu.memory_space<vmem>>, %arg13: memref<2x1x32xf32, #tpu.memory_space<vmem>>, %arg14: memref<2x1x32xf32, #tpu.memory_space<vmem>>, %arg15: memref<2x32x64xf32, #tpu.memory_space<vmem>>, %arg16: memref<2x1x64xf32, #tpu.memory_space<vmem>>, %arg17: memref<2x64x32xf32, #tpu.memory_space<vmem>>, %arg18: memref<2x1x32xf32, #tpu.memory_space<vmem>>, %arg19: memref<2x1x32xf32, #tpu.memory_space<vmem>>, %arg20: memref<2x1x32xf32, #tpu.memory_space<vmem>>, %arg21: memref<32x128xf32, #tpu.memory_space<vmem>>, %arg22: memref<1x128xf32, #tpu.memory_space<vmem>>, %arg23: memref<8x256xf32, #tpu.memory_space<vmem>>) attributes {dimension_semantics = [#tpu.dimension_semantics<arbitrary>], iteration_bounds = array<i64: 1>, scalar_prefetch = 0 : i64, scratch_operands = 0 : i64, tpu.core_type = #tpu.core_type<tc>, window_params = [{pipeline_mode = #tpu.pipeline_mode<synchronous>, transform_indices = @transform_0, window_bounds = array<i64: 8, 16>}, {pipeline_mode = #tpu.pipeline_mode<synchronous>, transform_indices = @transform_1, window_bounds = array<i64: 8, 32>}, {pipeline_mode = #tpu.pipeline_mode<synchronous>, transform_indices = @transform_2, window_bounds = array<i64: 1, 32>}, {transform_indices = @transform_3, window_bounds = array<i64: 8, 32>}, {pipeline_mode = #tpu.pipeline_mode<synchronous>, transform_indices = @transform_4, window_bounds = array<i64: 2, 4, 32, 8>}, {pipeline_mode = #tpu.pipeline_mode<synchronous>, transform_indices = @transform_5, window_bounds = array<i64: 2, 4, 32, 8>}, {pipeline_mode = #tpu.pipeline_mode<synchronous>, transform_indices = @transform_6, window_bounds = array<i64: 2, 4, 32, 8>}, {pipeline_mode = #tpu.pipeline_mode<synchronous>, transform_indices = @transform_7, window_bounds = array<i64: 2, 4, 1, 8>}, {pipeline_mode = #tpu.pipeline_mode<synchronous>, transform_indices = @transform_8, window_bounds = array<i64: 2, 4, 1, 8>}, {pipeline_mode = #tpu.pipeline_mode<synchronous>, transform_indices = @transform_9, window_bounds = array<i64: 2, 4, 1, 8>}, {pipeline_mode = #tpu.pipeline_mode<synchronous>, transform_indices = @transform_10, window_bounds = array<i64: 2, 4, 8, 32>}, {pipeline_mode = #tpu.pipeline_mode<synchronous>, transform_indices = @transform_11, window_bounds = array<i64: 2, 1, 32>}, {pipeline_mode = #tpu.pipeline_mode<synchronous>, transform_indices = @transform_12, window_bounds = array<i64: 2, 1, 32>}, {pipeline_mode = #tpu.pipeline_mode<synchronous>, transform_indices = @transform_13, window_bounds = array<i64: 2, 1, 32>}, {pipeline_mode = #tpu.pipeline_mode<synchronous>, transform_indices = @transform_14, window_bounds = array<i64: 2, 32, 64>}, {pipeline_mode = #tpu.pipeline_mode<synchronous>, transform_indices = @transform_15, window_bounds = array<i64: 2, 1, 64>}, {pipeline_mode = #tpu.pipeline_mode<synchronous>, transform_indices = @transform_16, window_bounds = array<i64: 2, 64, 32>}, {pipeline_mode = #tpu.pipeline_mode<synchronous>, transform_indices = @transform_17, window_bounds = array<i64: 2, 1, 32>}, {pipeline_mode = #tpu.pipeline_mode<synchronous>, transform_indices = @transform_18, window_bounds = array<i64: 2, 1, 32>}, {pipeline_mode = #tpu.pipeline_mode<synchronous>, transform_indices = @transform_19, window_bounds = array<i64: 2, 1, 32>}, {pipeline_mode = #tpu.pipeline_mode<synchronous>, transform_indices = @transform_20, window_bounds = array<i64: 32, 128>}, {pipeline_mode = #tpu.pipeline_mode<synchronous>, transform_indices = @transform_21, window_bounds = array<i64: 1, 128>}, {pipeline_mode = #tpu.pipeline_mode<synchronous>, transform_indices = @transform_22, window_bounds = array<i64: 8, 256>}]} {
    %c0 = arith.constant 0 : index
    %c0_0 = arith.constant 0 : index
    %0 = vector.load %arg4[%c0, %c0_0] : memref<8x32xf32, #tpu.memory_space<vmem>>, vector<8x32xf32>
    %c0_1 = arith.constant 0 : index
    %c0_2 = arith.constant 0 : index
    %1 = vector.load %arg2[%c0_1, %c0_2] : memref<8x32xf32, #tpu.memory_space<vmem>>, vector<8x32xf32>
    %c0_3 = arith.constant 0 : index
    %c0_4 = arith.constant 0 : index
    %2 = vector.load %arg3[%c0_3, %c0_4] : memref<1x32xf32, #tpu.memory_space<vmem>>, vector<1x32xf32>
    %c0_5 = arith.constant 0 : index
    %c0_6 = arith.constant 0 : index
    %3 = vector.load %arg21[%c0_5, %c0_6] : memref<32x128xf32, #tpu.memory_space<vmem>>, vector<32x128xf32>
    %c0_7 = arith.constant 0 : index
    %c0_8 = arith.constant 0 : index
    %4 = vector.load %arg22[%c0_7, %c0_8] : memref<1x128xf32, #tpu.memory_space<vmem>>, vector<1x128xf32>
    %c0_9 = arith.constant 0 : index
    %c0_10 = arith.constant 0 : index
    %5 = vector.load %arg1[%c0_9, %c0_10] : memref<8x16xf32, #tpu.memory_space<vmem>>, vector<8x8xf32>
    %cst = arith.constant dense<0.000000e+00> : vector<8x32xf32>
    %6 = tpu.matmul %5, %1, %cst {dimension_numbers = #tpu.dot_dimension_numbers<[1], [0], [0], [1], [0, 0, 1, 1], [], []>} : vector<8x8xf32>, vector<8x32xf32>, vector<8x32xf32> -> vector<8x32xf32>
    %7 = vector.broadcast %2 : vector<1x32xf32> to vector<8x32xf32>
    %8 = arith.addf %6, %7 : vector<8x32xf32>
    %9 = arith.addf %8, %0 : vector<8x32xf32>
    %c0_11 = arith.constant 0 : index
    %c0_12 = arith.constant 0 : index
    %c0_13 = arith.constant 0 : index
    %10 = vector.load %arg12[%c0_11, %c0_12, %c0_13] : memref<2x1x32xf32, #tpu.memory_space<vmem>>, vector<1x1x32xf32>
    %11 = vector.shape_cast %10 : vector<1x1x32xf32> to vector<1x32xf32>
    %12 = vector.broadcast %11 : vector<1x32xf32> to vector<8x32xf32>
    %13 = arith.addf %9, %12 : vector<8x32xf32>
    %c0_14 = arith.constant 0 : index
    %c0_15 = arith.constant 0 : index
    %c0_16 = arith.constant 0 : index
    %c0_17 = arith.constant 0 : index
    %14 = vector.load %arg5[%c0_14, %c0_15, %c0_16, %c0_17] : memref<2x4x32x8xf32, #tpu.memory_space<vmem>>, vector<1x1x32x8xf32>
    %15 = vector.shape_cast %14 : vector<1x1x32x8xf32> to vector<32x8xf32>
    %cst_18 = arith.constant dense<0.000000e+00> : vector<8x8xf32>
    %16 = tpu.matmul %9, %15, %cst_18 {dimension_numbers = #tpu.dot_dimension_numbers<[1], [0], [0], [1], [0, 0, 1, 1], [], []>} : vector<8x32xf32>, vector<32x8xf32>, vector<8x8xf32> -> vector<8x8xf32>
    %c0_19 = arith.constant 0 : index
    %c0_20 = arith.constant 0 : index
    %c0_21 = arith.constant 0 : index
    %c0_22 = arith.constant 0 : index
    %17 = vector.load %arg8[%c0_19, %c0_20, %c0_21, %c0_22] : memref<2x4x1x8xf32, #tpu.memory_space<vmem>>, vector<1x1x1x8xf32>
    %18 = vector.shape_cast %17 : vector<1x1x1x8xf32> to vector<1x8xf32>
    %19 = vector.broadcast %18 : vector<1x8xf32> to vector<8x8xf32>
    %20 = arith.addf %16, %19 : vector<8x8xf32>
    %c0_23 = arith.constant 0 : index
    %c0_24 = arith.constant 0 : index
    %c0_25 = arith.constant 0 : index
    %c0_26 = arith.constant 0 : index
    %21 = vector.load %arg6[%c0_23, %c0_24, %c0_25, %c0_26] : memref<2x4x32x8xf32, #tpu.memory_space<vmem>>, vector<1x1x32x8xf32>
    %22 = vector.shape_cast %21 : vector<1x1x32x8xf32> to vector<32x8xf32>
    %cst_27 = arith.constant dense<0.000000e+00> : vector<8x8xf32>
    %23 = tpu.matmul %9, %22, %cst_27 {dimension_numbers = #tpu.dot_dimension_numbers<[1], [0], [0], [1], [0, 0, 1, 1], [], []>} : vector<8x32xf32>, vector<32x8xf32>, vector<8x8xf32> -> vector<8x8xf32>
    %c0_28 = arith.constant 0 : index
    %c0_29 = arith.constant 0 : index
    %c0_30 = arith.constant 0 : index
    %c0_31 = arith.constant 0 : index
    %24 = vector.load %arg9[%c0_28, %c0_29, %c0_30, %c0_31] : memref<2x4x1x8xf32, #tpu.memory_space<vmem>>, vector<1x1x1x8xf32>
    %25 = vector.shape_cast %24 : vector<1x1x1x8xf32> to vector<1x8xf32>
    %26 = vector.broadcast %25 : vector<1x8xf32> to vector<8x8xf32>
    %27 = arith.addf %23, %26 : vector<8x8xf32>
    %c0_32 = arith.constant 0 : index
    %c0_33 = arith.constant 0 : index
    %c0_34 = arith.constant 0 : index
    %c0_35 = arith.constant 0 : index
    %28 = vector.load %arg7[%c0_32, %c0_33, %c0_34, %c0_35] : memref<2x4x32x8xf32, #tpu.memory_space<vmem>>, vector<1x1x32x8xf32>
    %29 = vector.shape_cast %28 : vector<1x1x32x8xf32> to vector<32x8xf32>
    %cst_36 = arith.constant dense<0.000000e+00> : vector<8x8xf32>
    %30 = tpu.matmul %9, %29, %cst_36 {dimension_numbers = #tpu.dot_dimension_numbers<[1], [0], [0], [1], [0, 0, 1, 1], [], []>} : vector<8x32xf32>, vector<32x8xf32>, vector<8x8xf32> -> vector<8x8xf32>
    %c0_37 = arith.constant 0 : index
    %c0_38 = arith.constant 0 : index
    %c0_39 = arith.constant 0 : index
    %c0_40 = arith.constant 0 : index
    %31 = vector.load %arg10[%c0_37, %c0_38, %c0_39, %c0_40] : memref<2x4x1x8xf32, #tpu.memory_space<vmem>>, vector<1x1x1x8xf32>
    %32 = vector.shape_cast %31 : vector<1x1x1x8xf32> to vector<1x8xf32>
    %33 = vector.broadcast %32 : vector<1x8xf32> to vector<8x8xf32>
    %34 = arith.addf %30, %33 : vector<8x8xf32>
    %cst_41 = arith.constant dense<0.000000e+00> : vector<8x8xf32>
    %35 = tpu.matmul %20, %27, %cst_41 {dimension_numbers = #tpu.dot_dimension_numbers<[1], [1], [0], [0], [0, 0, 1, 0], [], []>} : vector<8x8xf32>, vector<8x8xf32>, vector<8x8xf32> -> vector<8x8xf32>
    %cst_42 = arith.constant 0.353553385 : f32
    %36 = vector.broadcast %cst_42 : f32 to vector<8x8xf32>
    %37 = arith.mulf %35, %36 : vector<8x8xf32>
    %cst_43 = arith.constant dense<0xFF800000> : vector<8xf32>
    %38 = vector.multi_reduction <maximumf>, %37, %cst_43 [1] : vector<8x8xf32> to vector<8xf32>
    %39 = vector.shape_cast %38 : vector<8xf32> to vector<8x1xf32>
    %40 = vector.broadcast %39 : vector<8x1xf32> to vector<8x8xf32>
    %41 = arith.subf %37, %40 : vector<8x8xf32>
    %42 = math.exp %41 : vector<8x8xf32>
    %cst_44 = arith.constant dense<0.000000e+00> : vector<8xf32>
    %43 = vector.multi_reduction <add>, %42, %cst_44 [1] : vector<8x8xf32> to vector<8xf32>
    %44 = vector.shape_cast %43 : vector<8xf32> to vector<8x1xf32>
    %45 = tpu.reciprocal %44 {approx = true} : vector<8x1xf32> -> vector<8x1xf32>
    %46 = vector.broadcast %45 : vector<8x1xf32> to vector<8x8xf32>
    %47 = arith.mulf %42, %46 : vector<8x8xf32>
    %cst_45 = arith.constant dense<0.000000e+00> : vector<8x8xf32>
    %48 = tpu.matmul %47, %34, %cst_45 {dimension_numbers = #tpu.dot_dimension_numbers<[1], [0], [0], [1], [0, 0, 1, 1], [], []>} : vector<8x8xf32>, vector<8x8xf32>, vector<8x8xf32> -> vector<8x8xf32>
    %c0_46 = arith.constant 0 : index
    %c0_47 = arith.constant 0 : index
    %c0_48 = arith.constant 0 : index
    %c0_49 = arith.constant 0 : index
    %49 = vector.load %arg11[%c0_46, %c0_47, %c0_48, %c0_49] : memref<2x4x8x32xf32, #tpu.memory_space<vmem>>, vector<1x1x8x32xf32>
    %50 = vector.shape_cast %49 : vector<1x1x8x32xf32> to vector<8x32xf32>
    %cst_50 = arith.constant dense<0.000000e+00> : vector<8x32xf32>
    %51 = tpu.matmul %48, %50, %cst_50 {dimension_numbers = #tpu.dot_dimension_numbers<[1], [0], [0], [1], [0, 0, 1, 1], [], []>} : vector<8x8xf32>, vector<8x32xf32>, vector<8x32xf32> -> vector<8x32xf32>
    %52 = arith.addf %13, %51 : vector<8x32xf32>
    %c0_51 = arith.constant 0 : index
    %c1 = arith.constant 1 : index
    %c0_52 = arith.constant 0 : index
    %c0_53 = arith.constant 0 : index
    %53 = vector.load %arg5[%c0_51, %c1, %c0_52, %c0_53] : memref<2x4x32x8xf32, #tpu.memory_space<vmem>>, vector<1x1x32x8xf32>
    %54 = vector.shape_cast %53 : vector<1x1x32x8xf32> to vector<32x8xf32>
    %cst_54 = arith.constant dense<0.000000e+00> : vector<8x8xf32>
    %55 = tpu.matmul %9, %54, %cst_54 {dimension_numbers = #tpu.dot_dimension_numbers<[1], [0], [0], [1], [0, 0, 1, 1], [], []>} : vector<8x32xf32>, vector<32x8xf32>, vector<8x8xf32> -> vector<8x8xf32>
    %c0_55 = arith.constant 0 : index
    %c1_56 = arith.constant 1 : index
    %c0_57 = arith.constant 0 : index
    %c0_58 = arith.constant 0 : index
    %56 = vector.load %arg8[%c0_55, %c1_56, %c0_57, %c0_58] : memref<2x4x1x8xf32, #tpu.memory_space<vmem>>, vector<1x1x1x8xf32>
    %57 = vector.shape_cast %56 : vector<1x1x1x8xf32> to vector<1x8xf32>
    %58 = vector.broadcast %57 : vector<1x8xf32> to vector<8x8xf32>
    %59 = arith.addf %55, %58 : vector<8x8xf32>
    %c0_59 = arith.constant 0 : index
    %c1_60 = arith.constant 1 : index
    %c0_61 = arith.constant 0 : index
    %c0_62 = arith.constant 0 : index
    %60 = vector.load %arg6[%c0_59, %c1_60, %c0_61, %c0_62] : memref<2x4x32x8xf32, #tpu.memory_space<vmem>>, vector<1x1x32x8xf32>
    %61 = vector.shape_cast %60 : vector<1x1x32x8xf32> to vector<32x8xf32>
    %cst_63 = arith.constant dense<0.000000e+00> : vector<8x8xf32>
    %62 = tpu.matmul %9, %61, %cst_63 {dimension_numbers = #tpu.dot_dimension_numbers<[1], [0], [0], [1], [0, 0, 1, 1], [], []>} : vector<8x32xf32>, vector<32x8xf32>, vector<8x8xf32> -> vector<8x8xf32>
    %c0_64 = arith.constant 0 : index
    %c1_65 = arith.constant 1 : index
    %c0_66 = arith.constant 0 : index
    %c0_67 = arith.constant 0 : index
    %63 = vector.load %arg9[%c0_64, %c1_65, %c0_66, %c0_67] : memref<2x4x1x8xf32, #tpu.memory_space<vmem>>, vector<1x1x1x8xf32>
    %64 = vector.shape_cast %63 : vector<1x1x1x8xf32> to vector<1x8xf32>
    %65 = vector.broadcast %64 : vector<1x8xf32> to vector<8x8xf32>
    %66 = arith.addf %62, %65 : vector<8x8xf32>
    %c0_68 = arith.constant 0 : index
    %c1_69 = arith.constant 1 : index
    %c0_70 = arith.constant 0 : index
    %c0_71 = arith.constant 0 : index
    %67 = vector.load %arg7[%c0_68, %c1_69, %c0_70, %c0_71] : memref<2x4x32x8xf32, #tpu.memory_space<vmem>>, vector<1x1x32x8xf32>
    %68 = vector.shape_cast %67 : vector<1x1x32x8xf32> to vector<32x8xf32>
    %cst_72 = arith.constant dense<0.000000e+00> : vector<8x8xf32>
    %69 = tpu.matmul %9, %68, %cst_72 {dimension_numbers = #tpu.dot_dimension_numbers<[1], [0], [0], [1], [0, 0, 1, 1], [], []>} : vector<8x32xf32>, vector<32x8xf32>, vector<8x8xf32> -> vector<8x8xf32>
    %c0_73 = arith.constant 0 : index
    %c1_74 = arith.constant 1 : index
    %c0_75 = arith.constant 0 : index
    %c0_76 = arith.constant 0 : index
    %70 = vector.load %arg10[%c0_73, %c1_74, %c0_75, %c0_76] : memref<2x4x1x8xf32, #tpu.memory_space<vmem>>, vector<1x1x1x8xf32>
    %71 = vector.shape_cast %70 : vector<1x1x1x8xf32> to vector<1x8xf32>
    %72 = vector.broadcast %71 : vector<1x8xf32> to vector<8x8xf32>
    %73 = arith.addf %69, %72 : vector<8x8xf32>
    %cst_77 = arith.constant dense<0.000000e+00> : vector<8x8xf32>
    %74 = tpu.matmul %59, %66, %cst_77 {dimension_numbers = #tpu.dot_dimension_numbers<[1], [1], [0], [0], [0, 0, 1, 0], [], []>} : vector<8x8xf32>, vector<8x8xf32>, vector<8x8xf32> -> vector<8x8xf32>
    %cst_78 = arith.constant 0.353553385 : f32
    %75 = vector.broadcast %cst_78 : f32 to vector<8x8xf32>
    %76 = arith.mulf %74, %75 : vector<8x8xf32>
    %cst_79 = arith.constant dense<0xFF800000> : vector<8xf32>
    %77 = vector.multi_reduction <maximumf>, %76, %cst_79 [1] : vector<8x8xf32> to vector<8xf32>
    %78 = vector.shape_cast %77 : vector<8xf32> to vector<8x1xf32>
    %79 = vector.broadcast %78 : vector<8x1xf32> to vector<8x8xf32>
    %80 = arith.subf %76, %79 : vector<8x8xf32>
    %81 = math.exp %80 : vector<8x8xf32>
    %cst_80 = arith.constant dense<0.000000e+00> : vector<8xf32>
    %82 = vector.multi_reduction <add>, %81, %cst_80 [1] : vector<8x8xf32> to vector<8xf32>
    %83 = vector.shape_cast %82 : vector<8xf32> to vector<8x1xf32>
    %84 = tpu.reciprocal %83 {approx = true} : vector<8x1xf32> -> vector<8x1xf32>
    %85 = vector.broadcast %84 : vector<8x1xf32> to vector<8x8xf32>
    %86 = arith.mulf %81, %85 : vector<8x8xf32>
    %cst_81 = arith.constant dense<0.000000e+00> : vector<8x8xf32>
    %87 = tpu.matmul %86, %73, %cst_81 {dimension_numbers = #tpu.dot_dimension_numbers<[1], [0], [0], [1], [0, 0, 1, 1], [], []>} : vector<8x8xf32>, vector<8x8xf32>, vector<8x8xf32> -> vector<8x8xf32>
    %c0_82 = arith.constant 0 : index
    %c1_83 = arith.constant 1 : index
    %c0_84 = arith.constant 0 : index
    %c0_85 = arith.constant 0 : index
    %88 = vector.load %arg11[%c0_82, %c1_83, %c0_84, %c0_85] : memref<2x4x8x32xf32, #tpu.memory_space<vmem>>, vector<1x1x8x32xf32>
    %89 = vector.shape_cast %88 : vector<1x1x8x32xf32> to vector<8x32xf32>
    %cst_86 = arith.constant dense<0.000000e+00> : vector<8x32xf32>
    %90 = tpu.matmul %87, %89, %cst_86 {dimension_numbers = #tpu.dot_dimension_numbers<[1], [0], [0], [1], [0, 0, 1, 1], [], []>} : vector<8x8xf32>, vector<8x32xf32>, vector<8x32xf32> -> vector<8x32xf32>
    %91 = arith.addf %52, %90 : vector<8x32xf32>
    %c0_87 = arith.constant 0 : index
    %c2 = arith.constant 2 : index
    %c0_88 = arith.constant 0 : index
    %c0_89 = arith.constant 0 : index
    %92 = vector.load %arg5[%c0_87, %c2, %c0_88, %c0_89] : memref<2x4x32x8xf32, #tpu.memory_space<vmem>>, vector<1x1x32x8xf32>
    %93 = vector.shape_cast %92 : vector<1x1x32x8xf32> to vector<32x8xf32>
    %cst_90 = arith.constant dense<0.000000e+00> : vector<8x8xf32>
    %94 = tpu.matmul %9, %93, %cst_90 {dimension_numbers = #tpu.dot_dimension_numbers<[1], [0], [0], [1], [0, 0, 1, 1], [], []>} : vector<8x32xf32>, vector<32x8xf32>, vector<8x8xf32> -> vector<8x8xf32>
    %c0_91 = arith.constant 0 : index
    %c2_92 = arith.constant 2 : index
    %c0_93 = arith.constant 0 : index
    %c0_94 = arith.constant 0 : index
    %95 = vector.load %arg8[%c0_91, %c2_92, %c0_93, %c0_94] : memref<2x4x1x8xf32, #tpu.memory_space<vmem>>, vector<1x1x1x8xf32>
    %96 = vector.shape_cast %95 : vector<1x1x1x8xf32> to vector<1x8xf32>
    %97 = vector.broadcast %96 : vector<1x8xf32> to vector<8x8xf32>
    %98 = arith.addf %94, %97 : vector<8x8xf32>
    %c0_95 = arith.constant 0 : index
    %c2_96 = arith.constant 2 : index
    %c0_97 = arith.constant 0 : index
    %c0_98 = arith.constant 0 : index
    %99 = vector.load %arg6[%c0_95, %c2_96, %c0_97, %c0_98] : memref<2x4x32x8xf32, #tpu.memory_space<vmem>>, vector<1x1x32x8xf32>
    %100 = vector.shape_cast %99 : vector<1x1x32x8xf32> to vector<32x8xf32>
    %cst_99 = arith.constant dense<0.000000e+00> : vector<8x8xf32>
    %101 = tpu.matmul %9, %100, %cst_99 {dimension_numbers = #tpu.dot_dimension_numbers<[1], [0], [0], [1], [0, 0, 1, 1], [], []>} : vector<8x32xf32>, vector<32x8xf32>, vector<8x8xf32> -> vector<8x8xf32>
    %c0_100 = arith.constant 0 : index
    %c2_101 = arith.constant 2 : index
    %c0_102 = arith.constant 0 : index
    %c0_103 = arith.constant 0 : index
    %102 = vector.load %arg9[%c0_100, %c2_101, %c0_102, %c0_103] : memref<2x4x1x8xf32, #tpu.memory_space<vmem>>, vector<1x1x1x8xf32>
    %103 = vector.shape_cast %102 : vector<1x1x1x8xf32> to vector<1x8xf32>
    %104 = vector.broadcast %103 : vector<1x8xf32> to vector<8x8xf32>
    %105 = arith.addf %101, %104 : vector<8x8xf32>
    %c0_104 = arith.constant 0 : index
    %c2_105 = arith.constant 2 : index
    %c0_106 = arith.constant 0 : index
    %c0_107 = arith.constant 0 : index
    %106 = vector.load %arg7[%c0_104, %c2_105, %c0_106, %c0_107] : memref<2x4x32x8xf32, #tpu.memory_space<vmem>>, vector<1x1x32x8xf32>
    %107 = vector.shape_cast %106 : vector<1x1x32x8xf32> to vector<32x8xf32>
    %cst_108 = arith.constant dense<0.000000e+00> : vector<8x8xf32>
    %108 = tpu.matmul %9, %107, %cst_108 {dimension_numbers = #tpu.dot_dimension_numbers<[1], [0], [0], [1], [0, 0, 1, 1], [], []>} : vector<8x32xf32>, vector<32x8xf32>, vector<8x8xf32> -> vector<8x8xf32>
    %c0_109 = arith.constant 0 : index
    %c2_110 = arith.constant 2 : index
    %c0_111 = arith.constant 0 : index
    %c0_112 = arith.constant 0 : index
    %109 = vector.load %arg10[%c0_109, %c2_110, %c0_111, %c0_112] : memref<2x4x1x8xf32, #tpu.memory_space<vmem>>, vector<1x1x1x8xf32>
    %110 = vector.shape_cast %109 : vector<1x1x1x8xf32> to vector<1x8xf32>
    %111 = vector.broadcast %110 : vector<1x8xf32> to vector<8x8xf32>
    %112 = arith.addf %108, %111 : vector<8x8xf32>
    %cst_113 = arith.constant dense<0.000000e+00> : vector<8x8xf32>
    %113 = tpu.matmul %98, %105, %cst_113 {dimension_numbers = #tpu.dot_dimension_numbers<[1], [1], [0], [0], [0, 0, 1, 0], [], []>} : vector<8x8xf32>, vector<8x8xf32>, vector<8x8xf32> -> vector<8x8xf32>
    %cst_114 = arith.constant 0.353553385 : f32
    %114 = vector.broadcast %cst_114 : f32 to vector<8x8xf32>
    %115 = arith.mulf %113, %114 : vector<8x8xf32>
    %cst_115 = arith.constant dense<0xFF800000> : vector<8xf32>
    %116 = vector.multi_reduction <maximumf>, %115, %cst_115 [1] : vector<8x8xf32> to vector<8xf32>
    %117 = vector.shape_cast %116 : vector<8xf32> to vector<8x1xf32>
    %118 = vector.broadcast %117 : vector<8x1xf32> to vector<8x8xf32>
    %119 = arith.subf %115, %118 : vector<8x8xf32>
    %120 = math.exp %119 : vector<8x8xf32>
    %cst_116 = arith.constant dense<0.000000e+00> : vector<8xf32>
    %121 = vector.multi_reduction <add>, %120, %cst_116 [1] : vector<8x8xf32> to vector<8xf32>
    %122 = vector.shape_cast %121 : vector<8xf32> to vector<8x1xf32>
    %123 = tpu.reciprocal %122 {approx = true} : vector<8x1xf32> -> vector<8x1xf32>
    %124 = vector.broadcast %123 : vector<8x1xf32> to vector<8x8xf32>
    %125 = arith.mulf %120, %124 : vector<8x8xf32>
    %cst_117 = arith.constant dense<0.000000e+00> : vector<8x8xf32>
    %126 = tpu.matmul %125, %112, %cst_117 {dimension_numbers = #tpu.dot_dimension_numbers<[1], [0], [0], [1], [0, 0, 1, 1], [], []>} : vector<8x8xf32>, vector<8x8xf32>, vector<8x8xf32> -> vector<8x8xf32>
    %c0_118 = arith.constant 0 : index
    %c2_119 = arith.constant 2 : index
    %c0_120 = arith.constant 0 : index
    %c0_121 = arith.constant 0 : index
    %127 = vector.load %arg11[%c0_118, %c2_119, %c0_120, %c0_121] : memref<2x4x8x32xf32, #tpu.memory_space<vmem>>, vector<1x1x8x32xf32>
    %128 = vector.shape_cast %127 : vector<1x1x8x32xf32> to vector<8x32xf32>
    %cst_122 = arith.constant dense<0.000000e+00> : vector<8x32xf32>
    %129 = tpu.matmul %126, %128, %cst_122 {dimension_numbers = #tpu.dot_dimension_numbers<[1], [0], [0], [1], [0, 0, 1, 1], [], []>} : vector<8x8xf32>, vector<8x32xf32>, vector<8x32xf32> -> vector<8x32xf32>
    %130 = arith.addf %91, %129 : vector<8x32xf32>
    %c0_123 = arith.constant 0 : index
    %c3 = arith.constant 3 : index
    %c0_124 = arith.constant 0 : index
    %c0_125 = arith.constant 0 : index
    %131 = vector.load %arg5[%c0_123, %c3, %c0_124, %c0_125] : memref<2x4x32x8xf32, #tpu.memory_space<vmem>>, vector<1x1x32x8xf32>
    %132 = vector.shape_cast %131 : vector<1x1x32x8xf32> to vector<32x8xf32>
    %cst_126 = arith.constant dense<0.000000e+00> : vector<8x8xf32>
    %133 = tpu.matmul %9, %132, %cst_126 {dimension_numbers = #tpu.dot_dimension_numbers<[1], [0], [0], [1], [0, 0, 1, 1], [], []>} : vector<8x32xf32>, vector<32x8xf32>, vector<8x8xf32> -> vector<8x8xf32>
    %c0_127 = arith.constant 0 : index
    %c3_128 = arith.constant 3 : index
    %c0_129 = arith.constant 0 : index
    %c0_130 = arith.constant 0 : index
    %134 = vector.load %arg8[%c0_127, %c3_128, %c0_129, %c0_130] : memref<2x4x1x8xf32, #tpu.memory_space<vmem>>, vector<1x1x1x8xf32>
    %135 = vector.shape_cast %134 : vector<1x1x1x8xf32> to vector<1x8xf32>
    %136 = vector.broadcast %135 : vector<1x8xf32> to vector<8x8xf32>
    %137 = arith.addf %133, %136 : vector<8x8xf32>
    %c0_131 = arith.constant 0 : index
    %c3_132 = arith.constant 3 : index
    %c0_133 = arith.constant 0 : index
    %c0_134 = arith.constant 0 : index
    %138 = vector.load %arg6[%c0_131, %c3_132, %c0_133, %c0_134] : memref<2x4x32x8xf32, #tpu.memory_space<vmem>>, vector<1x1x32x8xf32>
    %139 = vector.shape_cast %138 : vector<1x1x32x8xf32> to vector<32x8xf32>
    %cst_135 = arith.constant dense<0.000000e+00> : vector<8x8xf32>
    %140 = tpu.matmul %9, %139, %cst_135 {dimension_numbers = #tpu.dot_dimension_numbers<[1], [0], [0], [1], [0, 0, 1, 1], [], []>} : vector<8x32xf32>, vector<32x8xf32>, vector<8x8xf32> -> vector<8x8xf32>
    %c0_136 = arith.constant 0 : index
    %c3_137 = arith.constant 3 : index
    %c0_138 = arith.constant 0 : index
    %c0_139 = arith.constant 0 : index
    %141 = vector.load %arg9[%c0_136, %c3_137, %c0_138, %c0_139] : memref<2x4x1x8xf32, #tpu.memory_space<vmem>>, vector<1x1x1x8xf32>
    %142 = vector.shape_cast %141 : vector<1x1x1x8xf32> to vector<1x8xf32>
    %143 = vector.broadcast %142 : vector<1x8xf32> to vector<8x8xf32>
    %144 = arith.addf %140, %143 : vector<8x8xf32>
    %c0_140 = arith.constant 0 : index
    %c3_141 = arith.constant 3 : index
    %c0_142 = arith.constant 0 : index
    %c0_143 = arith.constant 0 : index
    %145 = vector.load %arg7[%c0_140, %c3_141, %c0_142, %c0_143] : memref<2x4x32x8xf32, #tpu.memory_space<vmem>>, vector<1x1x32x8xf32>
    %146 = vector.shape_cast %145 : vector<1x1x32x8xf32> to vector<32x8xf32>
    %cst_144 = arith.constant dense<0.000000e+00> : vector<8x8xf32>
    %147 = tpu.matmul %9, %146, %cst_144 {dimension_numbers = #tpu.dot_dimension_numbers<[1], [0], [0], [1], [0, 0, 1, 1], [], []>} : vector<8x32xf32>, vector<32x8xf32>, vector<8x8xf32> -> vector<8x8xf32>
    %c0_145 = arith.constant 0 : index
    %c3_146 = arith.constant 3 : index
    %c0_147 = arith.constant 0 : index
    %c0_148 = arith.constant 0 : index
    %148 = vector.load %arg10[%c0_145, %c3_146, %c0_147, %c0_148] : memref<2x4x1x8xf32, #tpu.memory_space<vmem>>, vector<1x1x1x8xf32>
    %149 = vector.shape_cast %148 : vector<1x1x1x8xf32> to vector<1x8xf32>
    %150 = vector.broadcast %149 : vector<1x8xf32> to vector<8x8xf32>
    %151 = arith.addf %147, %150 : vector<8x8xf32>
    %cst_149 = arith.constant dense<0.000000e+00> : vector<8x8xf32>
    %152 = tpu.matmul %137, %144, %cst_149 {dimension_numbers = #tpu.dot_dimension_numbers<[1], [1], [0], [0], [0, 0, 1, 0], [], []>} : vector<8x8xf32>, vector<8x8xf32>, vector<8x8xf32> -> vector<8x8xf32>
    %cst_150 = arith.constant 0.353553385 : f32
    %153 = vector.broadcast %cst_150 : f32 to vector<8x8xf32>
    %154 = arith.mulf %152, %153 : vector<8x8xf32>
    %cst_151 = arith.constant dense<0xFF800000> : vector<8xf32>
    %155 = vector.multi_reduction <maximumf>, %154, %cst_151 [1] : vector<8x8xf32> to vector<8xf32>
    %156 = vector.shape_cast %155 : vector<8xf32> to vector<8x1xf32>
    %157 = vector.broadcast %156 : vector<8x1xf32> to vector<8x8xf32>
    %158 = arith.subf %154, %157 : vector<8x8xf32>
    %159 = math.exp %158 : vector<8x8xf32>
    %cst_152 = arith.constant dense<0.000000e+00> : vector<8xf32>
    %160 = vector.multi_reduction <add>, %159, %cst_152 [1] : vector<8x8xf32> to vector<8xf32>
    %161 = vector.shape_cast %160 : vector<8xf32> to vector<8x1xf32>
    %162 = tpu.reciprocal %161 {approx = true} : vector<8x1xf32> -> vector<8x1xf32>
    %163 = vector.broadcast %162 : vector<8x1xf32> to vector<8x8xf32>
    %164 = arith.mulf %159, %163 : vector<8x8xf32>
    %cst_153 = arith.constant dense<0.000000e+00> : vector<8x8xf32>
    %165 = tpu.matmul %164, %151, %cst_153 {dimension_numbers = #tpu.dot_dimension_numbers<[1], [0], [0], [1], [0, 0, 1, 1], [], []>} : vector<8x8xf32>, vector<8x8xf32>, vector<8x8xf32> -> vector<8x8xf32>
    %c0_154 = arith.constant 0 : index
    %c3_155 = arith.constant 3 : index
    %c0_156 = arith.constant 0 : index
    %c0_157 = arith.constant 0 : index
    %166 = vector.load %arg11[%c0_154, %c3_155, %c0_156, %c0_157] : memref<2x4x8x32xf32, #tpu.memory_space<vmem>>, vector<1x1x8x32xf32>
    %167 = vector.shape_cast %166 : vector<1x1x8x32xf32> to vector<8x32xf32>
    %cst_158 = arith.constant dense<0.000000e+00> : vector<8x32xf32>
    %168 = tpu.matmul %165, %167, %cst_158 {dimension_numbers = #tpu.dot_dimension_numbers<[1], [0], [0], [1], [0, 0, 1, 1], [], []>} : vector<8x8xf32>, vector<8x32xf32>, vector<8x32xf32> -> vector<8x32xf32>
    %169 = arith.addf %130, %168 : vector<8x32xf32>
    %cst_159 = arith.constant dense<0.000000e+00> : vector<8xf32>
    %170 = vector.multi_reduction <add>, %169, %cst_159 [1] : vector<8x32xf32> to vector<8xf32>
    %171 = vector.shape_cast %170 : vector<8xf32> to vector<8x1xf32>
    %cst_160 = arith.constant 3.200000e+01 : f32
    %172 = vector.broadcast %cst_160 : f32 to vector<8x1xf32>
    %173 = arith.divf %171, %172 : vector<8x1xf32>
    %174 = vector.broadcast %173 : vector<8x1xf32> to vector<8x32xf32>
    %175 = arith.subf %169, %174 : vector<8x32xf32>
    %176 = arith.mulf %175, %175 : vector<8x32xf32>
    %cst_161 = arith.constant dense<0.000000e+00> : vector<8xf32>
    %177 = vector.multi_reduction <add>, %176, %cst_161 [1] : vector<8x32xf32> to vector<8xf32>
    %178 = vector.shape_cast %177 : vector<8xf32> to vector<8x1xf32>
    %cst_162 = arith.constant 3.200000e+01 : f32
    %179 = vector.broadcast %cst_162 : f32 to vector<8x1xf32>
    %180 = arith.divf %178, %179 : vector<8x1xf32>
    %cst_163 = arith.constant 9.99999974E-6 : f32
    %181 = vector.broadcast %cst_163 : f32 to vector<8x1xf32>
    %182 = arith.addf %180, %181 : vector<8x1xf32>
    %183 = math.rsqrt %182 : vector<8x1xf32>
    %184 = vector.broadcast %183 : vector<8x1xf32> to vector<8x32xf32>
    %185 = arith.mulf %175, %184 : vector<8x32xf32>
    %c0_164 = arith.constant 0 : index
    %c0_165 = arith.constant 0 : index
    %c0_166 = arith.constant 0 : index
    %186 = vector.load %arg13[%c0_164, %c0_165, %c0_166] : memref<2x1x32xf32, #tpu.memory_space<vmem>>, vector<1x1x32xf32>
    %187 = vector.shape_cast %186 : vector<1x1x32xf32> to vector<1x32xf32>
    %188 = vector.broadcast %187 : vector<1x32xf32> to vector<8x32xf32>
    %189 = arith.mulf %185, %188 : vector<8x32xf32>
    %c0_167 = arith.constant 0 : index
    %c0_168 = arith.constant 0 : index
    %c0_169 = arith.constant 0 : index
    %190 = vector.load %arg14[%c0_167, %c0_168, %c0_169] : memref<2x1x32xf32, #tpu.memory_space<vmem>>, vector<1x1x32xf32>
    %191 = vector.shape_cast %190 : vector<1x1x32xf32> to vector<1x32xf32>
    %192 = vector.broadcast %191 : vector<1x32xf32> to vector<8x32xf32>
    %193 = arith.addf %189, %192 : vector<8x32xf32>
    %c0_170 = arith.constant 0 : index
    %c0_171 = arith.constant 0 : index
    %c0_172 = arith.constant 0 : index
    %194 = vector.load %arg15[%c0_170, %c0_171, %c0_172] : memref<2x32x64xf32, #tpu.memory_space<vmem>>, vector<1x32x64xf32>
    %195 = vector.shape_cast %194 : vector<1x32x64xf32> to vector<32x64xf32>
    %cst_173 = arith.constant dense<0.000000e+00> : vector<8x64xf32>
    %196 = tpu.matmul %193, %195, %cst_173 {dimension_numbers = #tpu.dot_dimension_numbers<[1], [0], [0], [1], [0, 0, 1, 1], [], []>} : vector<8x32xf32>, vector<32x64xf32>, vector<8x64xf32> -> vector<8x64xf32>
    %c0_174 = arith.constant 0 : index
    %c0_175 = arith.constant 0 : index
    %c0_176 = arith.constant 0 : index
    %197 = vector.load %arg16[%c0_174, %c0_175, %c0_176] : memref<2x1x64xf32, #tpu.memory_space<vmem>>, vector<1x1x64xf32>
    %198 = vector.shape_cast %197 : vector<1x1x64xf32> to vector<1x64xf32>
    %199 = vector.broadcast %198 : vector<1x64xf32> to vector<8x64xf32>
    %200 = arith.addf %196, %199 : vector<8x64xf32>
    %cst_177 = arith.constant 0.000000e+00 : f32
    %201 = vector.broadcast %cst_177 : f32 to vector<8x64xf32>
    %202 = arith.maximumf %200, %201 : vector<8x64xf32>
    %c0_178 = arith.constant 0 : index
    %c0_179 = arith.constant 0 : index
    %c0_180 = arith.constant 0 : index
    %203 = vector.load %arg17[%c0_178, %c0_179, %c0_180] : memref<2x64x32xf32, #tpu.memory_space<vmem>>, vector<1x64x32xf32>
    %204 = vector.shape_cast %203 : vector<1x64x32xf32> to vector<64x32xf32>
    %cst_181 = arith.constant dense<0.000000e+00> : vector<8x32xf32>
    %205 = tpu.matmul %202, %204, %cst_181 {dimension_numbers = #tpu.dot_dimension_numbers<[1], [0], [0], [1], [0, 0, 1, 1], [], []>} : vector<8x64xf32>, vector<64x32xf32>, vector<8x32xf32> -> vector<8x32xf32>
    %206 = arith.addf %193, %205 : vector<8x32xf32>
    %c0_182 = arith.constant 0 : index
    %c0_183 = arith.constant 0 : index
    %c0_184 = arith.constant 0 : index
    %207 = vector.load %arg18[%c0_182, %c0_183, %c0_184] : memref<2x1x32xf32, #tpu.memory_space<vmem>>, vector<1x1x32xf32>
    %208 = vector.shape_cast %207 : vector<1x1x32xf32> to vector<1x32xf32>
    %209 = vector.broadcast %208 : vector<1x32xf32> to vector<8x32xf32>
    %210 = arith.addf %206, %209 : vector<8x32xf32>
    %cst_185 = arith.constant dense<0.000000e+00> : vector<8xf32>
    %211 = vector.multi_reduction <add>, %210, %cst_185 [1] : vector<8x32xf32> to vector<8xf32>
    %212 = vector.shape_cast %211 : vector<8xf32> to vector<8x1xf32>
    %cst_186 = arith.constant 3.200000e+01 : f32
    %213 = vector.broadcast %cst_186 : f32 to vector<8x1xf32>
    %214 = arith.divf %212, %213 : vector<8x1xf32>
    %215 = vector.broadcast %214 : vector<8x1xf32> to vector<8x32xf32>
    %216 = arith.subf %210, %215 : vector<8x32xf32>
    %217 = arith.mulf %216, %216 : vector<8x32xf32>
    %cst_187 = arith.constant dense<0.000000e+00> : vector<8xf32>
    %218 = vector.multi_reduction <add>, %217, %cst_187 [1] : vector<8x32xf32> to vector<8xf32>
    %219 = vector.shape_cast %218 : vector<8xf32> to vector<8x1xf32>
    %cst_188 = arith.constant 3.200000e+01 : f32
    %220 = vector.broadcast %cst_188 : f32 to vector<8x1xf32>
    %221 = arith.divf %219, %220 : vector<8x1xf32>
    %cst_189 = arith.constant 9.99999974E-6 : f32
    %222 = vector.broadcast %cst_189 : f32 to vector<8x1xf32>
    %223 = arith.addf %221, %222 : vector<8x1xf32>
    %224 = math.rsqrt %223 : vector<8x1xf32>
    %225 = vector.broadcast %224 : vector<8x1xf32> to vector<8x32xf32>
    %226 = arith.mulf %216, %225 : vector<8x32xf32>
    %c0_190 = arith.constant 0 : index
    %c0_191 = arith.constant 0 : index
    %c0_192 = arith.constant 0 : index
    %227 = vector.load %arg19[%c0_190, %c0_191, %c0_192] : memref<2x1x32xf32, #tpu.memory_space<vmem>>, vector<1x1x32xf32>
    %228 = vector.shape_cast %227 : vector<1x1x32xf32> to vector<1x32xf32>
    %229 = vector.broadcast %228 : vector<1x32xf32> to vector<8x32xf32>
    %230 = arith.mulf %226, %229 : vector<8x32xf32>
    %c0_193 = arith.constant 0 : index
    %c0_194 = arith.constant 0 : index
    %c0_195 = arith.constant 0 : index
    %231 = vector.load %arg20[%c0_193, %c0_194, %c0_195] : memref<2x1x32xf32, #tpu.memory_space<vmem>>, vector<1x1x32xf32>
    %232 = vector.shape_cast %231 : vector<1x1x32xf32> to vector<1x32xf32>
    %233 = vector.broadcast %232 : vector<1x32xf32> to vector<8x32xf32>
    %234 = arith.addf %230, %233 : vector<8x32xf32>
    %c1_196 = arith.constant 1 : index
    %c0_197 = arith.constant 0 : index
    %c0_198 = arith.constant 0 : index
    %235 = vector.load %arg12[%c1_196, %c0_197, %c0_198] : memref<2x1x32xf32, #tpu.memory_space<vmem>>, vector<1x1x32xf32>
    %236 = vector.shape_cast %235 : vector<1x1x32xf32> to vector<1x32xf32>
    %237 = vector.broadcast %236 : vector<1x32xf32> to vector<8x32xf32>
    %238 = arith.addf %234, %237 : vector<8x32xf32>
    %c1_199 = arith.constant 1 : index
    %c0_200 = arith.constant 0 : index
    %c0_201 = arith.constant 0 : index
    %c0_202 = arith.constant 0 : index
    %239 = vector.load %arg5[%c1_199, %c0_200, %c0_201, %c0_202] : memref<2x4x32x8xf32, #tpu.memory_space<vmem>>, vector<1x1x32x8xf32>
    %240 = vector.shape_cast %239 : vector<1x1x32x8xf32> to vector<32x8xf32>
    %cst_203 = arith.constant dense<0.000000e+00> : vector<8x8xf32>
    %241 = tpu.matmul %234, %240, %cst_203 {dimension_numbers = #tpu.dot_dimension_numbers<[1], [0], [0], [1], [0, 0, 1, 1], [], []>} : vector<8x32xf32>, vector<32x8xf32>, vector<8x8xf32> -> vector<8x8xf32>
    %c1_204 = arith.constant 1 : index
    %c0_205 = arith.constant 0 : index
    %c0_206 = arith.constant 0 : index
    %c0_207 = arith.constant 0 : index
    %242 = vector.load %arg8[%c1_204, %c0_205, %c0_206, %c0_207] : memref<2x4x1x8xf32, #tpu.memory_space<vmem>>, vector<1x1x1x8xf32>
    %243 = vector.shape_cast %242 : vector<1x1x1x8xf32> to vector<1x8xf32>
    %244 = vector.broadcast %243 : vector<1x8xf32> to vector<8x8xf32>
    %245 = arith.addf %241, %244 : vector<8x8xf32>
    %c1_208 = arith.constant 1 : index
    %c0_209 = arith.constant 0 : index
    %c0_210 = arith.constant 0 : index
    %c0_211 = arith.constant 0 : index
    %246 = vector.load %arg6[%c1_208, %c0_209, %c0_210, %c0_211] : memref<2x4x32x8xf32, #tpu.memory_space<vmem>>, vector<1x1x32x8xf32>
    %247 = vector.shape_cast %246 : vector<1x1x32x8xf32> to vector<32x8xf32>
    %cst_212 = arith.constant dense<0.000000e+00> : vector<8x8xf32>
    %248 = tpu.matmul %234, %247, %cst_212 {dimension_numbers = #tpu.dot_dimension_numbers<[1], [0], [0], [1], [0, 0, 1, 1], [], []>} : vector<8x32xf32>, vector<32x8xf32>, vector<8x8xf32> -> vector<8x8xf32>
    %c1_213 = arith.constant 1 : index
    %c0_214 = arith.constant 0 : index
    %c0_215 = arith.constant 0 : index
    %c0_216 = arith.constant 0 : index
    %249 = vector.load %arg9[%c1_213, %c0_214, %c0_215, %c0_216] : memref<2x4x1x8xf32, #tpu.memory_space<vmem>>, vector<1x1x1x8xf32>
    %250 = vector.shape_cast %249 : vector<1x1x1x8xf32> to vector<1x8xf32>
    %251 = vector.broadcast %250 : vector<1x8xf32> to vector<8x8xf32>
    %252 = arith.addf %248, %251 : vector<8x8xf32>
    %c1_217 = arith.constant 1 : index
    %c0_218 = arith.constant 0 : index
    %c0_219 = arith.constant 0 : index
    %c0_220 = arith.constant 0 : index
    %253 = vector.load %arg7[%c1_217, %c0_218, %c0_219, %c0_220] : memref<2x4x32x8xf32, #tpu.memory_space<vmem>>, vector<1x1x32x8xf32>
    %254 = vector.shape_cast %253 : vector<1x1x32x8xf32> to vector<32x8xf32>
    %cst_221 = arith.constant dense<0.000000e+00> : vector<8x8xf32>
    %255 = tpu.matmul %234, %254, %cst_221 {dimension_numbers = #tpu.dot_dimension_numbers<[1], [0], [0], [1], [0, 0, 1, 1], [], []>} : vector<8x32xf32>, vector<32x8xf32>, vector<8x8xf32> -> vector<8x8xf32>
    %c1_222 = arith.constant 1 : index
    %c0_223 = arith.constant 0 : index
    %c0_224 = arith.constant 0 : index
    %c0_225 = arith.constant 0 : index
    %256 = vector.load %arg10[%c1_222, %c0_223, %c0_224, %c0_225] : memref<2x4x1x8xf32, #tpu.memory_space<vmem>>, vector<1x1x1x8xf32>
    %257 = vector.shape_cast %256 : vector<1x1x1x8xf32> to vector<1x8xf32>
    %258 = vector.broadcast %257 : vector<1x8xf32> to vector<8x8xf32>
    %259 = arith.addf %255, %258 : vector<8x8xf32>
    %cst_226 = arith.constant dense<0.000000e+00> : vector<8x8xf32>
    %260 = tpu.matmul %245, %252, %cst_226 {dimension_numbers = #tpu.dot_dimension_numbers<[1], [1], [0], [0], [0, 0, 1, 0], [], []>} : vector<8x8xf32>, vector<8x8xf32>, vector<8x8xf32> -> vector<8x8xf32>
    %cst_227 = arith.constant 0.353553385 : f32
    %261 = vector.broadcast %cst_227 : f32 to vector<8x8xf32>
    %262 = arith.mulf %260, %261 : vector<8x8xf32>
    %cst_228 = arith.constant dense<0xFF800000> : vector<8xf32>
    %263 = vector.multi_reduction <maximumf>, %262, %cst_228 [1] : vector<8x8xf32> to vector<8xf32>
    %264 = vector.shape_cast %263 : vector<8xf32> to vector<8x1xf32>
    %265 = vector.broadcast %264 : vector<8x1xf32> to vector<8x8xf32>
    %266 = arith.subf %262, %265 : vector<8x8xf32>
    %267 = math.exp %266 : vector<8x8xf32>
    %cst_229 = arith.constant dense<0.000000e+00> : vector<8xf32>
    %268 = vector.multi_reduction <add>, %267, %cst_229 [1] : vector<8x8xf32> to vector<8xf32>
    %269 = vector.shape_cast %268 : vector<8xf32> to vector<8x1xf32>
    %270 = tpu.reciprocal %269 {approx = true} : vector<8x1xf32> -> vector<8x1xf32>
    %271 = vector.broadcast %270 : vector<8x1xf32> to vector<8x8xf32>
    %272 = arith.mulf %267, %271 : vector<8x8xf32>
    %cst_230 = arith.constant dense<0.000000e+00> : vector<8x8xf32>
    %273 = tpu.matmul %272, %259, %cst_230 {dimension_numbers = #tpu.dot_dimension_numbers<[1], [0], [0], [1], [0, 0, 1, 1], [], []>} : vector<8x8xf32>, vector<8x8xf32>, vector<8x8xf32> -> vector<8x8xf32>
    %c1_231 = arith.constant 1 : index
    %c0_232 = arith.constant 0 : index
    %c0_233 = arith.constant 0 : index
    %c0_234 = arith.constant 0 : index
    %274 = vector.load %arg11[%c1_231, %c0_232, %c0_233, %c0_234] : memref<2x4x8x32xf32, #tpu.memory_space<vmem>>, vector<1x1x8x32xf32>
    %275 = vector.shape_cast %274 : vector<1x1x8x32xf32> to vector<8x32xf32>
    %cst_235 = arith.constant dense<0.000000e+00> : vector<8x32xf32>
    %276 = tpu.matmul %273, %275, %cst_235 {dimension_numbers = #tpu.dot_dimension_numbers<[1], [0], [0], [1], [0, 0, 1, 1], [], []>} : vector<8x8xf32>, vector<8x32xf32>, vector<8x32xf32> -> vector<8x32xf32>
    %277 = arith.addf %238, %276 : vector<8x32xf32>
    %c1_236 = arith.constant 1 : index
    %c1_237 = arith.constant 1 : index
    %c0_238 = arith.constant 0 : index
    %c0_239 = arith.constant 0 : index
    %278 = vector.load %arg5[%c1_236, %c1_237, %c0_238, %c0_239] : memref<2x4x32x8xf32, #tpu.memory_space<vmem>>, vector<1x1x32x8xf32>
    %279 = vector.shape_cast %278 : vector<1x1x32x8xf32> to vector<32x8xf32>
    %cst_240 = arith.constant dense<0.000000e+00> : vector<8x8xf32>
    %280 = tpu.matmul %234, %279, %cst_240 {dimension_numbers = #tpu.dot_dimension_numbers<[1], [0], [0], [1], [0, 0, 1, 1], [], []>} : vector<8x32xf32>, vector<32x8xf32>, vector<8x8xf32> -> vector<8x8xf32>
    %c1_241 = arith.constant 1 : index
    %c1_242 = arith.constant 1 : index
    %c0_243 = arith.constant 0 : index
    %c0_244 = arith.constant 0 : index
    %281 = vector.load %arg8[%c1_241, %c1_242, %c0_243, %c0_244] : memref<2x4x1x8xf32, #tpu.memory_space<vmem>>, vector<1x1x1x8xf32>
    %282 = vector.shape_cast %281 : vector<1x1x1x8xf32> to vector<1x8xf32>
    %283 = vector.broadcast %282 : vector<1x8xf32> to vector<8x8xf32>
    %284 = arith.addf %280, %283 : vector<8x8xf32>
    %c1_245 = arith.constant 1 : index
    %c1_246 = arith.constant 1 : index
    %c0_247 = arith.constant 0 : index
    %c0_248 = arith.constant 0 : index
    %285 = vector.load %arg6[%c1_245, %c1_246, %c0_247, %c0_248] : memref<2x4x32x8xf32, #tpu.memory_space<vmem>>, vector<1x1x32x8xf32>
    %286 = vector.shape_cast %285 : vector<1x1x32x8xf32> to vector<32x8xf32>
    %cst_249 = arith.constant dense<0.000000e+00> : vector<8x8xf32>
    %287 = tpu.matmul %234, %286, %cst_249 {dimension_numbers = #tpu.dot_dimension_numbers<[1], [0], [0], [1], [0, 0, 1, 1], [], []>} : vector<8x32xf32>, vector<32x8xf32>, vector<8x8xf32> -> vector<8x8xf32>
    %c1_250 = arith.constant 1 : index
    %c1_251 = arith.constant 1 : index
    %c0_252 = arith.constant 0 : index
    %c0_253 = arith.constant 0 : index
    %288 = vector.load %arg9[%c1_250, %c1_251, %c0_252, %c0_253] : memref<2x4x1x8xf32, #tpu.memory_space<vmem>>, vector<1x1x1x8xf32>
    %289 = vector.shape_cast %288 : vector<1x1x1x8xf32> to vector<1x8xf32>
    %290 = vector.broadcast %289 : vector<1x8xf32> to vector<8x8xf32>
    %291 = arith.addf %287, %290 : vector<8x8xf32>
    %c1_254 = arith.constant 1 : index
    %c1_255 = arith.constant 1 : index
    %c0_256 = arith.constant 0 : index
    %c0_257 = arith.constant 0 : index
    %292 = vector.load %arg7[%c1_254, %c1_255, %c0_256, %c0_257] : memref<2x4x32x8xf32, #tpu.memory_space<vmem>>, vector<1x1x32x8xf32>
    %293 = vector.shape_cast %292 : vector<1x1x32x8xf32> to vector<32x8xf32>
    %cst_258 = arith.constant dense<0.000000e+00> : vector<8x8xf32>
    %294 = tpu.matmul %234, %293, %cst_258 {dimension_numbers = #tpu.dot_dimension_numbers<[1], [0], [0], [1], [0, 0, 1, 1], [], []>} : vector<8x32xf32>, vector<32x8xf32>, vector<8x8xf32> -> vector<8x8xf32>
    %c1_259 = arith.constant 1 : index
    %c1_260 = arith.constant 1 : index
    %c0_261 = arith.constant 0 : index
    %c0_262 = arith.constant 0 : index
    %295 = vector.load %arg10[%c1_259, %c1_260, %c0_261, %c0_262] : memref<2x4x1x8xf32, #tpu.memory_space<vmem>>, vector<1x1x1x8xf32>
    %296 = vector.shape_cast %295 : vector<1x1x1x8xf32> to vector<1x8xf32>
    %297 = vector.broadcast %296 : vector<1x8xf32> to vector<8x8xf32>
    %298 = arith.addf %294, %297 : vector<8x8xf32>
    %cst_263 = arith.constant dense<0.000000e+00> : vector<8x8xf32>
    %299 = tpu.matmul %284, %291, %cst_263 {dimension_numbers = #tpu.dot_dimension_numbers<[1], [1], [0], [0], [0, 0, 1, 0], [], []>} : vector<8x8xf32>, vector<8x8xf32>, vector<8x8xf32> -> vector<8x8xf32>
    %cst_264 = arith.constant 0.353553385 : f32
    %300 = vector.broadcast %cst_264 : f32 to vector<8x8xf32>
    %301 = arith.mulf %299, %300 : vector<8x8xf32>
    %cst_265 = arith.constant dense<0xFF800000> : vector<8xf32>
    %302 = vector.multi_reduction <maximumf>, %301, %cst_265 [1] : vector<8x8xf32> to vector<8xf32>
    %303 = vector.shape_cast %302 : vector<8xf32> to vector<8x1xf32>
    %304 = vector.broadcast %303 : vector<8x1xf32> to vector<8x8xf32>
    %305 = arith.subf %301, %304 : vector<8x8xf32>
    %306 = math.exp %305 : vector<8x8xf32>
    %cst_266 = arith.constant dense<0.000000e+00> : vector<8xf32>
    %307 = vector.multi_reduction <add>, %306, %cst_266 [1] : vector<8x8xf32> to vector<8xf32>
    %308 = vector.shape_cast %307 : vector<8xf32> to vector<8x1xf32>
    %309 = tpu.reciprocal %308 {approx = true} : vector<8x1xf32> -> vector<8x1xf32>
    %310 = vector.broadcast %309 : vector<8x1xf32> to vector<8x8xf32>
    %311 = arith.mulf %306, %310 : vector<8x8xf32>
    %cst_267 = arith.constant dense<0.000000e+00> : vector<8x8xf32>
    %312 = tpu.matmul %311, %298, %cst_267 {dimension_numbers = #tpu.dot_dimension_numbers<[1], [0], [0], [1], [0, 0, 1, 1], [], []>} : vector<8x8xf32>, vector<8x8xf32>, vector<8x8xf32> -> vector<8x8xf32>
    %c1_268 = arith.constant 1 : index
    %c1_269 = arith.constant 1 : index
    %c0_270 = arith.constant 0 : index
    %c0_271 = arith.constant 0 : index
    %313 = vector.load %arg11[%c1_268, %c1_269, %c0_270, %c0_271] : memref<2x4x8x32xf32, #tpu.memory_space<vmem>>, vector<1x1x8x32xf32>
    %314 = vector.shape_cast %313 : vector<1x1x8x32xf32> to vector<8x32xf32>
    %cst_272 = arith.constant dense<0.000000e+00> : vector<8x32xf32>
    %315 = tpu.matmul %312, %314, %cst_272 {dimension_numbers = #tpu.dot_dimension_numbers<[1], [0], [0], [1], [0, 0, 1, 1], [], []>} : vector<8x8xf32>, vector<8x32xf32>, vector<8x32xf32> -> vector<8x32xf32>
    %316 = arith.addf %277, %315 : vector<8x32xf32>
    %c1_273 = arith.constant 1 : index
    %c2_274 = arith.constant 2 : index
    %c0_275 = arith.constant 0 : index
    %c0_276 = arith.constant 0 : index
    %317 = vector.load %arg5[%c1_273, %c2_274, %c0_275, %c0_276] : memref<2x4x32x8xf32, #tpu.memory_space<vmem>>, vector<1x1x32x8xf32>
    %318 = vector.shape_cast %317 : vector<1x1x32x8xf32> to vector<32x8xf32>
    %cst_277 = arith.constant dense<0.000000e+00> : vector<8x8xf32>
    %319 = tpu.matmul %234, %318, %cst_277 {dimension_numbers = #tpu.dot_dimension_numbers<[1], [0], [0], [1], [0, 0, 1, 1], [], []>} : vector<8x32xf32>, vector<32x8xf32>, vector<8x8xf32> -> vector<8x8xf32>
    %c1_278 = arith.constant 1 : index
    %c2_279 = arith.constant 2 : index
    %c0_280 = arith.constant 0 : index
    %c0_281 = arith.constant 0 : index
    %320 = vector.load %arg8[%c1_278, %c2_279, %c0_280, %c0_281] : memref<2x4x1x8xf32, #tpu.memory_space<vmem>>, vector<1x1x1x8xf32>
    %321 = vector.shape_cast %320 : vector<1x1x1x8xf32> to vector<1x8xf32>
    %322 = vector.broadcast %321 : vector<1x8xf32> to vector<8x8xf32>
    %323 = arith.addf %319, %322 : vector<8x8xf32>
    %c1_282 = arith.constant 1 : index
    %c2_283 = arith.constant 2 : index
    %c0_284 = arith.constant 0 : index
    %c0_285 = arith.constant 0 : index
    %324 = vector.load %arg6[%c1_282, %c2_283, %c0_284, %c0_285] : memref<2x4x32x8xf32, #tpu.memory_space<vmem>>, vector<1x1x32x8xf32>
    %325 = vector.shape_cast %324 : vector<1x1x32x8xf32> to vector<32x8xf32>
    %cst_286 = arith.constant dense<0.000000e+00> : vector<8x8xf32>
    %326 = tpu.matmul %234, %325, %cst_286 {dimension_numbers = #tpu.dot_dimension_numbers<[1], [0], [0], [1], [0, 0, 1, 1], [], []>} : vector<8x32xf32>, vector<32x8xf32>, vector<8x8xf32> -> vector<8x8xf32>
    %c1_287 = arith.constant 1 : index
    %c2_288 = arith.constant 2 : index
    %c0_289 = arith.constant 0 : index
    %c0_290 = arith.constant 0 : index
    %327 = vector.load %arg9[%c1_287, %c2_288, %c0_289, %c0_290] : memref<2x4x1x8xf32, #tpu.memory_space<vmem>>, vector<1x1x1x8xf32>
    %328 = vector.shape_cast %327 : vector<1x1x1x8xf32> to vector<1x8xf32>
    %329 = vector.broadcast %328 : vector<1x8xf32> to vector<8x8xf32>
    %330 = arith.addf %326, %329 : vector<8x8xf32>
    %c1_291 = arith.constant 1 : index
    %c2_292 = arith.constant 2 : index
    %c0_293 = arith.constant 0 : index
    %c0_294 = arith.constant 0 : index
    %331 = vector.load %arg7[%c1_291, %c2_292, %c0_293, %c0_294] : memref<2x4x32x8xf32, #tpu.memory_space<vmem>>, vector<1x1x32x8xf32>
    %332 = vector.shape_cast %331 : vector<1x1x32x8xf32> to vector<32x8xf32>
    %cst_295 = arith.constant dense<0.000000e+00> : vector<8x8xf32>
    %333 = tpu.matmul %234, %332, %cst_295 {dimension_numbers = #tpu.dot_dimension_numbers<[1], [0], [0], [1], [0, 0, 1, 1], [], []>} : vector<8x32xf32>, vector<32x8xf32>, vector<8x8xf32> -> vector<8x8xf32>
    %c1_296 = arith.constant 1 : index
    %c2_297 = arith.constant 2 : index
    %c0_298 = arith.constant 0 : index
    %c0_299 = arith.constant 0 : index
    %334 = vector.load %arg10[%c1_296, %c2_297, %c0_298, %c0_299] : memref<2x4x1x8xf32, #tpu.memory_space<vmem>>, vector<1x1x1x8xf32>
    %335 = vector.shape_cast %334 : vector<1x1x1x8xf32> to vector<1x8xf32>
    %336 = vector.broadcast %335 : vector<1x8xf32> to vector<8x8xf32>
    %337 = arith.addf %333, %336 : vector<8x8xf32>
    %cst_300 = arith.constant dense<0.000000e+00> : vector<8x8xf32>
    %338 = tpu.matmul %323, %330, %cst_300 {dimension_numbers = #tpu.dot_dimension_numbers<[1], [1], [0], [0], [0, 0, 1, 0], [], []>} : vector<8x8xf32>, vector<8x8xf32>, vector<8x8xf32> -> vector<8x8xf32>
    %cst_301 = arith.constant 0.353553385 : f32
    %339 = vector.broadcast %cst_301 : f32 to vector<8x8xf32>
    %340 = arith.mulf %338, %339 : vector<8x8xf32>
    %cst_302 = arith.constant dense<0xFF800000> : vector<8xf32>
    %341 = vector.multi_reduction <maximumf>, %340, %cst_302 [1] : vector<8x8xf32> to vector<8xf32>
    %342 = vector.shape_cast %341 : vector<8xf32> to vector<8x1xf32>
    %343 = vector.broadcast %342 : vector<8x1xf32> to vector<8x8xf32>
    %344 = arith.subf %340, %343 : vector<8x8xf32>
    %345 = math.exp %344 : vector<8x8xf32>
    %cst_303 = arith.constant dense<0.000000e+00> : vector<8xf32>
    %346 = vector.multi_reduction <add>, %345, %cst_303 [1] : vector<8x8xf32> to vector<8xf32>
    %347 = vector.shape_cast %346 : vector<8xf32> to vector<8x1xf32>
    %348 = tpu.reciprocal %347 {approx = true} : vector<8x1xf32> -> vector<8x1xf32>
    %349 = vector.broadcast %348 : vector<8x1xf32> to vector<8x8xf32>
    %350 = arith.mulf %345, %349 : vector<8x8xf32>
    %cst_304 = arith.constant dense<0.000000e+00> : vector<8x8xf32>
    %351 = tpu.matmul %350, %337, %cst_304 {dimension_numbers = #tpu.dot_dimension_numbers<[1], [0], [0], [1], [0, 0, 1, 1], [], []>} : vector<8x8xf32>, vector<8x8xf32>, vector<8x8xf32> -> vector<8x8xf32>
    %c1_305 = arith.constant 1 : index
    %c2_306 = arith.constant 2 : index
    %c0_307 = arith.constant 0 : index
    %c0_308 = arith.constant 0 : index
    %352 = vector.load %arg11[%c1_305, %c2_306, %c0_307, %c0_308] : memref<2x4x8x32xf32, #tpu.memory_space<vmem>>, vector<1x1x8x32xf32>
    %353 = vector.shape_cast %352 : vector<1x1x8x32xf32> to vector<8x32xf32>
    %cst_309 = arith.constant dense<0.000000e+00> : vector<8x32xf32>
    %354 = tpu.matmul %351, %353, %cst_309 {dimension_numbers = #tpu.dot_dimension_numbers<[1], [0], [0], [1], [0, 0, 1, 1], [], []>} : vector<8x8xf32>, vector<8x32xf32>, vector<8x32xf32> -> vector<8x32xf32>
    %355 = arith.addf %316, %354 : vector<8x32xf32>
    %c1_310 = arith.constant 1 : index
    %c3_311 = arith.constant 3 : index
    %c0_312 = arith.constant 0 : index
    %c0_313 = arith.constant 0 : index
    %356 = vector.load %arg5[%c1_310, %c3_311, %c0_312, %c0_313] : memref<2x4x32x8xf32, #tpu.memory_space<vmem>>, vector<1x1x32x8xf32>
    %357 = vector.shape_cast %356 : vector<1x1x32x8xf32> to vector<32x8xf32>
    %cst_314 = arith.constant dense<0.000000e+00> : vector<8x8xf32>
    %358 = tpu.matmul %234, %357, %cst_314 {dimension_numbers = #tpu.dot_dimension_numbers<[1], [0], [0], [1], [0, 0, 1, 1], [], []>} : vector<8x32xf32>, vector<32x8xf32>, vector<8x8xf32> -> vector<8x8xf32>
    %c1_315 = arith.constant 1 : index
    %c3_316 = arith.constant 3 : index
    %c0_317 = arith.constant 0 : index
    %c0_318 = arith.constant 0 : index
    %359 = vector.load %arg8[%c1_315, %c3_316, %c0_317, %c0_318] : memref<2x4x1x8xf32, #tpu.memory_space<vmem>>, vector<1x1x1x8xf32>
    %360 = vector.shape_cast %359 : vector<1x1x1x8xf32> to vector<1x8xf32>
    %361 = vector.broadcast %360 : vector<1x8xf32> to vector<8x8xf32>
    %362 = arith.addf %358, %361 : vector<8x8xf32>
    %c1_319 = arith.constant 1 : index
    %c3_320 = arith.constant 3 : index
    %c0_321 = arith.constant 0 : index
    %c0_322 = arith.constant 0 : index
    %363 = vector.load %arg6[%c1_319, %c3_320, %c0_321, %c0_322] : memref<2x4x32x8xf32, #tpu.memory_space<vmem>>, vector<1x1x32x8xf32>
    %364 = vector.shape_cast %363 : vector<1x1x32x8xf32> to vector<32x8xf32>
    %cst_323 = arith.constant dense<0.000000e+00> : vector<8x8xf32>
    %365 = tpu.matmul %234, %364, %cst_323 {dimension_numbers = #tpu.dot_dimension_numbers<[1], [0], [0], [1], [0, 0, 1, 1], [], []>} : vector<8x32xf32>, vector<32x8xf32>, vector<8x8xf32> -> vector<8x8xf32>
    %c1_324 = arith.constant 1 : index
    %c3_325 = arith.constant 3 : index
    %c0_326 = arith.constant 0 : index
    %c0_327 = arith.constant 0 : index
    %366 = vector.load %arg9[%c1_324, %c3_325, %c0_326, %c0_327] : memref<2x4x1x8xf32, #tpu.memory_space<vmem>>, vector<1x1x1x8xf32>
    %367 = vector.shape_cast %366 : vector<1x1x1x8xf32> to vector<1x8xf32>
    %368 = vector.broadcast %367 : vector<1x8xf32> to vector<8x8xf32>
    %369 = arith.addf %365, %368 : vector<8x8xf32>
    %c1_328 = arith.constant 1 : index
    %c3_329 = arith.constant 3 : index
    %c0_330 = arith.constant 0 : index
    %c0_331 = arith.constant 0 : index
    %370 = vector.load %arg7[%c1_328, %c3_329, %c0_330, %c0_331] : memref<2x4x32x8xf32, #tpu.memory_space<vmem>>, vector<1x1x32x8xf32>
    %371 = vector.shape_cast %370 : vector<1x1x32x8xf32> to vector<32x8xf32>
    %cst_332 = arith.constant dense<0.000000e+00> : vector<8x8xf32>
    %372 = tpu.matmul %234, %371, %cst_332 {dimension_numbers = #tpu.dot_dimension_numbers<[1], [0], [0], [1], [0, 0, 1, 1], [], []>} : vector<8x32xf32>, vector<32x8xf32>, vector<8x8xf32> -> vector<8x8xf32>
    %c1_333 = arith.constant 1 : index
    %c3_334 = arith.constant 3 : index
    %c0_335 = arith.constant 0 : index
    %c0_336 = arith.constant 0 : index
    %373 = vector.load %arg10[%c1_333, %c3_334, %c0_335, %c0_336] : memref<2x4x1x8xf32, #tpu.memory_space<vmem>>, vector<1x1x1x8xf32>
    %374 = vector.shape_cast %373 : vector<1x1x1x8xf32> to vector<1x8xf32>
    %375 = vector.broadcast %374 : vector<1x8xf32> to vector<8x8xf32>
    %376 = arith.addf %372, %375 : vector<8x8xf32>
    %cst_337 = arith.constant dense<0.000000e+00> : vector<8x8xf32>
    %377 = tpu.matmul %362, %369, %cst_337 {dimension_numbers = #tpu.dot_dimension_numbers<[1], [1], [0], [0], [0, 0, 1, 0], [], []>} : vector<8x8xf32>, vector<8x8xf32>, vector<8x8xf32> -> vector<8x8xf32>
    %cst_338 = arith.constant 0.353553385 : f32
    %378 = vector.broadcast %cst_338 : f32 to vector<8x8xf32>
    %379 = arith.mulf %377, %378 : vector<8x8xf32>
    %cst_339 = arith.constant dense<0xFF800000> : vector<8xf32>
    %380 = vector.multi_reduction <maximumf>, %379, %cst_339 [1] : vector<8x8xf32> to vector<8xf32>
    %381 = vector.shape_cast %380 : vector<8xf32> to vector<8x1xf32>
    %382 = vector.broadcast %381 : vector<8x1xf32> to vector<8x8xf32>
    %383 = arith.subf %379, %382 : vector<8x8xf32>
    %384 = math.exp %383 : vector<8x8xf32>
    %cst_340 = arith.constant dense<0.000000e+00> : vector<8xf32>
    %385 = vector.multi_reduction <add>, %384, %cst_340 [1] : vector<8x8xf32> to vector<8xf32>
    %386 = vector.shape_cast %385 : vector<8xf32> to vector<8x1xf32>
    %387 = tpu.reciprocal %386 {approx = true} : vector<8x1xf32> -> vector<8x1xf32>
    %388 = vector.broadcast %387 : vector<8x1xf32> to vector<8x8xf32>
    %389 = arith.mulf %384, %388 : vector<8x8xf32>
    %cst_341 = arith.constant dense<0.000000e+00> : vector<8x8xf32>
    %390 = tpu.matmul %389, %376, %cst_341 {dimension_numbers = #tpu.dot_dimension_numbers<[1], [0], [0], [1], [0, 0, 1, 1], [], []>} : vector<8x8xf32>, vector<8x8xf32>, vector<8x8xf32> -> vector<8x8xf32>
    %c1_342 = arith.constant 1 : index
    %c3_343 = arith.constant 3 : index
    %c0_344 = arith.constant 0 : index
    %c0_345 = arith.constant 0 : index
    %391 = vector.load %arg11[%c1_342, %c3_343, %c0_344, %c0_345] : memref<2x4x8x32xf32, #tpu.memory_space<vmem>>, vector<1x1x8x32xf32>
    %392 = vector.shape_cast %391 : vector<1x1x8x32xf32> to vector<8x32xf32>
    %cst_346 = arith.constant dense<0.000000e+00> : vector<8x32xf32>
    %393 = tpu.matmul %390, %392, %cst_346 {dimension_numbers = #tpu.dot_dimension_numbers<[1], [0], [0], [1], [0, 0, 1, 1], [], []>} : vector<8x8xf32>, vector<8x32xf32>, vector<8x32xf32> -> vector<8x32xf32>
    %394 = arith.addf %355, %393 : vector<8x32xf32>
    %cst_347 = arith.constant dense<0.000000e+00> : vector<8xf32>
    %395 = vector.multi_reduction <add>, %394, %cst_347 [1] : vector<8x32xf32> to vector<8xf32>
    %396 = vector.shape_cast %395 : vector<8xf32> to vector<8x1xf32>
    %cst_348 = arith.constant 3.200000e+01 : f32
    %397 = vector.broadcast %cst_348 : f32 to vector<8x1xf32>
    %398 = arith.divf %396, %397 : vector<8x1xf32>
    %399 = vector.broadcast %398 : vector<8x1xf32> to vector<8x32xf32>
    %400 = arith.subf %394, %399 : vector<8x32xf32>
    %401 = arith.mulf %400, %400 : vector<8x32xf32>
    %cst_349 = arith.constant dense<0.000000e+00> : vector<8xf32>
    %402 = vector.multi_reduction <add>, %401, %cst_349 [1] : vector<8x32xf32> to vector<8xf32>
    %403 = vector.shape_cast %402 : vector<8xf32> to vector<8x1xf32>
    %cst_350 = arith.constant 3.200000e+01 : f32
    %404 = vector.broadcast %cst_350 : f32 to vector<8x1xf32>
    %405 = arith.divf %403, %404 : vector<8x1xf32>
    %cst_351 = arith.constant 9.99999974E-6 : f32
    %406 = vector.broadcast %cst_351 : f32 to vector<8x1xf32>
    %407 = arith.addf %405, %406 : vector<8x1xf32>
    %408 = math.rsqrt %407 : vector<8x1xf32>
    %409 = vector.broadcast %408 : vector<8x1xf32> to vector<8x32xf32>
    %410 = arith.mulf %400, %409 : vector<8x32xf32>
    %c1_352 = arith.constant 1 : index
    %c0_353 = arith.constant 0 : index
    %c0_354 = arith.constant 0 : index
    %411 = vector.load %arg13[%c1_352, %c0_353, %c0_354] : memref<2x1x32xf32, #tpu.memory_space<vmem>>, vector<1x1x32xf32>
    %412 = vector.shape_cast %411 : vector<1x1x32xf32> to vector<1x32xf32>
    %413 = vector.broadcast %412 : vector<1x32xf32> to vector<8x32xf32>
    %414 = arith.mulf %410, %413 : vector<8x32xf32>
    %c1_355 = arith.constant 1 : index
    %c0_356 = arith.constant 0 : index
    %c0_357 = arith.constant 0 : index
    %415 = vector.load %arg14[%c1_355, %c0_356, %c0_357] : memref<2x1x32xf32, #tpu.memory_space<vmem>>, vector<1x1x32xf32>
    %416 = vector.shape_cast %415 : vector<1x1x32xf32> to vector<1x32xf32>
    %417 = vector.broadcast %416 : vector<1x32xf32> to vector<8x32xf32>
    %418 = arith.addf %414, %417 : vector<8x32xf32>
    %c1_358 = arith.constant 1 : index
    %c0_359 = arith.constant 0 : index
    %c0_360 = arith.constant 0 : index
    %419 = vector.load %arg15[%c1_358, %c0_359, %c0_360] : memref<2x32x64xf32, #tpu.memory_space<vmem>>, vector<1x32x64xf32>
    %420 = vector.shape_cast %419 : vector<1x32x64xf32> to vector<32x64xf32>
    %cst_361 = arith.constant dense<0.000000e+00> : vector<8x64xf32>
    %421 = tpu.matmul %418, %420, %cst_361 {dimension_numbers = #tpu.dot_dimension_numbers<[1], [0], [0], [1], [0, 0, 1, 1], [], []>} : vector<8x32xf32>, vector<32x64xf32>, vector<8x64xf32> -> vector<8x64xf32>
    %c1_362 = arith.constant 1 : index
    %c0_363 = arith.constant 0 : index
    %c0_364 = arith.constant 0 : index
    %422 = vector.load %arg16[%c1_362, %c0_363, %c0_364] : memref<2x1x64xf32, #tpu.memory_space<vmem>>, vector<1x1x64xf32>
    %423 = vector.shape_cast %422 : vector<1x1x64xf32> to vector<1x64xf32>
    %424 = vector.broadcast %423 : vector<1x64xf32> to vector<8x64xf32>
    %425 = arith.addf %421, %424 : vector<8x64xf32>
    %cst_365 = arith.constant 0.000000e+00 : f32
    %426 = vector.broadcast %cst_365 : f32 to vector<8x64xf32>
    %427 = arith.maximumf %425, %426 : vector<8x64xf32>
    %c1_366 = arith.constant 1 : index
    %c0_367 = arith.constant 0 : index
    %c0_368 = arith.constant 0 : index
    %428 = vector.load %arg17[%c1_366, %c0_367, %c0_368] : memref<2x64x32xf32, #tpu.memory_space<vmem>>, vector<1x64x32xf32>
    %429 = vector.shape_cast %428 : vector<1x64x32xf32> to vector<64x32xf32>
    %cst_369 = arith.constant dense<0.000000e+00> : vector<8x32xf32>
    %430 = tpu.matmul %427, %429, %cst_369 {dimension_numbers = #tpu.dot_dimension_numbers<[1], [0], [0], [1], [0, 0, 1, 1], [], []>} : vector<8x64xf32>, vector<64x32xf32>, vector<8x32xf32> -> vector<8x32xf32>
    %431 = arith.addf %418, %430 : vector<8x32xf32>
    %c1_370 = arith.constant 1 : index
    %c0_371 = arith.constant 0 : index
    %c0_372 = arith.constant 0 : index
    %432 = vector.load %arg18[%c1_370, %c0_371, %c0_372] : memref<2x1x32xf32, #tpu.memory_space<vmem>>, vector<1x1x32xf32>
    %433 = vector.shape_cast %432 : vector<1x1x32xf32> to vector<1x32xf32>
    %434 = vector.broadcast %433 : vector<1x32xf32> to vector<8x32xf32>
    %435 = arith.addf %431, %434 : vector<8x32xf32>
    %cst_373 = arith.constant dense<0.000000e+00> : vector<8xf32>
    %436 = vector.multi_reduction <add>, %435, %cst_373 [1] : vector<8x32xf32> to vector<8xf32>
    %437 = vector.shape_cast %436 : vector<8xf32> to vector<8x1xf32>
    %cst_374 = arith.constant 3.200000e+01 : f32
    %438 = vector.broadcast %cst_374 : f32 to vector<8x1xf32>
    %439 = arith.divf %437, %438 : vector<8x1xf32>
    %440 = vector.broadcast %439 : vector<8x1xf32> to vector<8x32xf32>
    %441 = arith.subf %435, %440 : vector<8x32xf32>
    %442 = arith.mulf %441, %441 : vector<8x32xf32>
    %cst_375 = arith.constant dense<0.000000e+00> : vector<8xf32>
    %443 = vector.multi_reduction <add>, %442, %cst_375 [1] : vector<8x32xf32> to vector<8xf32>
    %444 = vector.shape_cast %443 : vector<8xf32> to vector<8x1xf32>
    %cst_376 = arith.constant 3.200000e+01 : f32
    %445 = vector.broadcast %cst_376 : f32 to vector<8x1xf32>
    %446 = arith.divf %444, %445 : vector<8x1xf32>
    %cst_377 = arith.constant 9.99999974E-6 : f32
    %447 = vector.broadcast %cst_377 : f32 to vector<8x1xf32>
    %448 = arith.addf %446, %447 : vector<8x1xf32>
    %449 = math.rsqrt %448 : vector<8x1xf32>
    %450 = vector.broadcast %449 : vector<8x1xf32> to vector<8x32xf32>
    %451 = arith.mulf %441, %450 : vector<8x32xf32>
    %c1_378 = arith.constant 1 : index
    %c0_379 = arith.constant 0 : index
    %c0_380 = arith.constant 0 : index
    %452 = vector.load %arg19[%c1_378, %c0_379, %c0_380] : memref<2x1x32xf32, #tpu.memory_space<vmem>>, vector<1x1x32xf32>
    %453 = vector.shape_cast %452 : vector<1x1x32xf32> to vector<1x32xf32>
    %454 = vector.broadcast %453 : vector<1x32xf32> to vector<8x32xf32>
    %455 = arith.mulf %451, %454 : vector<8x32xf32>
    %c1_381 = arith.constant 1 : index
    %c0_382 = arith.constant 0 : index
    %c0_383 = arith.constant 0 : index
    %456 = vector.load %arg20[%c1_381, %c0_382, %c0_383] : memref<2x1x32xf32, #tpu.memory_space<vmem>>, vector<1x1x32xf32>
    %457 = vector.shape_cast %456 : vector<1x1x32xf32> to vector<1x32xf32>
    %458 = vector.broadcast %457 : vector<1x32xf32> to vector<8x32xf32>
    %459 = arith.addf %455, %458 : vector<8x32xf32>
    %cst_384 = arith.constant dense<0.000000e+00> : vector<8x128xf32>
    %460 = tpu.matmul %459, %3, %cst_384 {dimension_numbers = #tpu.dot_dimension_numbers<[1], [0], [0], [1], [0, 0, 1, 1], [], []>} : vector<8x32xf32>, vector<32x128xf32>, vector<8x128xf32> -> vector<8x128xf32>
    %461 = vector.broadcast %4 : vector<1x128xf32> to vector<8x128xf32>
    %462 = arith.addf %460, %461 : vector<8x128xf32>
    %c0_385 = arith.constant 0 : index
    %c0_386 = arith.constant 0 : index
    %463 = vector.load %arg23[%c0_385, %c0_386] : memref<8x256xf32, #tpu.memory_space<vmem>>, vector<8x128xf32>
    tpu.vector_store %arg23[%c0_385, %c0_386], %462 {strides = array<i32>} : memref<8x256xf32, #tpu.memory_space<vmem>>, vector<8x128xf32>,
    %c0_387 = arith.constant 0 : index
    %c8 = arith.constant 8 : index
    %464 = vector.load %arg1[%c0_387, %c8] : memref<8x16xf32, #tpu.memory_space<vmem>>, vector<8x8xf32>
    %cst_388 = arith.constant dense<0.000000e+00> : vector<8x32xf32>
    %465 = tpu.matmul %464, %1, %cst_388 {dimension_numbers = #tpu.dot_dimension_numbers<[1], [0], [0], [1], [0, 0, 1, 1], [], []>} : vector<8x8xf32>, vector<8x32xf32>, vector<8x32xf32> -> vector<8x32xf32>
    %466 = vector.broadcast %2 : vector<1x32xf32> to vector<8x32xf32>
    %467 = arith.addf %465, %466 : vector<8x32xf32>
    %468 = arith.addf %467, %0 : vector<8x32xf32>
    %c0_389 = arith.constant 0 : index
    %c0_390 = arith.constant 0 : index
    %c0_391 = arith.constant 0 : index
    %469 = vector.load %arg12[%c0_389, %c0_390, %c0_391] : memref<2x1x32xf32, #tpu.memory_space<vmem>>, vector<1x1x32xf32>
    %470 = vector.shape_cast %469 : vector<1x1x32xf32> to vector<1x32xf32>
    %471 = vector.broadcast %470 : vector<1x32xf32> to vector<8x32xf32>
    %472 = arith.addf %468, %471 : vector<8x32xf32>
    %c0_392 = arith.constant 0 : index
    %c0_393 = arith.constant 0 : index
    %c0_394 = arith.constant 0 : index
    %c0_395 = arith.constant 0 : index
    %473 = vector.load %arg5[%c0_392, %c0_393, %c0_394, %c0_395] : memref<2x4x32x8xf32, #tpu.memory_space<vmem>>, vector<1x1x32x8xf32>
    %474 = vector.shape_cast %473 : vector<1x1x32x8xf32> to vector<32x8xf32>
    %cst_396 = arith.constant dense<0.000000e+00> : vector<8x8xf32>
    %475 = tpu.matmul %468, %474, %cst_396 {dimension_numbers = #tpu.dot_dimension_numbers<[1], [0], [0], [1], [0, 0, 1, 1], [], []>} : vector<8x32xf32>, vector<32x8xf32>, vector<8x8xf32> -> vector<8x8xf32>
    %c0_397 = arith.constant 0 : index
    %c0_398 = arith.constant 0 : index
    %c0_399 = arith.constant 0 : index
    %c0_400 = arith.constant 0 : index
    %476 = vector.load %arg8[%c0_397, %c0_398, %c0_399, %c0_400] : memref<2x4x1x8xf32, #tpu.memory_space<vmem>>, vector<1x1x1x8xf32>
    %477 = vector.shape_cast %476 : vector<1x1x1x8xf32> to vector<1x8xf32>
    %478 = vector.broadcast %477 : vector<1x8xf32> to vector<8x8xf32>
    %479 = arith.addf %475, %478 : vector<8x8xf32>
    %c0_401 = arith.constant 0 : index
    %c0_402 = arith.constant 0 : index
    %c0_403 = arith.constant 0 : index
    %c0_404 = arith.constant 0 : index
    %480 = vector.load %arg6[%c0_401, %c0_402, %c0_403, %c0_404] : memref<2x4x32x8xf32, #tpu.memory_space<vmem>>, vector<1x1x32x8xf32>
    %481 = vector.shape_cast %480 : vector<1x1x32x8xf32> to vector<32x8xf32>
    %cst_405 = arith.constant dense<0.000000e+00> : vector<8x8xf32>
    %482 = tpu.matmul %468, %481, %cst_405 {dimension_numbers = #tpu.dot_dimension_numbers<[1], [0], [0], [1], [0, 0, 1, 1], [], []>} : vector<8x32xf32>, vector<32x8xf32>, vector<8x8xf32> -> vector<8x8xf32>
    %c0_406 = arith.constant 0 : index
    %c0_407 = arith.constant 0 : index
    %c0_408 = arith.constant 0 : index
    %c0_409 = arith.constant 0 : index
    %483 = vector.load %arg9[%c0_406, %c0_407, %c0_408, %c0_409] : memref<2x4x1x8xf32, #tpu.memory_space<vmem>>, vector<1x1x1x8xf32>
    %484 = vector.shape_cast %483 : vector<1x1x1x8xf32> to vector<1x8xf32>
    %485 = vector.broadcast %484 : vector<1x8xf32> to vector<8x8xf32>
    %486 = arith.addf %482, %485 : vector<8x8xf32>
    %c0_410 = arith.constant 0 : index
    %c0_411 = arith.constant 0 : index
    %c0_412 = arith.constant 0 : index
    %c0_413 = arith.constant 0 : index
    %487 = vector.load %arg7[%c0_410, %c0_411, %c0_412, %c0_413] : memref<2x4x32x8xf32, #tpu.memory_space<vmem>>, vector<1x1x32x8xf32>
    %488 = vector.shape_cast %487 : vector<1x1x32x8xf32> to vector<32x8xf32>
    %cst_414 = arith.constant dense<0.000000e+00> : vector<8x8xf32>
    %489 = tpu.matmul %468, %488, %cst_414 {dimension_numbers = #tpu.dot_dimension_numbers<[1], [0], [0], [1], [0, 0, 1, 1], [], []>} : vector<8x32xf32>, vector<32x8xf32>, vector<8x8xf32> -> vector<8x8xf32>
    %c0_415 = arith.constant 0 : index
    %c0_416 = arith.constant 0 : index
    %c0_417 = arith.constant 0 : index
    %c0_418 = arith.constant 0 : index
    %490 = vector.load %arg10[%c0_415, %c0_416, %c0_417, %c0_418] : memref<2x4x1x8xf32, #tpu.memory_space<vmem>>, vector<1x1x1x8xf32>
    %491 = vector.shape_cast %490 : vector<1x1x1x8xf32> to vector<1x8xf32>
    %492 = vector.broadcast %491 : vector<1x8xf32> to vector<8x8xf32>
    %493 = arith.addf %489, %492 : vector<8x8xf32>
    %cst_419 = arith.constant dense<0.000000e+00> : vector<8x8xf32>
    %494 = tpu.matmul %479, %486, %cst_419 {dimension_numbers = #tpu.dot_dimension_numbers<[1], [1], [0], [0], [0, 0, 1, 0], [], []>} : vector<8x8xf32>, vector<8x8xf32>, vector<8x8xf32> -> vector<8x8xf32>
    %cst_420 = arith.constant 0.353553385 : f32
    %495 = vector.broadcast %cst_420 : f32 to vector<8x8xf32>
    %496 = arith.mulf %494, %495 : vector<8x8xf32>
    %cst_421 = arith.constant dense<0xFF800000> : vector<8xf32>
    %497 = vector.multi_reduction <maximumf>, %496, %cst_421 [1] : vector<8x8xf32> to vector<8xf32>
    %498 = vector.shape_cast %497 : vector<8xf32> to vector<8x1xf32>
    %499 = vector.broadcast %498 : vector<8x1xf32> to vector<8x8xf32>
    %500 = arith.subf %496, %499 : vector<8x8xf32>
    %501 = math.exp %500 : vector<8x8xf32>
    %cst_422 = arith.constant dense<0.000000e+00> : vector<8xf32>
    %502 = vector.multi_reduction <add>, %501, %cst_422 [1] : vector<8x8xf32> to vector<8xf32>
    %503 = vector.shape_cast %502 : vector<8xf32> to vector<8x1xf32>
    %504 = tpu.reciprocal %503 {approx = true} : vector<8x1xf32> -> vector<8x1xf32>
    %505 = vector.broadcast %504 : vector<8x1xf32> to vector<8x8xf32>
    %506 = arith.mulf %501, %505 : vector<8x8xf32>
    %cst_423 = arith.constant dense<0.000000e+00> : vector<8x8xf32>
    %507 = tpu.matmul %506, %493, %cst_423 {dimension_numbers = #tpu.dot_dimension_numbers<[1], [0], [0], [1], [0, 0, 1, 1], [], []>} : vector<8x8xf32>, vector<8x8xf32>, vector<8x8xf32> -> vector<8x8xf32>
    %c0_424 = arith.constant 0 : index
    %c0_425 = arith.constant 0 : index
    %c0_426 = arith.constant 0 : index
    %c0_427 = arith.constant 0 : index
    %508 = vector.load %arg11[%c0_424, %c0_425, %c0_426, %c0_427] : memref<2x4x8x32xf32, #tpu.memory_space<vmem>>, vector<1x1x8x32xf32>
    %509 = vector.shape_cast %508 : vector<1x1x8x32xf32> to vector<8x32xf32>
    %cst_428 = arith.constant dense<0.000000e+00> : vector<8x32xf32>
    %510 = tpu.matmul %507, %509, %cst_428 {dimension_numbers = #tpu.dot_dimension_numbers<[1], [0], [0], [1], [0, 0, 1, 1], [], []>} : vector<8x8xf32>, vector<8x32xf32>, vector<8x32xf32> -> vector<8x32xf32>
    %511 = arith.addf %472, %510 : vector<8x32xf32>
    %c0_429 = arith.constant 0 : index
    %c1_430 = arith.constant 1 : index
    %c0_431 = arith.constant 0 : index
    %c0_432 = arith.constant 0 : index
    %512 = vector.load %arg5[%c0_429, %c1_430, %c0_431, %c0_432] : memref<2x4x32x8xf32, #tpu.memory_space<vmem>>, vector<1x1x32x8xf32>
    %513 = vector.shape_cast %512 : vector<1x1x32x8xf32> to vector<32x8xf32>
    %cst_433 = arith.constant dense<0.000000e+00> : vector<8x8xf32>
    %514 = tpu.matmul %468, %513, %cst_433 {dimension_numbers = #tpu.dot_dimension_numbers<[1], [0], [0], [1], [0, 0, 1, 1], [], []>} : vector<8x32xf32>, vector<32x8xf32>, vector<8x8xf32> -> vector<8x8xf32>
    %c0_434 = arith.constant 0 : index
    %c1_435 = arith.constant 1 : index
    %c0_436 = arith.constant 0 : index
    %c0_437 = arith.constant 0 : index
    %515 = vector.load %arg8[%c0_434, %c1_435, %c0_436, %c0_437] : memref<2x4x1x8xf32, #tpu.memory_space<vmem>>, vector<1x1x1x8xf32>
    %516 = vector.shape_cast %515 : vector<1x1x1x8xf32> to vector<1x8xf32>
    %517 = vector.broadcast %516 : vector<1x8xf32> to vector<8x8xf32>
    %518 = arith.addf %514, %517 : vector<8x8xf32>
    %c0_438 = arith.constant 0 : index
    %c1_439 = arith.constant 1 : index
    %c0_440 = arith.constant 0 : index
    %c0_441 = arith.constant 0 : index
    %519 = vector.load %arg6[%c0_438, %c1_439, %c0_440, %c0_441] : memref<2x4x32x8xf32, #tpu.memory_space<vmem>>, vector<1x1x32x8xf32>
    %520 = vector.shape_cast %519 : vector<1x1x32x8xf32> to vector<32x8xf32>
    %cst_442 = arith.constant dense<0.000000e+00> : vector<8x8xf32>
    %521 = tpu.matmul %468, %520, %cst_442 {dimension_numbers = #tpu.dot_dimension_numbers<[1], [0], [0], [1], [0, 0, 1, 1], [], []>} : vector<8x32xf32>, vector<32x8xf32>, vector<8x8xf32> -> vector<8x8xf32>
    %c0_443 = arith.constant 0 : index
    %c1_444 = arith.constant 1 : index
    %c0_445 = arith.constant 0 : index
    %c0_446 = arith.constant 0 : index
    %522 = vector.load %arg9[%c0_443, %c1_444, %c0_445, %c0_446] : memref<2x4x1x8xf32, #tpu.memory_space<vmem>>, vector<1x1x1x8xf32>
    %523 = vector.shape_cast %522 : vector<1x1x1x8xf32> to vector<1x8xf32>
    %524 = vector.broadcast %523 : vector<1x8xf32> to vector<8x8xf32>
    %525 = arith.addf %521, %524 : vector<8x8xf32>
    %c0_447 = arith.constant 0 : index
    %c1_448 = arith.constant 1 : index
    %c0_449 = arith.constant 0 : index
    %c0_450 = arith.constant 0 : index
    %526 = vector.load %arg7[%c0_447, %c1_448, %c0_449, %c0_450] : memref<2x4x32x8xf32, #tpu.memory_space<vmem>>, vector<1x1x32x8xf32>
    %527 = vector.shape_cast %526 : vector<1x1x32x8xf32> to vector<32x8xf32>
    %cst_451 = arith.constant dense<0.000000e+00> : vector<8x8xf32>
    %528 = tpu.matmul %468, %527, %cst_451 {dimension_numbers = #tpu.dot_dimension_numbers<[1], [0], [0], [1], [0, 0, 1, 1], [], []>} : vector<8x32xf32>, vector<32x8xf32>, vector<8x8xf32> -> vector<8x8xf32>
    %c0_452 = arith.constant 0 : index
    %c1_453 = arith.constant 1 : index
    %c0_454 = arith.constant 0 : index
    %c0_455 = arith.constant 0 : index
    %529 = vector.load %arg10[%c0_452, %c1_453, %c0_454, %c0_455] : memref<2x4x1x8xf32, #tpu.memory_space<vmem>>, vector<1x1x1x8xf32>
    %530 = vector.shape_cast %529 : vector<1x1x1x8xf32> to vector<1x8xf32>
    %531 = vector.broadcast %530 : vector<1x8xf32> to vector<8x8xf32>
    %532 = arith.addf %528, %531 : vector<8x8xf32>
    %cst_456 = arith.constant dense<0.000000e+00> : vector<8x8xf32>
    %533 = tpu.matmul %518, %525, %cst_456 {dimension_numbers = #tpu.dot_dimension_numbers<[1], [1], [0], [0], [0, 0, 1, 0], [], []>} : vector<8x8xf32>, vector<8x8xf32>, vector<8x8xf32> -> vector<8x8xf32>
    %cst_457 = arith.constant 0.353553385 : f32
    %534 = vector.broadcast %cst_457 : f32 to vector<8x8xf32>
    %535 = arith.mulf %533, %534 : vector<8x8xf32>
    %cst_458 = arith.constant dense<0xFF800000> : vector<8xf32>
    %536 = vector.multi_reduction <maximumf>, %535, %cst_458 [1] : vector<8x8xf32> to vector<8xf32>
    %537 = vector.shape_cast %536 : vector<8xf32> to vector<8x1xf32>
    %538 = vector.broadcast %537 : vector<8x1xf32> to vector<8x8xf32>
    %539 = arith.subf %535, %538 : vector<8x8xf32>
    %540 = math.exp %539 : vector<8x8xf32>
    %cst_459 = arith.constant dense<0.000000e+00> : vector<8xf32>
    %541 = vector.multi_reduction <add>, %540, %cst_459 [1] : vector<8x8xf32> to vector<8xf32>
    %542 = vector.shape_cast %541 : vector<8xf32> to vector<8x1xf32>
    %543 = tpu.reciprocal %542 {approx = true} : vector<8x1xf32> -> vector<8x1xf32>
    %544 = vector.broadcast %543 : vector<8x1xf32> to vector<8x8xf32>
    %545 = arith.mulf %540, %544 : vector<8x8xf32>
    %cst_460 = arith.constant dense<0.000000e+00> : vector<8x8xf32>
    %546 = tpu.matmul %545, %532, %cst_460 {dimension_numbers = #tpu.dot_dimension_numbers<[1], [0], [0], [1], [0, 0, 1, 1], [], []>} : vector<8x8xf32>, vector<8x8xf32>, vector<8x8xf32> -> vector<8x8xf32>
    %c0_461 = arith.constant 0 : index
    %c1_462 = arith.constant 1 : index
    %c0_463 = arith.constant 0 : index
    %c0_464 = arith.constant 0 : index
    %547 = vector.load %arg11[%c0_461, %c1_462, %c0_463, %c0_464] : memref<2x4x8x32xf32, #tpu.memory_space<vmem>>, vector<1x1x8x32xf32>
    %548 = vector.shape_cast %547 : vector<1x1x8x32xf32> to vector<8x32xf32>
    %cst_465 = arith.constant dense<0.000000e+00> : vector<8x32xf32>
    %549 = tpu.matmul %546, %548, %cst_465 {dimension_numbers = #tpu.dot_dimension_numbers<[1], [0], [0], [1], [0, 0, 1, 1], [], []>} : vector<8x8xf32>, vector<8x32xf32>, vector<8x32xf32> -> vector<8x32xf32>
    %550 = arith.addf %511, %549 : vector<8x32xf32>
    %c0_466 = arith.constant 0 : index
    %c2_467 = arith.constant 2 : index
    %c0_468 = arith.constant 0 : index
    %c0_469 = arith.constant 0 : index
    %551 = vector.load %arg5[%c0_466, %c2_467, %c0_468, %c0_469] : memref<2x4x32x8xf32, #tpu.memory_space<vmem>>, vector<1x1x32x8xf32>
    %552 = vector.shape_cast %551 : vector<1x1x32x8xf32> to vector<32x8xf32>
    %cst_470 = arith.constant dense<0.000000e+00> : vector<8x8xf32>
    %553 = tpu.matmul %468, %552, %cst_470 {dimension_numbers = #tpu.dot_dimension_numbers<[1], [0], [0], [1], [0, 0, 1, 1], [], []>} : vector<8x32xf32>, vector<32x8xf32>, vector<8x8xf32> -> vector<8x8xf32>
    %c0_471 = arith.constant 0 : index
    %c2_472 = arith.constant 2 : index
    %c0_473 = arith.constant 0 : index
    %c0_474 = arith.constant 0 : index
    %554 = vector.load %arg8[%c0_471, %c2_472, %c0_473, %c0_474] : memref<2x4x1x8xf32, #tpu.memory_space<vmem>>, vector<1x1x1x8xf32>
    %555 = vector.shape_cast %554 : vector<1x1x1x8xf32> to vector<1x8xf32>
    %556 = vector.broadcast %555 : vector<1x8xf32> to vector<8x8xf32>
    %557 = arith.addf %553, %556 : vector<8x8xf32>
    %c0_475 = arith.constant 0 : index
    %c2_476 = arith.constant 2 : index
    %c0_477 = arith.constant 0 : index
    %c0_478 = arith.constant 0 : index
    %558 = vector.load %arg6[%c0_475, %c2_476, %c0_477, %c0_478] : memref<2x4x32x8xf32, #tpu.memory_space<vmem>>, vector<1x1x32x8xf32>
    %559 = vector.shape_cast %558 : vector<1x1x32x8xf32> to vector<32x8xf32>
    %cst_479 = arith.constant dense<0.000000e+00> : vector<8x8xf32>
    %560 = tpu.matmul %468, %559, %cst_479 {dimension_numbers = #tpu.dot_dimension_numbers<[1], [0], [0], [1], [0, 0, 1, 1], [], []>} : vector<8x32xf32>, vector<32x8xf32>, vector<8x8xf32> -> vector<8x8xf32>
    %c0_480 = arith.constant 0 : index
    %c2_481 = arith.constant 2 : index
    %c0_482 = arith.constant 0 : index
    %c0_483 = arith.constant 0 : index
    %561 = vector.load %arg9[%c0_480, %c2_481, %c0_482, %c0_483] : memref<2x4x1x8xf32, #tpu.memory_space<vmem>>, vector<1x1x1x8xf32>
    %562 = vector.shape_cast %561 : vector<1x1x1x8xf32> to vector<1x8xf32>
    %563 = vector.broadcast %562 : vector<1x8xf32> to vector<8x8xf32>
    %564 = arith.addf %560, %563 : vector<8x8xf32>
    %c0_484 = arith.constant 0 : index
    %c2_485 = arith.constant 2 : index
    %c0_486 = arith.constant 0 : index
    %c0_487 = arith.constant 0 : index
    %565 = vector.load %arg7[%c0_484, %c2_485, %c0_486, %c0_487] : memref<2x4x32x8xf32, #tpu.memory_space<vmem>>, vector<1x1x32x8xf32>
    %566 = vector.shape_cast %565 : vector<1x1x32x8xf32> to vector<32x8xf32>
    %cst_488 = arith.constant dense<0.000000e+00> : vector<8x8xf32>
    %567 = tpu.matmul %468, %566, %cst_488 {dimension_numbers = #tpu.dot_dimension_numbers<[1], [0], [0], [1], [0, 0, 1, 1], [], []>} : vector<8x32xf32>, vector<32x8xf32>, vector<8x8xf32> -> vector<8x8xf32>
    %c0_489 = arith.constant 0 : index
    %c2_490 = arith.constant 2 : index
    %c0_491 = arith.constant 0 : index
    %c0_492 = arith.constant 0 : index
    %568 = vector.load %arg10[%c0_489, %c2_490, %c0_491, %c0_492] : memref<2x4x1x8xf32, #tpu.memory_space<vmem>>, vector<1x1x1x8xf32>
    %569 = vector.shape_cast %568 : vector<1x1x1x8xf32> to vector<1x8xf32>
    %570 = vector.broadcast %569 : vector<1x8xf32> to vector<8x8xf32>
    %571 = arith.addf %567, %570 : vector<8x8xf32>
    %cst_493 = arith.constant dense<0.000000e+00> : vector<8x8xf32>
    %572 = tpu.matmul %557, %564, %cst_493 {dimension_numbers = #tpu.dot_dimension_numbers<[1], [1], [0], [0], [0, 0, 1, 0], [], []>} : vector<8x8xf32>, vector<8x8xf32>, vector<8x8xf32> -> vector<8x8xf32>
    %cst_494 = arith.constant 0.353553385 : f32
    %573 = vector.broadcast %cst_494 : f32 to vector<8x8xf32>
    %574 = arith.mulf %572, %573 : vector<8x8xf32>
    %cst_495 = arith.constant dense<0xFF800000> : vector<8xf32>
    %575 = vector.multi_reduction <maximumf>, %574, %cst_495 [1] : vector<8x8xf32> to vector<8xf32>
    %576 = vector.shape_cast %575 : vector<8xf32> to vector<8x1xf32>
    %577 = vector.broadcast %576 : vector<8x1xf32> to vector<8x8xf32>
    %578 = arith.subf %574, %577 : vector<8x8xf32>
    %579 = math.exp %578 : vector<8x8xf32>
    %cst_496 = arith.constant dense<0.000000e+00> : vector<8xf32>
    %580 = vector.multi_reduction <add>, %579, %cst_496 [1] : vector<8x8xf32> to vector<8xf32>
    %581 = vector.shape_cast %580 : vector<8xf32> to vector<8x1xf32>
    %582 = tpu.reciprocal %581 {approx = true} : vector<8x1xf32> -> vector<8x1xf32>
    %583 = vector.broadcast %582 : vector<8x1xf32> to vector<8x8xf32>
    %584 = arith.mulf %579, %583 : vector<8x8xf32>
    %cst_497 = arith.constant dense<0.000000e+00> : vector<8x8xf32>
    %585 = tpu.matmul %584, %571, %cst_497 {dimension_numbers = #tpu.dot_dimension_numbers<[1], [0], [0], [1], [0, 0, 1, 1], [], []>} : vector<8x8xf32>, vector<8x8xf32>, vector<8x8xf32> -> vector<8x8xf32>
    %c0_498 = arith.constant 0 : index
    %c2_499 = arith.constant 2 : index
    %c0_500 = arith.constant 0 : index
    %c0_501 = arith.constant 0 : index
    %586 = vector.load %arg11[%c0_498, %c2_499, %c0_500, %c0_501] : memref<2x4x8x32xf32, #tpu.memory_space<vmem>>, vector<1x1x8x32xf32>
    %587 = vector.shape_cast %586 : vector<1x1x8x32xf32> to vector<8x32xf32>
    %cst_502 = arith.constant dense<0.000000e+00> : vector<8x32xf32>
    %588 = tpu.matmul %585, %587, %cst_502 {dimension_numbers = #tpu.dot_dimension_numbers<[1], [0], [0], [1], [0, 0, 1, 1], [], []>} : vector<8x8xf32>, vector<8x32xf32>, vector<8x32xf32> -> vector<8x32xf32>
    %589 = arith.addf %550, %588 : vector<8x32xf32>
    %c0_503 = arith.constant 0 : index
    %c3_504 = arith.constant 3 : index
    %c0_505 = arith.constant 0 : index
    %c0_506 = arith.constant 0 : index
    %590 = vector.load %arg5[%c0_503, %c3_504, %c0_505, %c0_506] : memref<2x4x32x8xf32, #tpu.memory_space<vmem>>, vector<1x1x32x8xf32>
    %591 = vector.shape_cast %590 : vector<1x1x32x8xf32> to vector<32x8xf32>
    %cst_507 = arith.constant dense<0.000000e+00> : vector<8x8xf32>
    %592 = tpu.matmul %468, %591, %cst_507 {dimension_numbers = #tpu.dot_dimension_numbers<[1], [0], [0], [1], [0, 0, 1, 1], [], []>} : vector<8x32xf32>, vector<32x8xf32>, vector<8x8xf32> -> vector<8x8xf32>
    %c0_508 = arith.constant 0 : index
    %c3_509 = arith.constant 3 : index
    %c0_510 = arith.constant 0 : index
    %c0_511 = arith.constant 0 : index
    %593 = vector.load %arg8[%c0_508, %c3_509, %c0_510, %c0_511] : memref<2x4x1x8xf32, #tpu.memory_space<vmem>>, vector<1x1x1x8xf32>
    %594 = vector.shape_cast %593 : vector<1x1x1x8xf32> to vector<1x8xf32>
    %595 = vector.broadcast %594 : vector<1x8xf32> to vector<8x8xf32>
    %596 = arith.addf %592, %595 : vector<8x8xf32>
    %c0_512 = arith.constant 0 : index
    %c3_513 = arith.constant 3 : index
    %c0_514 = arith.constant 0 : index
    %c0_515 = arith.constant 0 : index
    %597 = vector.load %arg6[%c0_512, %c3_513, %c0_514, %c0_515] : memref<2x4x32x8xf32, #tpu.memory_space<vmem>>, vector<1x1x32x8xf32>
    %598 = vector.shape_cast %597 : vector<1x1x32x8xf32> to vector<32x8xf32>
    %cst_516 = arith.constant dense<0.000000e+00> : vector<8x8xf32>
    %599 = tpu.matmul %468, %598, %cst_516 {dimension_numbers = #tpu.dot_dimension_numbers<[1], [0], [0], [1], [0, 0, 1, 1], [], []>} : vector<8x32xf32>, vector<32x8xf32>, vector<8x8xf32> -> vector<8x8xf32>
    %c0_517 = arith.constant 0 : index
    %c3_518 = arith.constant 3 : index
    %c0_519 = arith.constant 0 : index
    %c0_520 = arith.constant 0 : index
    %600 = vector.load %arg9[%c0_517, %c3_518, %c0_519, %c0_520] : memref<2x4x1x8xf32, #tpu.memory_space<vmem>>, vector<1x1x1x8xf32>
    %601 = vector.shape_cast %600 : vector<1x1x1x8xf32> to vector<1x8xf32>
    %602 = vector.broadcast %601 : vector<1x8xf32> to vector<8x8xf32>
    %603 = arith.addf %599, %602 : vector<8x8xf32>
    %c0_521 = arith.constant 0 : index
    %c3_522 = arith.constant 3 : index
    %c0_523 = arith.constant 0 : index
    %c0_524 = arith.constant 0 : index
    %604 = vector.load %arg7[%c0_521, %c3_522, %c0_523, %c0_524] : memref<2x4x32x8xf32, #tpu.memory_space<vmem>>, vector<1x1x32x8xf32>
    %605 = vector.shape_cast %604 : vector<1x1x32x8xf32> to vector<32x8xf32>
    %cst_525 = arith.constant dense<0.000000e+00> : vector<8x8xf32>
    %606 = tpu.matmul %468, %605, %cst_525 {dimension_numbers = #tpu.dot_dimension_numbers<[1], [0], [0], [1], [0, 0, 1, 1], [], []>} : vector<8x32xf32>, vector<32x8xf32>, vector<8x8xf32> -> vector<8x8xf32>
    %c0_526 = arith.constant 0 : index
    %c3_527 = arith.constant 3 : index
    %c0_528 = arith.constant 0 : index
    %c0_529 = arith.constant 0 : index
    %607 = vector.load %arg10[%c0_526, %c3_527, %c0_528, %c0_529] : memref<2x4x1x8xf32, #tpu.memory_space<vmem>>, vector<1x1x1x8xf32>
    %608 = vector.shape_cast %607 : vector<1x1x1x8xf32> to vector<1x8xf32>
    %609 = vector.broadcast %608 : vector<1x8xf32> to vector<8x8xf32>
    %610 = arith.addf %606, %609 : vector<8x8xf32>
    %cst_530 = arith.constant dense<0.000000e+00> : vector<8x8xf32>
    %611 = tpu.matmul %596, %603, %cst_530 {dimension_numbers = #tpu.dot_dimension_numbers<[1], [1], [0], [0], [0, 0, 1, 0], [], []>} : vector<8x8xf32>, vector<8x8xf32>, vector<8x8xf32> -> vector<8x8xf32>
    %cst_531 = arith.constant 0.353553385 : f32
    %612 = vector.broadcast %cst_531 : f32 to vector<8x8xf32>
    %613 = arith.mulf %611, %612 : vector<8x8xf32>
    %cst_532 = arith.constant dense<0xFF800000> : vector<8xf32>
    %614 = vector.multi_reduction <maximumf>, %613, %cst_532 [1] : vector<8x8xf32> to vector<8xf32>
    %615 = vector.shape_cast %614 : vector<8xf32> to vector<8x1xf32>
    %616 = vector.broadcast %615 : vector<8x1xf32> to vector<8x8xf32>
    %617 = arith.subf %613, %616 : vector<8x8xf32>
    %618 = math.exp %617 : vector<8x8xf32>
    %cst_533 = arith.constant dense<0.000000e+00> : vector<8xf32>
    %619 = vector.multi_reduction <add>, %618, %cst_533 [1] : vector<8x8xf32> to vector<8xf32>
    %620 = vector.shape_cast %619 : vector<8xf32> to vector<8x1xf32>
    %621 = tpu.reciprocal %620 {approx = true} : vector<8x1xf32> -> vector<8x1xf32>
    %622 = vector.broadcast %621 : vector<8x1xf32> to vector<8x8xf32>
    %623 = arith.mulf %618, %622 : vector<8x8xf32>
    %cst_534 = arith.constant dense<0.000000e+00> : vector<8x8xf32>
    %624 = tpu.matmul %623, %610, %cst_534 {dimension_numbers = #tpu.dot_dimension_numbers<[1], [0], [0], [1], [0, 0, 1, 1], [], []>} : vector<8x8xf32>, vector<8x8xf32>, vector<8x8xf32> -> vector<8x8xf32>
    %c0_535 = arith.constant 0 : index
    %c3_536 = arith.constant 3 : index
    %c0_537 = arith.constant 0 : index
    %c0_538 = arith.constant 0 : index
    %625 = vector.load %arg11[%c0_535, %c3_536, %c0_537, %c0_538] : memref<2x4x8x32xf32, #tpu.memory_space<vmem>>, vector<1x1x8x32xf32>
    %626 = vector.shape_cast %625 : vector<1x1x8x32xf32> to vector<8x32xf32>
    %cst_539 = arith.constant dense<0.000000e+00> : vector<8x32xf32>
    %627 = tpu.matmul %624, %626, %cst_539 {dimension_numbers = #tpu.dot_dimension_numbers<[1], [0], [0], [1], [0, 0, 1, 1], [], []>} : vector<8x8xf32>, vector<8x32xf32>, vector<8x32xf32> -> vector<8x32xf32>
    %628 = arith.addf %589, %627 : vector<8x32xf32>
    %cst_540 = arith.constant dense<0.000000e+00> : vector<8xf32>
    %629 = vector.multi_reduction <add>, %628, %cst_540 [1] : vector<8x32xf32> to vector<8xf32>
    %630 = vector.shape_cast %629 : vector<8xf32> to vector<8x1xf32>
    %cst_541 = arith.constant 3.200000e+01 : f32
    %631 = vector.broadcast %cst_541 : f32 to vector<8x1xf32>
    %632 = arith.divf %630, %631 : vector<8x1xf32>
    %633 = vector.broadcast %632 : vector<8x1xf32> to vector<8x32xf32>
    %634 = arith.subf %628, %633 : vector<8x32xf32>
    %635 = arith.mulf %634, %634 : vector<8x32xf32>
    %cst_542 = arith.constant dense<0.000000e+00> : vector<8xf32>
    %636 = vector.multi_reduction <add>, %635, %cst_542 [1] : vector<8x32xf32> to vector<8xf32>
    %637 = vector.shape_cast %636 : vector<8xf32> to vector<8x1xf32>
    %cst_543 = arith.constant 3.200000e+01 : f32
    %638 = vector.broadcast %cst_543 : f32 to vector<8x1xf32>
    %639 = arith.divf %637, %638 : vector<8x1xf32>
    %cst_544 = arith.constant 9.99999974E-6 : f32
    %640 = vector.broadcast %cst_544 : f32 to vector<8x1xf32>
    %641 = arith.addf %639, %640 : vector<8x1xf32>
    %642 = math.rsqrt %641 : vector<8x1xf32>
    %643 = vector.broadcast %642 : vector<8x1xf32> to vector<8x32xf32>
    %644 = arith.mulf %634, %643 : vector<8x32xf32>
    %c0_545 = arith.constant 0 : index
    %c0_546 = arith.constant 0 : index
    %c0_547 = arith.constant 0 : index
    %645 = vector.load %arg13[%c0_545, %c0_546, %c0_547] : memref<2x1x32xf32, #tpu.memory_space<vmem>>, vector<1x1x32xf32>
    %646 = vector.shape_cast %645 : vector<1x1x32xf32> to vector<1x32xf32>
    %647 = vector.broadcast %646 : vector<1x32xf32> to vector<8x32xf32>
    %648 = arith.mulf %644, %647 : vector<8x32xf32>
    %c0_548 = arith.constant 0 : index
    %c0_549 = arith.constant 0 : index
    %c0_550 = arith.constant 0 : index
    %649 = vector.load %arg14[%c0_548, %c0_549, %c0_550] : memref<2x1x32xf32, #tpu.memory_space<vmem>>, vector<1x1x32xf32>
    %650 = vector.shape_cast %649 : vector<1x1x32xf32> to vector<1x32xf32>
    %651 = vector.broadcast %650 : vector<1x32xf32> to vector<8x32xf32>
    %652 = arith.addf %648, %651 : vector<8x32xf32>
    %c0_551 = arith.constant 0 : index
    %c0_552 = arith.constant 0 : index
    %c0_553 = arith.constant 0 : index
    %653 = vector.load %arg15[%c0_551, %c0_552, %c0_553] : memref<2x32x64xf32, #tpu.memory_space<vmem>>, vector<1x32x64xf32>
    %654 = vector.shape_cast %653 : vector<1x32x64xf32> to vector<32x64xf32>
    %cst_554 = arith.constant dense<0.000000e+00> : vector<8x64xf32>
    %655 = tpu.matmul %652, %654, %cst_554 {dimension_numbers = #tpu.dot_dimension_numbers<[1], [0], [0], [1], [0, 0, 1, 1], [], []>} : vector<8x32xf32>, vector<32x64xf32>, vector<8x64xf32> -> vector<8x64xf32>
    %c0_555 = arith.constant 0 : index
    %c0_556 = arith.constant 0 : index
    %c0_557 = arith.constant 0 : index
    %656 = vector.load %arg16[%c0_555, %c0_556, %c0_557] : memref<2x1x64xf32, #tpu.memory_space<vmem>>, vector<1x1x64xf32>
    %657 = vector.shape_cast %656 : vector<1x1x64xf32> to vector<1x64xf32>
    %658 = vector.broadcast %657 : vector<1x64xf32> to vector<8x64xf32>
    %659 = arith.addf %655, %658 : vector<8x64xf32>
    %cst_558 = arith.constant 0.000000e+00 : f32
    %660 = vector.broadcast %cst_558 : f32 to vector<8x64xf32>
    %661 = arith.maximumf %659, %660 : vector<8x64xf32>
    %c0_559 = arith.constant 0 : index
    %c0_560 = arith.constant 0 : index
    %c0_561 = arith.constant 0 : index
    %662 = vector.load %arg17[%c0_559, %c0_560, %c0_561] : memref<2x64x32xf32, #tpu.memory_space<vmem>>, vector<1x64x32xf32>
    %663 = vector.shape_cast %662 : vector<1x64x32xf32> to vector<64x32xf32>
    %cst_562 = arith.constant dense<0.000000e+00> : vector<8x32xf32>
    %664 = tpu.matmul %661, %663, %cst_562 {dimension_numbers = #tpu.dot_dimension_numbers<[1], [0], [0], [1], [0, 0, 1, 1], [], []>} : vector<8x64xf32>, vector<64x32xf32>, vector<8x32xf32> -> vector<8x32xf32>
    %665 = arith.addf %652, %664 : vector<8x32xf32>
    %c0_563 = arith.constant 0 : index
    %c0_564 = arith.constant 0 : index
    %c0_565 = arith.constant 0 : index
    %666 = vector.load %arg18[%c0_563, %c0_564, %c0_565] : memref<2x1x32xf32, #tpu.memory_space<vmem>>, vector<1x1x32xf32>
    %667 = vector.shape_cast %666 : vector<1x1x32xf32> to vector<1x32xf32>
    %668 = vector.broadcast %667 : vector<1x32xf32> to vector<8x32xf32>
    %669 = arith.addf %665, %668 : vector<8x32xf32>
    %cst_566 = arith.constant dense<0.000000e+00> : vector<8xf32>
    %670 = vector.multi_reduction <add>, %669, %cst_566 [1] : vector<8x32xf32> to vector<8xf32>
    %671 = vector.shape_cast %670 : vector<8xf32> to vector<8x1xf32>
    %cst_567 = arith.constant 3.200000e+01 : f32
    %672 = vector.broadcast %cst_567 : f32 to vector<8x1xf32>
    %673 = arith.divf %671, %672 : vector<8x1xf32>
    %674 = vector.broadcast %673 : vector<8x1xf32> to vector<8x32xf32>
    %675 = arith.subf %669, %674 : vector<8x32xf32>
    %676 = arith.mulf %675, %675 : vector<8x32xf32>
    %cst_568 = arith.constant dense<0.000000e+00> : vector<8xf32>
    %677 = vector.multi_reduction <add>, %676, %cst_568 [1] : vector<8x32xf32> to vector<8xf32>
    %678 = vector.shape_cast %677 : vector<8xf32> to vector<8x1xf32>
    %cst_569 = arith.constant 3.200000e+01 : f32
    %679 = vector.broadcast %cst_569 : f32 to vector<8x1xf32>
    %680 = arith.divf %678, %679 : vector<8x1xf32>
    %cst_570 = arith.constant 9.99999974E-6 : f32
    %681 = vector.broadcast %cst_570 : f32 to vector<8x1xf32>
    %682 = arith.addf %680, %681 : vector<8x1xf32>
    %683 = math.rsqrt %682 : vector<8x1xf32>
    %684 = vector.broadcast %683 : vector<8x1xf32> to vector<8x32xf32>
    %685 = arith.mulf %675, %684 : vector<8x32xf32>
    %c0_571 = arith.constant 0 : index
    %c0_572 = arith.constant 0 : index
    %c0_573 = arith.constant 0 : index
    %686 = vector.load %arg19[%c0_571, %c0_572, %c0_573] : memref<2x1x32xf32, #tpu.memory_space<vmem>>, vector<1x1x32xf32>
    %687 = vector.shape_cast %686 : vector<1x1x32xf32> to vector<1x32xf32>
    %688 = vector.broadcast %687 : vector<1x32xf32> to vector<8x32xf32>
    %689 = arith.mulf %685, %688 : vector<8x32xf32>
    %c0_574 = arith.constant 0 : index
    %c0_575 = arith.constant 0 : index
    %c0_576 = arith.constant 0 : index
    %690 = vector.load %arg20[%c0_574, %c0_575, %c0_576] : memref<2x1x32xf32, #tpu.memory_space<vmem>>, vector<1x1x32xf32>
    %691 = vector.shape_cast %690 : vector<1x1x32xf32> to vector<1x32xf32>
    %692 = vector.broadcast %691 : vector<1x32xf32> to vector<8x32xf32>
    %693 = arith.addf %689, %692 : vector<8x32xf32>
    %c1_577 = arith.constant 1 : index
    %c0_578 = arith.constant 0 : index
    %c0_579 = arith.constant 0 : index
    %694 = vector.load %arg12[%c1_577, %c0_578, %c0_579] : memref<2x1x32xf32, #tpu.memory_space<vmem>>, vector<1x1x32xf32>
    %695 = vector.shape_cast %694 : vector<1x1x32xf32> to vector<1x32xf32>
    %696 = vector.broadcast %695 : vector<1x32xf32> to vector<8x32xf32>
    %697 = arith.addf %693, %696 : vector<8x32xf32>
    %c1_580 = arith.constant 1 : index
    %c0_581 = arith.constant 0 : index
    %c0_582 = arith.constant 0 : index
    %c0_583 = arith.constant 0 : index
    %698 = vector.load %arg5[%c1_580, %c0_581, %c0_582, %c0_583] : memref<2x4x32x8xf32, #tpu.memory_space<vmem>>, vector<1x1x32x8xf32>
    %699 = vector.shape_cast %698 : vector<1x1x32x8xf32> to vector<32x8xf32>
    %cst_584 = arith.constant dense<0.000000e+00> : vector<8x8xf32>
    %700 = tpu.matmul %693, %699, %cst_584 {dimension_numbers = #tpu.dot_dimension_numbers<[1], [0], [0], [1], [0, 0, 1, 1], [], []>} : vector<8x32xf32>, vector<32x8xf32>, vector<8x8xf32> -> vector<8x8xf32>
    %c1_585 = arith.constant 1 : index
    %c0_586 = arith.constant 0 : index
    %c0_587 = arith.constant 0 : index
    %c0_588 = arith.constant 0 : index
    %701 = vector.load %arg8[%c1_585, %c0_586, %c0_587, %c0_588] : memref<2x4x1x8xf32, #tpu.memory_space<vmem>>, vector<1x1x1x8xf32>
    %702 = vector.shape_cast %701 : vector<1x1x1x8xf32> to vector<1x8xf32>
    %703 = vector.broadcast %702 : vector<1x8xf32> to vector<8x8xf32>
    %704 = arith.addf %700, %703 : vector<8x8xf32>
    %c1_589 = arith.constant 1 : index
    %c0_590 = arith.constant 0 : index
    %c0_591 = arith.constant 0 : index
    %c0_592 = arith.constant 0 : index
    %705 = vector.load %arg6[%c1_589, %c0_590, %c0_591, %c0_592] : memref<2x4x32x8xf32, #tpu.memory_space<vmem>>, vector<1x1x32x8xf32>
    %706 = vector.shape_cast %705 : vector<1x1x32x8xf32> to vector<32x8xf32>
    %cst_593 = arith.constant dense<0.000000e+00> : vector<8x8xf32>
    %707 = tpu.matmul %693, %706, %cst_593 {dimension_numbers = #tpu.dot_dimension_numbers<[1], [0], [0], [1], [0, 0, 1, 1], [], []>} : vector<8x32xf32>, vector<32x8xf32>, vector<8x8xf32> -> vector<8x8xf32>
    %c1_594 = arith.constant 1 : index
    %c0_595 = arith.constant 0 : index
    %c0_596 = arith.constant 0 : index
    %c0_597 = arith.constant 0 : index
    %708 = vector.load %arg9[%c1_594, %c0_595, %c0_596, %c0_597] : memref<2x4x1x8xf32, #tpu.memory_space<vmem>>, vector<1x1x1x8xf32>
    %709 = vector.shape_cast %708 : vector<1x1x1x8xf32> to vector<1x8xf32>
    %710 = vector.broadcast %709 : vector<1x8xf32> to vector<8x8xf32>
    %711 = arith.addf %707, %710 : vector<8x8xf32>
    %c1_598 = arith.constant 1 : index
    %c0_599 = arith.constant 0 : index
    %c0_600 = arith.constant 0 : index
    %c0_601 = arith.constant 0 : index
    %712 = vector.load %arg7[%c1_598, %c0_599, %c0_600, %c0_601] : memref<2x4x32x8xf32, #tpu.memory_space<vmem>>, vector<1x1x32x8xf32>
    %713 = vector.shape_cast %712 : vector<1x1x32x8xf32> to vector<32x8xf32>
    %cst_602 = arith.constant dense<0.000000e+00> : vector<8x8xf32>
    %714 = tpu.matmul %693, %713, %cst_602 {dimension_numbers = #tpu.dot_dimension_numbers<[1], [0], [0], [1], [0, 0, 1, 1], [], []>} : vector<8x32xf32>, vector<32x8xf32>, vector<8x8xf32> -> vector<8x8xf32>
    %c1_603 = arith.constant 1 : index
    %c0_604 = arith.constant 0 : index
    %c0_605 = arith.constant 0 : index
    %c0_606 = arith.constant 0 : index
    %715 = vector.load %arg10[%c1_603, %c0_604, %c0_605, %c0_606] : memref<2x4x1x8xf32, #tpu.memory_space<vmem>>, vector<1x1x1x8xf32>
    %716 = vector.shape_cast %715 : vector<1x1x1x8xf32> to vector<1x8xf32>
    %717 = vector.broadcast %716 : vector<1x8xf32> to vector<8x8xf32>
    %718 = arith.addf %714, %717 : vector<8x8xf32>
    %cst_607 = arith.constant dense<0.000000e+00> : vector<8x8xf32>
    %719 = tpu.matmul %704, %711, %cst_607 {dimension_numbers = #tpu.dot_dimension_numbers<[1], [1], [0], [0], [0, 0, 1, 0], [], []>} : vector<8x8xf32>, vector<8x8xf32>, vector<8x8xf32> -> vector<8x8xf32>
    %cst_608 = arith.constant 0.353553385 : f32
    %720 = vector.broadcast %cst_608 : f32 to vector<8x8xf32>
    %721 = arith.mulf %719, %720 : vector<8x8xf32>
    %cst_609 = arith.constant dense<0xFF800000> : vector<8xf32>
    %722 = vector.multi_reduction <maximumf>, %721, %cst_609 [1] : vector<8x8xf32> to vector<8xf32>
    %723 = vector.shape_cast %722 : vector<8xf32> to vector<8x1xf32>
    %724 = vector.broadcast %723 : vector<8x1xf32> to vector<8x8xf32>
    %725 = arith.subf %721, %724 : vector<8x8xf32>
    %726 = math.exp %725 : vector<8x8xf32>
    %cst_610 = arith.constant dense<0.000000e+00> : vector<8xf32>
    %727 = vector.multi_reduction <add>, %726, %cst_610 [1] : vector<8x8xf32> to vector<8xf32>
    %728 = vector.shape_cast %727 : vector<8xf32> to vector<8x1xf32>
    %729 = tpu.reciprocal %728 {approx = true} : vector<8x1xf32> -> vector<8x1xf32>
    %730 = vector.broadcast %729 : vector<8x1xf32> to vector<8x8xf32>
    %731 = arith.mulf %726, %730 : vector<8x8xf32>
    %cst_611 = arith.constant dense<0.000000e+00> : vector<8x8xf32>
    %732 = tpu.matmul %731, %718, %cst_611 {dimension_numbers = #tpu.dot_dimension_numbers<[1], [0], [0], [1], [0, 0, 1, 1], [], []>} : vector<8x8xf32>, vector<8x8xf32>, vector<8x8xf32> -> vector<8x8xf32>
    %c1_612 = arith.constant 1 : index
    %c0_613 = arith.constant 0 : index
    %c0_614 = arith.constant 0 : index
    %c0_615 = arith.constant 0 : index
    %733 = vector.load %arg11[%c1_612, %c0_613, %c0_614, %c0_615] : memref<2x4x8x32xf32, #tpu.memory_space<vmem>>, vector<1x1x8x32xf32>
    %734 = vector.shape_cast %733 : vector<1x1x8x32xf32> to vector<8x32xf32>
    %cst_616 = arith.constant dense<0.000000e+00> : vector<8x32xf32>
    %735 = tpu.matmul %732, %734, %cst_616 {dimension_numbers = #tpu.dot_dimension_numbers<[1], [0], [0], [1], [0, 0, 1, 1], [], []>} : vector<8x8xf32>, vector<8x32xf32>, vector<8x32xf32> -> vector<8x32xf32>
    %736 = arith.addf %697, %735 : vector<8x32xf32>
    %c1_617 = arith.constant 1 : index
    %c1_618 = arith.constant 1 : index
    %c0_619 = arith.constant 0 : index
    %c0_620 = arith.constant 0 : index
    %737 = vector.load %arg5[%c1_617, %c1_618, %c0_619, %c0_620] : memref<2x4x32x8xf32, #tpu.memory_space<vmem>>, vector<1x1x32x8xf32>
    %738 = vector.shape_cast %737 : vector<1x1x32x8xf32> to vector<32x8xf32>
    %cst_621 = arith.constant dense<0.000000e+00> : vector<8x8xf32>
    %739 = tpu.matmul %693, %738, %cst_621 {dimension_numbers = #tpu.dot_dimension_numbers<[1], [0], [0], [1], [0, 0, 1, 1], [], []>} : vector<8x32xf32>, vector<32x8xf32>, vector<8x8xf32> -> vector<8x8xf32>
    %c1_622 = arith.constant 1 : index
    %c1_623 = arith.constant 1 : index
    %c0_624 = arith.constant 0 : index
    %c0_625 = arith.constant 0 : index
    %740 = vector.load %arg8[%c1_622, %c1_623, %c0_624, %c0_625] : memref<2x4x1x8xf32, #tpu.memory_space<vmem>>, vector<1x1x1x8xf32>
    %741 = vector.shape_cast %740 : vector<1x1x1x8xf32> to vector<1x8xf32>
    %742 = vector.broadcast %741 : vector<1x8xf32> to vector<8x8xf32>
    %743 = arith.addf %739, %742 : vector<8x8xf32>
    %c1_626 = arith.constant 1 : index
    %c1_627 = arith.constant 1 : index
    %c0_628 = arith.constant 0 : index
    %c0_629 = arith.constant 0 : index
    %744 = vector.load %arg6[%c1_626, %c1_627, %c0_628, %c0_629] : memref<2x4x32x8xf32, #tpu.memory_space<vmem>>, vector<1x1x32x8xf32>
    %745 = vector.shape_cast %744 : vector<1x1x32x8xf32> to vector<32x8xf32>
    %cst_630 = arith.constant dense<0.000000e+00> : vector<8x8xf32>
    %746 = tpu.matmul %693, %745, %cst_630 {dimension_numbers = #tpu.dot_dimension_numbers<[1], [0], [0], [1], [0, 0, 1, 1], [], []>} : vector<8x32xf32>, vector<32x8xf32>, vector<8x8xf32> -> vector<8x8xf32>
    %c1_631 = arith.constant 1 : index
    %c1_632 = arith.constant 1 : index
    %c0_633 = arith.constant 0 : index
    %c0_634 = arith.constant 0 : index
    %747 = vector.load %arg9[%c1_631, %c1_632, %c0_633, %c0_634] : memref<2x4x1x8xf32, #tpu.memory_space<vmem>>, vector<1x1x1x8xf32>
    %748 = vector.shape_cast %747 : vector<1x1x1x8xf32> to vector<1x8xf32>
    %749 = vector.broadcast %748 : vector<1x8xf32> to vector<8x8xf32>
    %750 = arith.addf %746, %749 : vector<8x8xf32>
    %c1_635 = arith.constant 1 : index
    %c1_636 = arith.constant 1 : index
    %c0_637 = arith.constant 0 : index
    %c0_638 = arith.constant 0 : index
    %751 = vector.load %arg7[%c1_635, %c1_636, %c0_637, %c0_638] : memref<2x4x32x8xf32, #tpu.memory_space<vmem>>, vector<1x1x32x8xf32>
    %752 = vector.shape_cast %751 : vector<1x1x32x8xf32> to vector<32x8xf32>
    %cst_639 = arith.constant dense<0.000000e+00> : vector<8x8xf32>
    %753 = tpu.matmul %693, %752, %cst_639 {dimension_numbers = #tpu.dot_dimension_numbers<[1], [0], [0], [1], [0, 0, 1, 1], [], []>} : vector<8x32xf32>, vector<32x8xf32>, vector<8x8xf32> -> vector<8x8xf32>
    %c1_640 = arith.constant 1 : index
    %c1_641 = arith.constant 1 : index
    %c0_642 = arith.constant 0 : index
    %c0_643 = arith.constant 0 : index
    %754 = vector.load %arg10[%c1_640, %c1_641, %c0_642, %c0_643] : memref<2x4x1x8xf32, #tpu.memory_space<vmem>>, vector<1x1x1x8xf32>
    %755 = vector.shape_cast %754 : vector<1x1x1x8xf32> to vector<1x8xf32>
    %756 = vector.broadcast %755 : vector<1x8xf32> to vector<8x8xf32>
    %757 = arith.addf %753, %756 : vector<8x8xf32>
    %cst_644 = arith.constant dense<0.000000e+00> : vector<8x8xf32>
    %758 = tpu.matmul %743, %750, %cst_644 {dimension_numbers = #tpu.dot_dimension_numbers<[1], [1], [0], [0], [0, 0, 1, 0], [], []>} : vector<8x8xf32>, vector<8x8xf32>, vector<8x8xf32> -> vector<8x8xf32>
    %cst_645 = arith.constant 0.353553385 : f32
    %759 = vector.broadcast %cst_645 : f32 to vector<8x8xf32>
    %760 = arith.mulf %758, %759 : vector<8x8xf32>
    %cst_646 = arith.constant dense<0xFF800000> : vector<8xf32>
    %761 = vector.multi_reduction <maximumf>, %760, %cst_646 [1] : vector<8x8xf32> to vector<8xf32>
    %762 = vector.shape_cast %761 : vector<8xf32> to vector<8x1xf32>
    %763 = vector.broadcast %762 : vector<8x1xf32> to vector<8x8xf32>
    %764 = arith.subf %760, %763 : vector<8x8xf32>
    %765 = math.exp %764 : vector<8x8xf32>
    %cst_647 = arith.constant dense<0.000000e+00> : vector<8xf32>
    %766 = vector.multi_reduction <add>, %765, %cst_647 [1] : vector<8x8xf32> to vector<8xf32>
    %767 = vector.shape_cast %766 : vector<8xf32> to vector<8x1xf32>
    %768 = tpu.reciprocal %767 {approx = true} : vector<8x1xf32> -> vector<8x1xf32>
    %769 = vector.broadcast %768 : vector<8x1xf32> to vector<8x8xf32>
    %770 = arith.mulf %765, %769 : vector<8x8xf32>
    %cst_648 = arith.constant dense<0.000000e+00> : vector<8x8xf32>
    %771 = tpu.matmul %770, %757, %cst_648 {dimension_numbers = #tpu.dot_dimension_numbers<[1], [0], [0], [1], [0, 0, 1, 1], [], []>} : vector<8x8xf32>, vector<8x8xf32>, vector<8x8xf32> -> vector<8x8xf32>
    %c1_649 = arith.constant 1 : index
    %c1_650 = arith.constant 1 : index
    %c0_651 = arith.constant 0 : index
    %c0_652 = arith.constant 0 : index
    %772 = vector.load %arg11[%c1_649, %c1_650, %c0_651, %c0_652] : memref<2x4x8x32xf32, #tpu.memory_space<vmem>>, vector<1x1x8x32xf32>
    %773 = vector.shape_cast %772 : vector<1x1x8x32xf32> to vector<8x32xf32>
    %cst_653 = arith.constant dense<0.000000e+00> : vector<8x32xf32>
    %774 = tpu.matmul %771, %773, %cst_653 {dimension_numbers = #tpu.dot_dimension_numbers<[1], [0], [0], [1], [0, 0, 1, 1], [], []>} : vector<8x8xf32>, vector<8x32xf32>, vector<8x32xf32> -> vector<8x32xf32>
    %775 = arith.addf %736, %774 : vector<8x32xf32>
    %c1_654 = arith.constant 1 : index
    %c2_655 = arith.constant 2 : index
    %c0_656 = arith.constant 0 : index
    %c0_657 = arith.constant 0 : index
    %776 = vector.load %arg5[%c1_654, %c2_655, %c0_656, %c0_657] : memref<2x4x32x8xf32, #tpu.memory_space<vmem>>, vector<1x1x32x8xf32>
    %777 = vector.shape_cast %776 : vector<1x1x32x8xf32> to vector<32x8xf32>
    %cst_658 = arith.constant dense<0.000000e+00> : vector<8x8xf32>
    %778 = tpu.matmul %693, %777, %cst_658 {dimension_numbers = #tpu.dot_dimension_numbers<[1], [0], [0], [1], [0, 0, 1, 1], [], []>} : vector<8x32xf32>, vector<32x8xf32>, vector<8x8xf32> -> vector<8x8xf32>
    %c1_659 = arith.constant 1 : index
    %c2_660 = arith.constant 2 : index
    %c0_661 = arith.constant 0 : index
    %c0_662 = arith.constant 0 : index
    %779 = vector.load %arg8[%c1_659, %c2_660, %c0_661, %c0_662] : memref<2x4x1x8xf32, #tpu.memory_space<vmem>>, vector<1x1x1x8xf32>
    %780 = vector.shape_cast %779 : vector<1x1x1x8xf32> to vector<1x8xf32>
    %781 = vector.broadcast %780 : vector<1x8xf32> to vector<8x8xf32>
    %782 = arith.addf %778, %781 : vector<8x8xf32>
    %c1_663 = arith.constant 1 : index
    %c2_664 = arith.constant 2 : index
    %c0_665 = arith.constant 0 : index
    %c0_666 = arith.constant 0 : index
    %783 = vector.load %arg6[%c1_663, %c2_664, %c0_665, %c0_666] : memref<2x4x32x8xf32, #tpu.memory_space<vmem>>, vector<1x1x32x8xf32>
    %784 = vector.shape_cast %783 : vector<1x1x32x8xf32> to vector<32x8xf32>
    %cst_667 = arith.constant dense<0.000000e+00> : vector<8x8xf32>
    %785 = tpu.matmul %693, %784, %cst_667 {dimension_numbers = #tpu.dot_dimension_numbers<[1], [0], [0], [1], [0, 0, 1, 1], [], []>} : vector<8x32xf32>, vector<32x8xf32>, vector<8x8xf32> -> vector<8x8xf32>
    %c1_668 = arith.constant 1 : index
    %c2_669 = arith.constant 2 : index
    %c0_670 = arith.constant 0 : index
    %c0_671 = arith.constant 0 : index
    %786 = vector.load %arg9[%c1_668, %c2_669, %c0_670, %c0_671] : memref<2x4x1x8xf32, #tpu.memory_space<vmem>>, vector<1x1x1x8xf32>
    %787 = vector.shape_cast %786 : vector<1x1x1x8xf32> to vector<1x8xf32>
    %788 = vector.broadcast %787 : vector<1x8xf32> to vector<8x8xf32>
    %789 = arith.addf %785, %788 : vector<8x8xf32>
    %c1_672 = arith.constant 1 : index
    %c2_673 = arith.constant 2 : index
    %c0_674 = arith.constant 0 : index
    %c0_675 = arith.constant 0 : index
    %790 = vector.load %arg7[%c1_672, %c2_673, %c0_674, %c0_675] : memref<2x4x32x8xf32, #tpu.memory_space<vmem>>, vector<1x1x32x8xf32>
    %791 = vector.shape_cast %790 : vector<1x1x32x8xf32> to vector<32x8xf32>
    %cst_676 = arith.constant dense<0.000000e+00> : vector<8x8xf32>
    %792 = tpu.matmul %693, %791, %cst_676 {dimension_numbers = #tpu.dot_dimension_numbers<[1], [0], [0], [1], [0, 0, 1, 1], [], []>} : vector<8x32xf32>, vector<32x8xf32>, vector<8x8xf32> -> vector<8x8xf32>
    %c1_677 = arith.constant 1 : index
    %c2_678 = arith.constant 2 : index
    %c0_679 = arith.constant 0 : index
    %c0_680 = arith.constant 0 : index
    %793 = vector.load %arg10[%c1_677, %c2_678, %c0_679, %c0_680] : memref<2x4x1x8xf32, #tpu.memory_space<vmem>>, vector<1x1x1x8xf32>
    %794 = vector.shape_cast %793 : vector<1x1x1x8xf32> to vector<1x8xf32>
    %795 = vector.broadcast %794 : vector<1x8xf32> to vector<8x8xf32>
    %796 = arith.addf %792, %795 : vector<8x8xf32>
    %cst_681 = arith.constant dense<0.000000e+00> : vector<8x8xf32>
    %797 = tpu.matmul %782, %789, %cst_681 {dimension_numbers = #tpu.dot_dimension_numbers<[1], [1], [0], [0], [0, 0, 1, 0], [], []>} : vector<8x8xf32>, vector<8x8xf32>, vector<8x8xf32> -> vector<8x8xf32>
    %cst_682 = arith.constant 0.353553385 : f32
    %798 = vector.broadcast %cst_682 : f32 to vector<8x8xf32>
    %799 = arith.mulf %797, %798 : vector<8x8xf32>
    %cst_683 = arith.constant dense<0xFF800000> : vector<8xf32>
    %800 = vector.multi_reduction <maximumf>, %799, %cst_683 [1] : vector<8x8xf32> to vector<8xf32>
    %801 = vector.shape_cast %800 : vector<8xf32> to vector<8x1xf32>
    %802 = vector.broadcast %801 : vector<8x1xf32> to vector<8x8xf32>
    %803 = arith.subf %799, %802 : vector<8x8xf32>
    %804 = math.exp %803 : vector<8x8xf32>
    %cst_684 = arith.constant dense<0.000000e+00> : vector<8xf32>
    %805 = vector.multi_reduction <add>, %804, %cst_684 [1] : vector<8x8xf32> to vector<8xf32>
    %806 = vector.shape_cast %805 : vector<8xf32> to vector<8x1xf32>
    %807 = tpu.reciprocal %806 {approx = true} : vector<8x1xf32> -> vector<8x1xf32>
    %808 = vector.broadcast %807 : vector<8x1xf32> to vector<8x8xf32>
    %809 = arith.mulf %804, %808 : vector<8x8xf32>
    %cst_685 = arith.constant dense<0.000000e+00> : vector<8x8xf32>
    %810 = tpu.matmul %809, %796, %cst_685 {dimension_numbers = #tpu.dot_dimension_numbers<[1], [0], [0], [1], [0, 0, 1, 1], [], []>} : vector<8x8xf32>, vector<8x8xf32>, vector<8x8xf32> -> vector<8x8xf32>
    %c1_686 = arith.constant 1 : index
    %c2_687 = arith.constant 2 : index
    %c0_688 = arith.constant 0 : index
    %c0_689 = arith.constant 0 : index
    %811 = vector.load %arg11[%c1_686, %c2_687, %c0_688, %c0_689] : memref<2x4x8x32xf32, #tpu.memory_space<vmem>>, vector<1x1x8x32xf32>
    %812 = vector.shape_cast %811 : vector<1x1x8x32xf32> to vector<8x32xf32>
    %cst_690 = arith.constant dense<0.000000e+00> : vector<8x32xf32>
    %813 = tpu.matmul %810, %812, %cst_690 {dimension_numbers = #tpu.dot_dimension_numbers<[1], [0], [0], [1], [0, 0, 1, 1], [], []>} : vector<8x8xf32>, vector<8x32xf32>, vector<8x32xf32> -> vector<8x32xf32>
    %814 = arith.addf %775, %813 : vector<8x32xf32>
    %c1_691 = arith.constant 1 : index
    %c3_692 = arith.constant 3 : index
    %c0_693 = arith.constant 0 : index
    %c0_694 = arith.constant 0 : index
    %815 = vector.load %arg5[%c1_691, %c3_692, %c0_693, %c0_694] : memref<2x4x32x8xf32, #tpu.memory_space<vmem>>, vector<1x1x32x8xf32>
    %816 = vector.shape_cast %815 : vector<1x1x32x8xf32> to vector<32x8xf32>
    %cst_695 = arith.constant dense<0.000000e+00> : vector<8x8xf32>
    %817 = tpu.matmul %693, %816, %cst_695 {dimension_numbers = #tpu.dot_dimension_numbers<[1], [0], [0], [1], [0, 0, 1, 1], [], []>} : vector<8x32xf32>, vector<32x8xf32>, vector<8x8xf32> -> vector<8x8xf32>
    %c1_696 = arith.constant 1 : index
    %c3_697 = arith.constant 3 : index
    %c0_698 = arith.constant 0 : index
    %c0_699 = arith.constant 0 : index
    %818 = vector.load %arg8[%c1_696, %c3_697, %c0_698, %c0_699] : memref<2x4x1x8xf32, #tpu.memory_space<vmem>>, vector<1x1x1x8xf32>
    %819 = vector.shape_cast %818 : vector<1x1x1x8xf32> to vector<1x8xf32>
    %820 = vector.broadcast %819 : vector<1x8xf32> to vector<8x8xf32>
    %821 = arith.addf %817, %820 : vector<8x8xf32>
    %c1_700 = arith.constant 1 : index
    %c3_701 = arith.constant 3 : index
    %c0_702 = arith.constant 0 : index
    %c0_703 = arith.constant 0 : index
    %822 = vector.load %arg6[%c1_700, %c3_701, %c0_702, %c0_703] : memref<2x4x32x8xf32, #tpu.memory_space<vmem>>, vector<1x1x32x8xf32>
    %823 = vector.shape_cast %822 : vector<1x1x32x8xf32> to vector<32x8xf32>
    %cst_704 = arith.constant dense<0.000000e+00> : vector<8x8xf32>
    %824 = tpu.matmul %693, %823, %cst_704 {dimension_numbers = #tpu.dot_dimension_numbers<[1], [0], [0], [1], [0, 0, 1, 1], [], []>} : vector<8x32xf32>, vector<32x8xf32>, vector<8x8xf32> -> vector<8x8xf32>
    %c1_705 = arith.constant 1 : index
    %c3_706 = arith.constant 3 : index
    %c0_707 = arith.constant 0 : index
    %c0_708 = arith.constant 0 : index
    %825 = vector.load %arg9[%c1_705, %c3_706, %c0_707, %c0_708] : memref<2x4x1x8xf32, #tpu.memory_space<vmem>>, vector<1x1x1x8xf32>
    %826 = vector.shape_cast %825 : vector<1x1x1x8xf32> to vector<1x8xf32>
    %827 = vector.broadcast %826 : vector<1x8xf32> to vector<8x8xf32>
    %828 = arith.addf %824, %827 : vector<8x8xf32>
    %c1_709 = arith.constant 1 : index
    %c3_710 = arith.constant 3 : index
    %c0_711 = arith.constant 0 : index
    %c0_712 = arith.constant 0 : index
    %829 = vector.load %arg7[%c1_709, %c3_710, %c0_711, %c0_712] : memref<2x4x32x8xf32, #tpu.memory_space<vmem>>, vector<1x1x32x8xf32>
    %830 = vector.shape_cast %829 : vector<1x1x32x8xf32> to vector<32x8xf32>
    %cst_713 = arith.constant dense<0.000000e+00> : vector<8x8xf32>
    %831 = tpu.matmul %693, %830, %cst_713 {dimension_numbers = #tpu.dot_dimension_numbers<[1], [0], [0], [1], [0, 0, 1, 1], [], []>} : vector<8x32xf32>, vector<32x8xf32>, vector<8x8xf32> -> vector<8x8xf32>
    %c1_714 = arith.constant 1 : index
    %c3_715 = arith.constant 3 : index
    %c0_716 = arith.constant 0 : index
    %c0_717 = arith.constant 0 : index
    %832 = vector.load %arg10[%c1_714, %c3_715, %c0_716, %c0_717] : memref<2x4x1x8xf32, #tpu.memory_space<vmem>>, vector<1x1x1x8xf32>
    %833 = vector.shape_cast %832 : vector<1x1x1x8xf32> to vector<1x8xf32>
    %834 = vector.broadcast %833 : vector<1x8xf32> to vector<8x8xf32>
    %835 = arith.addf %831, %834 : vector<8x8xf32>
    %cst_718 = arith.constant dense<0.000000e+00> : vector<8x8xf32>
    %836 = tpu.matmul %821, %828, %cst_718 {dimension_numbers = #tpu.dot_dimension_numbers<[1], [1], [0], [0], [0, 0, 1, 0], [], []>} : vector<8x8xf32>, vector<8x8xf32>, vector<8x8xf32> -> vector<8x8xf32>
    %cst_719 = arith.constant 0.353553385 : f32
    %837 = vector.broadcast %cst_719 : f32 to vector<8x8xf32>
    %838 = arith.mulf %836, %837 : vector<8x8xf32>
    %cst_720 = arith.constant dense<0xFF800000> : vector<8xf32>
    %839 = vector.multi_reduction <maximumf>, %838, %cst_720 [1] : vector<8x8xf32> to vector<8xf32>
    %840 = vector.shape_cast %839 : vector<8xf32> to vector<8x1xf32>
    %841 = vector.broadcast %840 : vector<8x1xf32> to vector<8x8xf32>
    %842 = arith.subf %838, %841 : vector<8x8xf32>
    %843 = math.exp %842 : vector<8x8xf32>
    %cst_721 = arith.constant dense<0.000000e+00> : vector<8xf32>
    %844 = vector.multi_reduction <add>, %843, %cst_721 [1] : vector<8x8xf32> to vector<8xf32>
    %845 = vector.shape_cast %844 : vector<8xf32> to vector<8x1xf32>
    %846 = tpu.reciprocal %845 {approx = true} : vector<8x1xf32> -> vector<8x1xf32>
    %847 = vector.broadcast %846 : vector<8x1xf32> to vector<8x8xf32>
    %848 = arith.mulf %843, %847 : vector<8x8xf32>
    %cst_722 = arith.constant dense<0.000000e+00> : vector<8x8xf32>
    %849 = tpu.matmul %848, %835, %cst_722 {dimension_numbers = #tpu.dot_dimension_numbers<[1], [0], [0], [1], [0, 0, 1, 1], [], []>} : vector<8x8xf32>, vector<8x8xf32>, vector<8x8xf32> -> vector<8x8xf32>
    %c1_723 = arith.constant 1 : index
    %c3_724 = arith.constant 3 : index
    %c0_725 = arith.constant 0 : index
    %c0_726 = arith.constant 0 : index
    %850 = vector.load %arg11[%c1_723, %c3_724, %c0_725, %c0_726] : memref<2x4x8x32xf32, #tpu.memory_space<vmem>>, vector<1x1x8x32xf32>
    %851 = vector.shape_cast %850 : vector<1x1x8x32xf32> to vector<8x32xf32>
    %cst_727 = arith.constant dense<0.000000e+00> : vector<8x32xf32>
    %852 = tpu.matmul %849, %851, %cst_727 {dimension_numbers = #tpu.dot_dimension_numbers<[1], [0], [0], [1], [0, 0, 1, 1], [], []>} : vector<8x8xf32>, vector<8x32xf32>, vector<8x32xf32> -> vector<8x32xf32>
    %853 = arith.addf %814, %852 : vector<8x32xf32>
    %cst_728 = arith.constant dense<0.000000e+00> : vector<8xf32>
    %854 = vector.multi_reduction <add>, %853, %cst_728 [1] : vector<8x32xf32> to vector<8xf32>
    %855 = vector.shape_cast %854 : vector<8xf32> to vector<8x1xf32>
    %cst_729 = arith.constant 3.200000e+01 : f32
    %856 = vector.broadcast %cst_729 : f32 to vector<8x1xf32>
    %857 = arith.divf %855, %856 : vector<8x1xf32>
    %858 = vector.broadcast %857 : vector<8x1xf32> to vector<8x32xf32>
    %859 = arith.subf %853, %858 : vector<8x32xf32>
    %860 = arith.mulf %859, %859 : vector<8x32xf32>
    %cst_730 = arith.constant dense<0.000000e+00> : vector<8xf32>
    %861 = vector.multi_reduction <add>, %860, %cst_730 [1] : vector<8x32xf32> to vector<8xf32>
    %862 = vector.shape_cast %861 : vector<8xf32> to vector<8x1xf32>
    %cst_731 = arith.constant 3.200000e+01 : f32
    %863 = vector.broadcast %cst_731 : f32 to vector<8x1xf32>
    %864 = arith.divf %862, %863 : vector<8x1xf32>
    %cst_732 = arith.constant 9.99999974E-6 : f32
    %865 = vector.broadcast %cst_732 : f32 to vector<8x1xf32>
    %866 = arith.addf %864, %865 : vector<8x1xf32>
    %867 = math.rsqrt %866 : vector<8x1xf32>
    %868 = vector.broadcast %867 : vector<8x1xf32> to vector<8x32xf32>
    %869 = arith.mulf %859, %868 : vector<8x32xf32>
    %c1_733 = arith.constant 1 : index
    %c0_734 = arith.constant 0 : index
    %c0_735 = arith.constant 0 : index
    %870 = vector.load %arg13[%c1_733, %c0_734, %c0_735] : memref<2x1x32xf32, #tpu.memory_space<vmem>>, vector<1x1x32xf32>
    %871 = vector.shape_cast %870 : vector<1x1x32xf32> to vector<1x32xf32>
    %872 = vector.broadcast %871 : vector<1x32xf32> to vector<8x32xf32>
    %873 = arith.mulf %869, %872 : vector<8x32xf32>
    %c1_736 = arith.constant 1 : index
    %c0_737 = arith.constant 0 : index
    %c0_738 = arith.constant 0 : index
    %874 = vector.load %arg14[%c1_736, %c0_737, %c0_738] : memref<2x1x32xf32, #tpu.memory_space<vmem>>, vector<1x1x32xf32>
    %875 = vector.shape_cast %874 : vector<1x1x32xf32> to vector<1x32xf32>
    %876 = vector.broadcast %875 : vector<1x32xf32> to vector<8x32xf32>
    %877 = arith.addf %873, %876 : vector<8x32xf32>
    %c1_739 = arith.constant 1 : index
    %c0_740 = arith.constant 0 : index
    %c0_741 = arith.constant 0 : index
    %878 = vector.load %arg15[%c1_739, %c0_740, %c0_741] : memref<2x32x64xf32, #tpu.memory_space<vmem>>, vector<1x32x64xf32>
    %879 = vector.shape_cast %878 : vector<1x32x64xf32> to vector<32x64xf32>
    %cst_742 = arith.constant dense<0.000000e+00> : vector<8x64xf32>
    %880 = tpu.matmul %877, %879, %cst_742 {dimension_numbers = #tpu.dot_dimension_numbers<[1], [0], [0], [1], [0, 0, 1, 1], [], []>} : vector<8x32xf32>, vector<32x64xf32>, vector<8x64xf32> -> vector<8x64xf32>
    %c1_743 = arith.constant 1 : index
    %c0_744 = arith.constant 0 : index
    %c0_745 = arith.constant 0 : index
    %881 = vector.load %arg16[%c1_743, %c0_744, %c0_745] : memref<2x1x64xf32, #tpu.memory_space<vmem>>, vector<1x1x64xf32>
    %882 = vector.shape_cast %881 : vector<1x1x64xf32> to vector<1x64xf32>
    %883 = vector.broadcast %882 : vector<1x64xf32> to vector<8x64xf32>
    %884 = arith.addf %880, %883 : vector<8x64xf32>
    %cst_746 = arith.constant 0.000000e+00 : f32
    %885 = vector.broadcast %cst_746 : f32 to vector<8x64xf32>
    %886 = arith.maximumf %884, %885 : vector<8x64xf32>
    %c1_747 = arith.constant 1 : index
    %c0_748 = arith.constant 0 : index
    %c0_749 = arith.constant 0 : index
    %887 = vector.load %arg17[%c1_747, %c0_748, %c0_749] : memref<2x64x32xf32, #tpu.memory_space<vmem>>, vector<1x64x32xf32>
    %888 = vector.shape_cast %887 : vector<1x64x32xf32> to vector<64x32xf32>
    %cst_750 = arith.constant dense<0.000000e+00> : vector<8x32xf32>
    %889 = tpu.matmul %886, %888, %cst_750 {dimension_numbers = #tpu.dot_dimension_numbers<[1], [0], [0], [1], [0, 0, 1, 1], [], []>} : vector<8x64xf32>, vector<64x32xf32>, vector<8x32xf32> -> vector<8x32xf32>
    %890 = arith.addf %877, %889 : vector<8x32xf32>
    %c1_751 = arith.constant 1 : index
    %c0_752 = arith.constant 0 : index
    %c0_753 = arith.constant 0 : index
    %891 = vector.load %arg18[%c1_751, %c0_752, %c0_753] : memref<2x1x32xf32, #tpu.memory_space<vmem>>, vector<1x1x32xf32>
    %892 = vector.shape_cast %891 : vector<1x1x32xf32> to vector<1x32xf32>
    %893 = vector.broadcast %892 : vector<1x32xf32> to vector<8x32xf32>
    %894 = arith.addf %890, %893 : vector<8x32xf32>
    %cst_754 = arith.constant dense<0.000000e+00> : vector<8xf32>
    %895 = vector.multi_reduction <add>, %894, %cst_754 [1] : vector<8x32xf32> to vector<8xf32>
    %896 = vector.shape_cast %895 : vector<8xf32> to vector<8x1xf32>
    %cst_755 = arith.constant 3.200000e+01 : f32
    %897 = vector.broadcast %cst_755 : f32 to vector<8x1xf32>
    %898 = arith.divf %896, %897 : vector<8x1xf32>
    %899 = vector.broadcast %898 : vector<8x1xf32> to vector<8x32xf32>
    %900 = arith.subf %894, %899 : vector<8x32xf32>
    %901 = arith.mulf %900, %900 : vector<8x32xf32>
    %cst_756 = arith.constant dense<0.000000e+00> : vector<8xf32>
    %902 = vector.multi_reduction <add>, %901, %cst_756 [1] : vector<8x32xf32> to vector<8xf32>
    %903 = vector.shape_cast %902 : vector<8xf32> to vector<8x1xf32>
    %cst_757 = arith.constant 3.200000e+01 : f32
    %904 = vector.broadcast %cst_757 : f32 to vector<8x1xf32>
    %905 = arith.divf %903, %904 : vector<8x1xf32>
    %cst_758 = arith.constant 9.99999974E-6 : f32
    %906 = vector.broadcast %cst_758 : f32 to vector<8x1xf32>
    %907 = arith.addf %905, %906 : vector<8x1xf32>
    %908 = math.rsqrt %907 : vector<8x1xf32>
    %909 = vector.broadcast %908 : vector<8x1xf32> to vector<8x32xf32>
    %910 = arith.mulf %900, %909 : vector<8x32xf32>
    %c1_759 = arith.constant 1 : index
    %c0_760 = arith.constant 0 : index
    %c0_761 = arith.constant 0 : index
    %911 = vector.load %arg19[%c1_759, %c0_760, %c0_761] : memref<2x1x32xf32, #tpu.memory_space<vmem>>, vector<1x1x32xf32>
    %912 = vector.shape_cast %911 : vector<1x1x32xf32> to vector<1x32xf32>
    %913 = vector.broadcast %912 : vector<1x32xf32> to vector<8x32xf32>
    %914 = arith.mulf %910, %913 : vector<8x32xf32>
    %c1_762 = arith.constant 1 : index
    %c0_763 = arith.constant 0 : index
    %c0_764 = arith.constant 0 : index
    %915 = vector.load %arg20[%c1_762, %c0_763, %c0_764] : memref<2x1x32xf32, #tpu.memory_space<vmem>>, vector<1x1x32xf32>
    %916 = vector.shape_cast %915 : vector<1x1x32xf32> to vector<1x32xf32>
    %917 = vector.broadcast %916 : vector<1x32xf32> to vector<8x32xf32>
    %918 = arith.addf %914, %917 : vector<8x32xf32>
    %cst_765 = arith.constant dense<0.000000e+00> : vector<8x128xf32>
    %919 = tpu.matmul %918, %3, %cst_765 {dimension_numbers = #tpu.dot_dimension_numbers<[1], [0], [0], [1], [0, 0, 1, 1], [], []>} : vector<8x32xf32>, vector<32x128xf32>, vector<8x128xf32> -> vector<8x128xf32>
    %920 = vector.broadcast %4 : vector<1x128xf32> to vector<8x128xf32>
    %921 = arith.addf %919, %920 : vector<8x128xf32>
    %c0_766 = arith.constant 0 : index
    %c128 = arith.constant 128 : index
    %922 = vector.load %arg23[%c0_766, %c128] : memref<8x256xf32, #tpu.memory_space<vmem>>, vector<8x128xf32>
    tpu.vector_store %arg23[%c0_766, %c128], %921 {strides = array<i32>} : memref<8x256xf32, #tpu.memory_space<vmem>>, vector<8x128xf32>,
    return
  }
  func.func @transform_0(%arg0: i32) -> (i32, i32) {
    %c0_i32 = arith.constant 0 : i32
    %c0_i32_0 = arith.constant 0 : i32
    %c0_i32_1 = arith.constant 0 : i32
    return %c0_i32, %c0_i32_0 : i32, i32
  }
  func.func @transform_1(%arg0: i32) -> (i32, i32) {
    %c0_i32 = arith.constant 0 : i32
    %c0_i32_0 = arith.constant 0 : i32
    %c0_i32_1 = arith.constant 0 : i32
    return %c0_i32, %c0_i32_0 : i32, i32
  }
  func.func @transform_2(%arg0: i32) -> (i32, i32) {
    %c0_i32 = arith.constant 0 : i32
    %c0_i32_0 = arith.constant 0 : i32
    %c0_i32_1 = arith.constant 0 : i32
    return %c0_i32, %c0_i32_0 : i32, i32
  }
  func.func @transform_3(%arg0: i32) -> (i32, i32) {
    %c0_i32 = arith.constant 0 : i32
    %c0_i32_0 = arith.constant 0 : i32
    %c0_i32_1 = arith.constant 0 : i32
    return %c0_i32, %c0_i32_0 : i32, i32
  }
  func.func @transform_4(%arg0: i32) -> (i32, i32, i32, i32) {
    %c0_i32 = arith.constant 0 : i32
    %c0_i32_0 = arith.constant 0 : i32
    %c0_i32_1 = arith.constant 0 : i32
    %c0_i32_2 = arith.constant 0 : i32
    %c0_i32_3 = arith.constant 0 : i32
    return %c0_i32, %c0_i32_0, %c0_i32_1, %c0_i32_2 : i32, i32, i32, i32
  }
  func.func @transform_5(%arg0: i32) -> (i32, i32, i32, i32) {
    %c0_i32 = arith.constant 0 : i32
    %c0_i32_0 = arith.constant 0 : i32
    %c0_i32_1 = arith.constant 0 : i32
    %c0_i32_2 = arith.constant 0 : i32
    %c0_i32_3 = arith.constant 0 : i32
    return %c0_i32, %c0_i32_0, %c0_i32_1, %c0_i32_2 : i32, i32, i32, i32
  }
  func.func @transform_6(%arg0: i32) -> (i32, i32, i32, i32) {
    %c0_i32 = arith.constant 0 : i32
    %c0_i32_0 = arith.constant 0 : i32
    %c0_i32_1 = arith.constant 0 : i32
    %c0_i32_2 = arith.constant 0 : i32
    %c0_i32_3 = arith.constant 0 : i32
    return %c0_i32, %c0_i32_0, %c0_i32_1, %c0_i32_2 : i32, i32, i32, i32
  }
  func.func @transform_7(%arg0: i32) -> (i32, i32, i32, i32) {
    %c0_i32 = arith.constant 0 : i32
    %c0_i32_0 = arith.constant 0 : i32
    %c0_i32_1 = arith.constant 0 : i32
    %c0_i32_2 = arith.constant 0 : i32
    %c0_i32_3 = arith.constant 0 : i32
    return %c0_i32, %c0_i32_0, %c0_i32_1, %c0_i32_2 : i32, i32, i32, i32
  }
  func.func @transform_8(%arg0: i32) -> (i32, i32, i32, i32) {
    %c0_i32 = arith.constant 0 : i32
    %c0_i32_0 = arith.constant 0 : i32
    %c0_i32_1 = arith.constant 0 : i32
    %c0_i32_2 = arith.constant 0 : i32
    %c0_i32_3 = arith.constant 0 : i32
    return %c0_i32, %c0_i32_0, %c0_i32_1, %c0_i32_2 : i32, i32, i32, i32
  }
  func.func @transform_9(%arg0: i32) -> (i32, i32, i32, i32) {
    %c0_i32 = arith.constant 0 : i32
    %c0_i32_0 = arith.constant 0 : i32
    %c0_i32_1 = arith.constant 0 : i32
    %c0_i32_2 = arith.constant 0 : i32
    %c0_i32_3 = arith.constant 0 : i32
    return %c0_i32, %c0_i32_0, %c0_i32_1, %c0_i32_2 : i32, i32, i32, i32
  }
  func.func @transform_10(%arg0: i32) -> (i32, i32, i32, i32) {
    %c0_i32 = arith.constant 0 : i32
    %c0_i32_0 = arith.constant 0 : i32
    %c0_i32_1 = arith.constant 0 : i32
    %c0_i32_2 = arith.constant 0 : i32
    %c0_i32_3 = arith.constant 0 : i32
    return %c0_i32, %c0_i32_0, %c0_i32_1, %c0_i32_2 : i32, i32, i32, i32
  }
  func.func @transform_11(%arg0: i32) -> (i32, i32, i32) {
    %c0_i32 = arith.constant 0 : i32
    %c0_i32_0 = arith.constant 0 : i32
    %c0_i32_1 = arith.constant 0 : i32
    %c0_i32_2 = arith.constant 0 : i32
    return %c0_i32, %c0_i32_0, %c0_i32_1 : i32, i32, i32
  }
  func.func @transform_12(%arg0: i32) -> (i32, i32, i32) {
    %c0_i32 = arith.constant 0 : i32
    %c0_i32_0 = arith.constant 0 : i32
    %c0_i32_1 = arith.constant 0 : i32
    %c0_i32_2 = arith.constant 0 : i32
    return %c0_i32, %c0_i32_0, %c0_i32_1 : i32, i32, i32
  }
  func.func @transform_13(%arg0: i32) -> (i32, i32, i32) {
    %c0_i32 = arith.constant 0 : i32
    %c0_i32_0 = arith.constant 0 : i32
    %c0_i32_1 = arith.constant 0 : i32
    %c0_i32_2 = arith.constant 0 : i32
    return %c0_i32, %c0_i32_0, %c0_i32_1 : i32, i32, i32
  }
  func.func @transform_14(%arg0: i32) -> (i32, i32, i32) {
    %c0_i32 = arith.constant 0 : i32
    %c0_i32_0 = arith.constant 0 : i32
    %c0_i32_1 = arith.constant 0 : i32
    %c0_i32_2 = arith.constant 0 : i32
    return %c0_i32, %c0_i32_0, %c0_i32_1 : i32, i32, i32
  }
  func.func @transform_15(%arg0: i32) -> (i32, i32, i32) {
    %c0_i32 = arith.constant 0 : i32
    %c0_i32_0 = arith.constant 0 : i32
    %c0_i32_1 = arith.constant 0 : i32
    %c0_i32_2 = arith.constant 0 : i32
    return %c0_i32, %c0_i32_0, %c0_i32_1 : i32, i32, i32
  }
  func.func @transform_16(%arg0: i32) -> (i32, i32, i32) {
    %c0_i32 = arith.constant 0 : i32
    %c0_i32_0 = arith.constant 0 : i32
    %c0_i32_1 = arith.constant 0 : i32
    %c0_i32_2 = arith.constant 0 : i32
    return %c0_i32, %c0_i32_0, %c0_i32_1 : i32, i32, i32
  }
  func.func @transform_17(%arg0: i32) -> (i32, i32, i32) {
    %c0_i32 = arith.constant 0 : i32
    %c0_i32_0 = arith.constant 0 : i32
    %c0_i32_1 = arith.constant 0 : i32
    %c0_i32_2 = arith.constant 0 : i32
    return %c0_i32, %c0_i32_0, %c0_i32_1 : i32, i32, i32
  }
  func.func @transform_18(%arg0: i32) -> (i32, i32, i32) {
    %c0_i32 = arith.constant 0 : i32
    %c0_i32_0 = arith.constant 0 : i32
    %c0_i32_1 = arith.constant 0 : i32
    %c0_i32_2 = arith.constant 0 : i32
    return %c0_i32, %c0_i32_0, %c0_i32_1 : i32, i32, i32
  }
  func.func @transform_19(%arg0: i32) -> (i32, i32, i32) {
    %c0_i32 = arith.constant 0 : i32
    %c0_i32_0 = arith.constant 0 : i32
    %c0_i32_1 = arith.constant 0 : i32
    %c0_i32_2 = arith.constant 0 : i32
    return %c0_i32, %c0_i32_0, %c0_i32_1 : i32, i32, i32
  }
  func.func @transform_20(%arg0: i32) -> (i32, i32) {
    %c0_i32 = arith.constant 0 : i32
    %c0_i32_0 = arith.constant 0 : i32
    %c0_i32_1 = arith.constant 0 : i32
    return %c0_i32, %c0_i32_0 : i32, i32
  }
  func.func @transform_21(%arg0: i32) -> (i32, i32) {
    %c0_i32 = arith.constant 0 : i32
    %c0_i32_0 = arith.constant 0 : i32
    %c0_i32_1 = arith.constant 0 : i32
    return %c0_i32, %c0_i32_0 : i32, i32
  }
  func.func @transform_22(%arg0: i32) -> (i32, i32) {
    %c0_i32 = arith.constant 0 : i32
    %c0_i32_0 = arith.constant 0 : i32
    %c0_i32_1 = arith.constant 0 : i32
    return %c0_i32, %c0_i32_0 : i32, i32
  }
}

</mosaic_0001>

<llo_original>
// kernel: smart_home_transformer.1
$region0: #{smart_home_transformer.1}
  #allocation0 [shape = 'u32[]', space=smem, size = 0x4, offset = 0x4, fixed_abs, tag = 'smem constant byte address 0x4 - core index']
  #allocation1 [shape = 'u32[72,128]{1,0:T(1,128)}', space=vmem, size = 0x9000, scoped, tag = 'internal scratch']
  %s0 = inlined_call_operand.vmem [shape: f32[8,16], index: 0, kind: input, shape index: {}]
  %s1 = inlined_call_operand.vmem [shape: f32[8,32], index: 1, kind: input, shape index: {}]
  %s2 = inlined_call_operand.vmem [shape: f32[1,32], index: 2, kind: input, shape index: {}]
  %s3 = inlined_call_operand.vmem [shape: f32[5000,32], index: 3, kind: input, shape index: {}]
  %s4 = inlined_call_operand.vmem [shape: f32[2,4,32,8], index: 4, kind: input, shape index: {}]
  %s5 = inlined_call_operand.vmem [shape: f32[2,4,32,8], index: 5, kind: input, shape index: {}]
  %s6 = inlined_call_operand.vmem [shape: f32[2,4,32,8], index: 6, kind: input, shape index: {}]
  %s7 = inlined_call_operand.vmem [shape: f32[2,4,1,8], index: 7, kind: input, shape index: {}]
  %s8 = inlined_call_operand.vmem [shape: f32[2,4,1,8], index: 8, kind: input, shape index: {}]
  %s9 = inlined_call_operand.vmem [shape: f32[2,4,1,8], index: 9, kind: input, shape index: {}]
  %s10 = inlined_call_operand.vmem [shape: f32[2,4,8,32], index: 10, kind: input, shape index: {}]
  %s11 = inlined_call_operand.vmem [shape: f32[2,1,32], index: 11, kind: input, shape index: {}]
  %s12 = inlined_call_operand.vmem [shape: f32[2,1,32], index: 12, kind: input, shape index: {}]
  %s13 = inlined_call_operand.vmem [shape: f32[2,1,32], index: 13, kind: input, shape index: {}]
  %s14 = inlined_call_operand.vmem [shape: f32[2,32,64], index: 14, kind: input, shape index: {}]
  %s15 = inlined_call_operand.vmem [shape: f32[2,1,64], index: 15, kind: input, shape index: {}]
  %s16 = inlined_call_operand.vmem [shape: f32[2,64,32], index: 16, kind: input, shape index: {}]
  %s17 = inlined_call_operand.vmem [shape: f32[2,1,32], index: 17, kind: input, shape index: {}]
  %s18 = inlined_call_operand.vmem [shape: f32[2,1,32], index: 18, kind: input, shape index: {}]
  %s19 = inlined_call_operand.vmem [shape: f32[2,1,32], index: 19, kind: input, shape index: {}]
  %s20 = inlined_call_operand.vmem [shape: f32[32,128], index: 20, kind: input, shape index: {}]
  %s21 = inlined_call_operand.vmem [shape: f32[1,128], index: 21, kind: input, shape index: {}]
  %s22 = inlined_call_operand.vmem [shape: f32[8,256], index: 22, kind: output, shape index: {}]
  %s23 = sld [smem:[#allocation0]]
  $region98: #{smart_home_transformer.1} parent=0
    _
  %s25 = ssub.s32 1, %s23
  %s26 = scalar_select 0, %s25, %s23
  // Predicated region
  $region2: #{smart_home_transformer.1} parent=0 // pred_check
    _
  $region3: #{smart_home_transformer.1} parent=0 // pred_check_branch
    %28 = sbr.rel (0) target = $region5
  $region4: #{smart_home_transformer.1} parent=0 // pred_region
    _
  $region5: #{smart_home_transformer.1} parent=0 // pred_fallthru
    _
  // Predicated region
  $region6: #{smart_home_transformer.1} parent=0 // pred_check
    _
  $region7: #{smart_home_transformer.1} parent=0 // pred_check_branch
    %30 = sbr.rel (0) target = $region9
  $region8: #{smart_home_transformer.1} parent=0 // pred_region
    _
  $region9: #{smart_home_transformer.1} parent=0 // pred_fallthru
    _
  // Predicated region
  $region10: #{smart_home_transformer.1} parent=0 // pred_check
    _
  $region11: #{smart_home_transformer.1} parent=0 // pred_check_branch
    %32 = sbr.rel (0) target = $region13
  $region12: #{smart_home_transformer.1} parent=0 // pred_region
    _
  $region13: #{smart_home_transformer.1} parent=0 // pred_fallthru
    _
  // Predicated region
  $region14: #{smart_home_transformer.1} parent=0 // pred_check
    _
  $region15: #{smart_home_transformer.1} parent=0 // pred_check_branch
    %34 = sbr.rel (0) target = $region17
  $region16: #{smart_home_transformer.1} parent=0 // pred_region
    _
  $region17: #{smart_home_transformer.1} parent=0 // pred_fallthru
    _
  // Predicated region
  $region18: #{smart_home_transformer.1} parent=0 // pred_check
    _
  $region19: #{smart_home_transformer.1} parent=0 // pred_check_branch
    %36 = sbr.rel (0) target = $region21
  $region20: #{smart_home_transformer.1} parent=0 // pred_region
    _
  $region21: #{smart_home_transformer.1} parent=0 // pred_fallthru
    _
  // Predicated region
  $region22: #{smart_home_transformer.1} parent=0 // pred_check
    _
  $region23: #{smart_home_transformer.1} parent=0 // pred_check_branch
    %38 = sbr.rel (0) target = $region25
  $region24: #{smart_home_transformer.1} parent=0 // pred_region
    _
  $region25: #{smart_home_transformer.1} parent=0 // pred_fallthru
    _
  // Predicated region
  $region26: #{smart_home_transformer.1} parent=0 // pred_check
    _
  $region27: #{smart_home_transformer.1} parent=0 // pred_check_branch
    %40 = sbr.rel (0) target = $region29
  $region28: #{smart_home_transformer.1} parent=0 // pred_region
    _
  $region29: #{smart_home_transformer.1} parent=0 // pred_fallthru
    _
  // Predicated region
  $region30: #{smart_home_transformer.1} parent=0 // pred_check
    _
  $region31: #{smart_home_transformer.1} parent=0 // pred_check_branch
    %42 = sbr.rel (0) target = $region33
  $region32: #{smart_home_transformer.1} parent=0 // pred_region
    _
  $region33: #{smart_home_transformer.1} parent=0 // pred_fallthru
    _
  // Predicated region
  $region34: #{smart_home_transformer.1} parent=0 // pred_check
    _
  $region35: #{smart_home_transformer.1} parent=0 // pred_check_branch
    %44 = sbr.rel (0) target = $region37
  $region36: #{smart_home_transformer.1} parent=0 // pred_region
    _
  $region37: #{smart_home_transformer.1} parent=0 // pred_fallthru
    _
  // Predicated region
  $region38: #{smart_home_transformer.1} parent=0 // pred_check
    _
  $region39: #{smart_home_transformer.1} parent=0 // pred_check_branch
    %46 = sbr.rel (0) target = $region41
  $region40: #{smart_home_transformer.1} parent=0 // pred_region
    _
  $region41: #{smart_home_transformer.1} parent=0 // pred_fallthru
    _
  // Predicated region
  $region42: #{smart_home_transformer.1} parent=0 // pred_check
    _
  $region43: #{smart_home_transformer.1} parent=0 // pred_check_branch
    %48 = sbr.rel (0) target = $region45
  $region44: #{smart_home_transformer.1} parent=0 // pred_region
    _
  $region45: #{smart_home_transformer.1} parent=0 // pred_fallthru
    _
  // Predicated region
  $region46: #{smart_home_transformer.1} parent=0 // pred_check
    _
  $region47: #{smart_home_transformer.1} parent=0 // pred_check_branch
    %50 = sbr.rel (0) target = $region49
  $region48: #{smart_home_transformer.1} parent=0 // pred_region
    _
  $region49: #{smart_home_transformer.1} parent=0 // pred_fallthru
    _
  // Predicated region
  $region50: #{smart_home_transformer.1} parent=0 // pred_check
    _
  $region51: #{smart_home_transformer.1} parent=0 // pred_check_branch
    %52 = sbr.rel (0) target = $region53
  $region52: #{smart_home_transformer.1} parent=0 // pred_region
    _
  $region53: #{smart_home_transformer.1} parent=0 // pred_fallthru
    _
  // Predicated region
  $region54: #{smart_home_transformer.1} parent=0 // pred_check
    _
  $region55: #{smart_home_transformer.1} parent=0 // pred_check_branch
    %54 = sbr.rel (0) target = $region57
  $region56: #{smart_home_transformer.1} parent=0 // pred_region
    _
  $region57: #{smart_home_transformer.1} parent=0 // pred_fallthru
    _
  // Predicated region
  $region58: #{smart_home_transformer.1} parent=0 // pred_check
    _
  $region59: #{smart_home_transformer.1} parent=0 // pred_check_branch
    %56 = sbr.rel (0) target = $region61
  $region60: #{smart_home_transformer.1} parent=0 // pred_region
    _
  $region61: #{smart_home_transformer.1} parent=0 // pred_fallthru
    _
  // Predicated region
  $region62: #{smart_home_transformer.1} parent=0 // pred_check
    _
  $region63: #{smart_home_transformer.1} parent=0 // pred_check_branch
    %58 = sbr.rel (0) target = $region65
  $region64: #{smart_home_transformer.1} parent=0 // pred_region
    _
  $region65: #{smart_home_transformer.1} parent=0 // pred_fallthru
    _
  // Predicated region
  $region66: #{smart_home_transformer.1} parent=0 // pred_check
    _
  $region67: #{smart_home_transformer.1} parent=0 // pred_check_branch
    %60 = sbr.rel (0) target = $region69
  $region68: #{smart_home_transformer.1} parent=0 // pred_region
    _
  $region69: #{smart_home_transformer.1} parent=0 // pred_fallthru
    _
  // Predicated region
  $region70: #{smart_home_transformer.1} parent=0 // pred_check
    _
  $region71: #{smart_home_transformer.1} parent=0 // pred_check_branch
    %62 = sbr.rel (0) target = $region73
  $region72: #{smart_home_transformer.1} parent=0 // pred_region
    _
  $region73: #{smart_home_transformer.1} parent=0 // pred_fallthru
    _
  // Predicated region
  $region74: #{smart_home_transformer.1} parent=0 // pred_check
    _
  $region75: #{smart_home_transformer.1} parent=0 // pred_check_branch
    %64 = sbr.rel (0) target = $region77
  $region76: #{smart_home_transformer.1} parent=0 // pred_region
    _
  $region77: #{smart_home_transformer.1} parent=0 // pred_fallthru
    _
  // Predicated region
  $region78: #{smart_home_transformer.1} parent=0 // pred_check
    _
  $region79: #{smart_home_transformer.1} parent=0 // pred_check_branch
    %66 = sbr.rel (0) target = $region81
  $region80: #{smart_home_transformer.1} parent=0 // pred_region
    _
  $region81: #{smart_home_transformer.1} parent=0 // pred_fallthru
    _
  // Predicated region
  $region82: #{smart_home_transformer.1} parent=0 // pred_check
    _
  $region83: #{smart_home_transformer.1} parent=0 // pred_check_branch
    %68 = sbr.rel (0) target = $region85
  $region84: #{smart_home_transformer.1} parent=0 // pred_region
    _
  $region85: #{smart_home_transformer.1} parent=0 // pred_fallthru
    _
  // Predicated region
  $region86: #{smart_home_transformer.1} parent=0 // pred_check
    _
  $region87: #{smart_home_transformer.1} parent=0 // pred_check_branch
    %70 = sbr.rel (0) target = $region89
  $region88: #{smart_home_transformer.1} parent=0 // pred_region
    _
  $region89: #{smart_home_transformer.1} parent=0 // pred_fallthru
    _
  %v71 = vld [vmem:[%s3] sm:$0xff]
  %v72 = vld [vmem:[%s1] sm:$0xff]
  %v73 = vld [vmem:[%s2] sm:$0x1]
  %v74 = vld [vmem:[%s20] sm:$0xff]
  %v75 = vld [vmem:[%s20 + $0x8] sm:$0xff]
  %v76 = vld [vmem:[%s20 + $0x10] sm:$0xff]
  %v77 = vld [vmem:[%s20 + $0x18] sm:$0xff]
  %v78 = vld [vmem:[%s21] sm:$0x1]
  %v79 = vld [vmem:[%s0] sm:$0xff]
  %v81 = vperm.slane %v73, 0
  %vm83 = vcmask 64512
  %v85 = vsel %vm83, %v79, 0
  %87 = vmatpush.msra.mxu0 0.0
  %88 = vmatpush.msra.mxu0 0.0
  %89 = vmatpush.msra.mxu0 0.0
  %90 = vmatpush.msra.mxu0 0.0
  %91 = vmatpush.msra.mxu0 0.0
  %92 = vmatpush.msra.mxu0 0.0
  %93 = vmatpush.msra.mxu0 0.0
  %94 = vmatpush.msra.mxu0 0.0
  %95 = vmatpush.msra.mxu0 0.0
  %96 = vmatpush.msra.mxu0 0.0
  %97 = vmatpush.msra.mxu0 0.0
  %98 = vmatpush.msra.mxu0 0.0
  %99 = vmatpush.msra.mxu0 0.0
  %100 = vmatpush.msra.mxu0 0.0
  %101 = vmatpush.msra.mxu0 0.0
  %102 = vmatpush.msra.mxu0 %v72
  %103 = vmatmul.f32.gmra.mxu0 %v85
  %v104 = vpop.f32.mrf.mxu0
  %v105 = vadd.f32 %v81, %v104
  %106 = vdwg.mxu0
  %v107 = vadd.f32 %v105, %v71
  %v108 = vld [vmem:[%s11] sm:$0x1]
  %v110 = vperm.slane %v108, 0
  %v112 = vadd.f32 %v107, %v110
  %v113 = vld [vmem:[%s4] sm:$0xff]
  %v114 = vld [vmem:[%s4 + $0x8] sm:$0xff]
  %v115 = vld [vmem:[%s4 + $0x10] sm:$0xff]
  %v116 = vld [vmem:[%s4 + $0x18] sm:$0xff]
  %v117 = vld [vmem:[%s7] sm:$0x1]
  %v119 = vperm.slane %v117, 0
  %vm121 = vcmask 261120
  %v123 = vsel %vm121, %v107, 0
  %125 = vmatpush.msra.mxu0 0.0
  %126 = vmatpush.msra.mxu0 0.0
  %127 = vmatpush.msra.mxu0 0.0
  %128 = vmatpush.msra.mxu0 0.0
  %129 = vmatpush.msra.mxu0 0.0
  %130 = vmatpush.msra.mxu0 0.0
  %131 = vmatpush.msra.mxu0 0.0
  %132 = vmatpush.msra.mxu0 0.0
  %133 = vmatpush.msra.mxu0 0.0
  %134 = vmatpush.msra.mxu0 0.0
  %135 = vmatpush.msra.mxu0 0.0
  %136 = vmatpush.msra.mxu0 0.0
  %137 = vmatpush.msra.mxu0 %v116
  %138 = vmatpush.msra.mxu0 %v115
  %139 = vmatpush.msra.mxu0 %v114
  %140 = vmatpush.msra.mxu0 %v113
  %141 = vmatmul.f32.gmra.mxu0 %v123
  %v142 = vpop.f32.mrf.mxu0
  %v143 = vadd.f32 %v119, %v142
  %144 = vdwg.mxu0
  %v145 = vld [vmem:[%s5] sm:$0xff]
  %v146 = vld [vmem:[%s5 + $0x8] sm:$0xff]
  %v147 = vld [vmem:[%s5 + $0x10] sm:$0xff]
  %v148 = vld [vmem:[%s5 + $0x18] sm:$0xff]
  %v149 = vld [vmem:[%s8] sm:$0x1]
  %v151 = vperm.slane %v149, 0
  %153 = vmatpush.msra.mxu0 0.0
  %154 = vmatpush.msra.mxu0 0.0
  %155 = vmatpush.msra.mxu0 0.0
  %156 = vmatpush.msra.mxu0 0.0
  %157 = vmatpush.msra.mxu0 0.0
  %158 = vmatpush.msra.mxu0 0.0
  %159 = vmatpush.msra.mxu0 0.0
  %160 = vmatpush.msra.mxu0 0.0
  %161 = vmatpush.msra.mxu0 0.0
  %162 = vmatpush.msra.mxu0 0.0
  %163 = vmatpush.msra.mxu0 0.0
  %164 = vmatpush.msra.mxu0 0.0
  %165 = vmatpush.msra.mxu0 %v148
  %166 = vmatpush.msra.mxu0 %v147
  %167 = vmatpush.msra.mxu0 %v146
  %168 = vmatpush.msra.mxu0 %v145
  %169 = vmatmul.f32.gmra.mxu0 %v123
  %v170 = vpop.f32.mrf.mxu0
  %v171 = vadd.f32 %v151, %v170
  %172 = vdwg.mxu0
  %v173 = vld [vmem:[%s6] sm:$0xff]
  %v174 = vld [vmem:[%s6 + $0x8] sm:$0xff]
  %v175 = vld [vmem:[%s6 + $0x10] sm:$0xff]
  %v176 = vld [vmem:[%s6 + $0x18] sm:$0xff]
  %v177 = vld [vmem:[%s9] sm:$0x1]
  %v179 = vperm.slane %v177, 0
  %181 = vmatpush.msra.mxu0 0.0
  %182 = vmatpush.msra.mxu0 0.0
  %183 = vmatpush.msra.mxu0 0.0
  %184 = vmatpush.msra.mxu0 0.0
  %185 = vmatpush.msra.mxu0 0.0
  %186 = vmatpush.msra.mxu0 0.0
  %187 = vmatpush.msra.mxu0 0.0
  %188 = vmatpush.msra.mxu0 0.0
  %189 = vmatpush.msra.mxu0 0.0
  %190 = vmatpush.msra.mxu0 0.0
  %191 = vmatpush.msra.mxu0 0.0
  %192 = vmatpush.msra.mxu0 0.0
  %193 = vmatpush.msra.mxu0 %v176
  %194 = vmatpush.msra.mxu0 %v175
  %195 = vmatpush.msra.mxu0 %v174
  %196 = vmatpush.msra.mxu0 %v173
  %197 = vmatmul.f32.gmra.mxu0 %v123
  %v198 = vpop.f32.mrf.mxu0
  %v199 = vadd.f32 %v179, %v198
  %200 = vdwg.mxu0
  %v202 = vsel %vm83, %v143, 0
  %v205 = vsel %vm83, %v171, 0
  %207 = vmatpush.xpose.msra.mxu0 0.0
  %208 = vmatpush.xpose.msra.mxu0 0.0
  %209 = vmatpush.xpose.msra.mxu0 0.0
  %210 = vmatpush.xpose.msra.mxu0 0.0
  %211 = vmatpush.xpose.msra.mxu0 0.0
  %212 = vmatpush.xpose.msra.mxu0 0.0
  %213 = vmatpush.xpose.msra.mxu0 0.0
  %214 = vmatpush.xpose.msra.mxu0 0.0
  %215 = vmatpush.xpose.msra.mxu0 0.0
  %216 = vmatpush.xpose.msra.mxu0 0.0
  %217 = vmatpush.xpose.msra.mxu0 0.0
  %218 = vmatpush.xpose.msra.mxu0 0.0
  %219 = vmatpush.xpose.msra.mxu0 0.0
  %220 = vmatpush.xpose.msra.mxu0 0.0
  %221 = vmatpush.xpose.msra.mxu0 0.0
  %222 = vmatpush.xpose.msra.mxu0 %v205
  %223 = vmatmul.f32.gmra.mxu0 %v202
  %v224 = vpop.f32.mrf.mxu0
  %v225 = vadd.f32 0.0, %v224
  %226 = vdwg.mxu0
  %v227 = vmul.f32 %v225, 0.35355338
  %v228 = vsel %vm83, %v227, -inf
  %229 = vmax.xlane.f32.xlu0 %v228
  %v230 = vpop.xlane.xlu0 %229
  %v231 = vsub.f32 %v227, %v230
  %v232 = vmul.f32 %v231, 1.442695
  %v233 = vpow.pop %v232
  %v234 = vsel %vm83, %v233, 0.0
  %235 = vadd.xlane.f32.xlu0 %v234
  %v236 = vpop.xlane.xlu0 %235
  %v237 = vrcp.pop %v236
  %v238 = vmul.f32 %v233, %v237
  %v240 = vsel %vm83, %v238, 0
  %242 = vmatpush.msra.mxu0 0.0
  %243 = vmatpush.msra.mxu0 0.0
  %244 = vmatpush.msra.mxu0 0.0
  %245 = vmatpush.msra.mxu0 0.0
  %246 = vmatpush.msra.mxu0 0.0
  %247 = vmatpush.msra.mxu0 0.0
  %248 = vmatpush.msra.mxu0 0.0
  %249 = vmatpush.msra.mxu0 0.0
  %250 = vmatpush.msra.mxu0 0.0
  %251 = vmatpush.msra.mxu0 0.0
  %252 = vmatpush.msra.mxu0 0.0
  %253 = vmatpush.msra.mxu0 0.0
  %254 = vmatpush.msra.mxu0 0.0
  %255 = vmatpush.msra.mxu0 0.0
  %256 = vmatpush.msra.mxu0 0.0
  %257 = vmatpush.msra.mxu0 %v199
  %258 = vmatmul.f32.gmra.mxu0 %v240
  %v259 = vpop.f32.mrf.mxu0
  %v260 = vadd.f32 0.0, %v259
  %261 = vdwg.mxu0
  %v262 = vld [vmem:[%s10] sm:$0xff]
  %v264 = vsel %vm83, %v260, 0
  %266 = vmatpush.msra.mxu0 0.0
  %267 = vmatpush.msra.mxu0 0.0
  %268 = vmatpush.msra.mxu0 0.0
  %269 = vmatpush.msra.mxu0 0.0
  %270 = vmatpush.msra.mxu0 0.0
  %271 = vmatpush.msra.mxu0 0.0
  %272 = vmatpush.msra.mxu0 0.0
  %273 = vmatpush.msra.mxu0 0.0
  %274 = vmatpush.msra.mxu0 0.0
  %275 = vmatpush.msra.mxu0 0.0
  %276 = vmatpush.msra.mxu0 0.0
  %277 = vmatpush.msra.mxu0 0.0
  %278 = vmatpush.msra.mxu0 0.0
  %279 = vmatpush.msra.mxu0 0.0
  %280 = vmatpush.msra.mxu0 0.0
  %281 = vmatpush.msra.mxu0 %v262
  %282 = vmatmul.f32.gmra.mxu0 %v264
  %v283 = vpop.f32.mrf.mxu0
  %v284 = vadd.f32 0.0, %v283
  %285 = vdwg.mxu0
  %v286 = vadd.f32 %v112, %v284
  %s287 = scalar_lea.vmem %s4, 32
  %v288 = vld [vmem:[%s287] sm:$0xff]
  %v289 = vld [vmem:[%s287 + $0x8] sm:$0xff]
  %v290 = vld [vmem:[%s287 + $0x10] sm:$0xff]
  %v291 = vld [vmem:[%s287 + $0x18] sm:$0xff]
  %s292 = scalar_lea.vmem %s7, 1
  %v293 = vld [vmem:[%s292] sm:$0x1]
  %v295 = vperm.slane %v293, 0
  %297 = vmatpush.msra.mxu0 0.0
  %298 = vmatpush.msra.mxu0 0.0
  %299 = vmatpush.msra.mxu0 0.0
  %300 = vmatpush.msra.mxu0 0.0
  %301 = vmatpush.msra.mxu0 0.0
  %302 = vmatpush.msra.mxu0 0.0
  %303 = vmatpush.msra.mxu0 0.0
  %304 = vmatpush.msra.mxu0 0.0
  %305 = vmatpush.msra.mxu0 0.0
  %306 = vmatpush.msra.mxu0 0.0
  %307 = vmatpush.msra.mxu0 0.0
  %308 = vmatpush.msra.mxu0 0.0
  %309 = vmatpush.msra.mxu0 %v291
  %310 = vmatpush.msra.mxu0 %v290
  %311 = vmatpush.msra.mxu0 %v289
  %312 = vmatpush.msra.mxu0 %v288
  %313 = vmatmul.f32.gmra.mxu0 %v123
  %v314 = vpop.f32.mrf.mxu0
  %v315 = vadd.f32 %v295, %v314
  %316 = vdwg.mxu0
  %s317 = scalar_lea.vmem %s5, 32
  %v318 = vld [vmem:[%s317] sm:$0xff]
  %v319 = vld [vmem:[%s317 + $0x8] sm:$0xff]
  %v320 = vld [vmem:[%s317 + $0x10] sm:$0xff]
  %v321 = vld [vmem:[%s317 + $0x18] sm:$0xff]
  %s322 = scalar_lea.vmem %s8, 1
  %v323 = vld [vmem:[%s322] sm:$0x1]
  %v325 = vperm.slane %v323, 0
  %327 = vmatpush.msra.mxu0 0.0
  %328 = vmatpush.msra.mxu0 0.0
  %329 = vmatpush.msra.mxu0 0.0
  %330 = vmatpush.msra.mxu0 0.0
  %331 = vmatpush.msra.mxu0 0.0
  %332 = vmatpush.msra.mxu0 0.0
  %333 = vmatpush.msra.mxu0 0.0
  %334 = vmatpush.msra.mxu0 0.0
  %335 = vmatpush.msra.mxu0 0.0
  %336 = vmatpush.msra.mxu0 0.0
  %337 = vmatpush.msra.mxu0 0.0
  %338 = vmatpush.msra.mxu0 0.0
  %339 = vmatpush.msra.mxu0 %v321
  %340 = vmatpush.msra.mxu0 %v320
  %341 = vmatpush.msra.mxu0 %v319
  %342 = vmatpush.msra.mxu0 %v318
  %343 = vmatmul.f32.gmra.mxu0 %v123
  %v344 = vpop.f32.mrf.mxu0
  %v345 = vadd.f32 %v325, %v344
  %346 = vdwg.mxu0
  %s347 = scalar_lea.vmem %s6, 32
  %v348 = vld [vmem:[%s347] sm:$0xff]
  %v349 = vld [vmem:[%s347 + $0x8] sm:$0xff]
  %v350 = vld [vmem:[%s347 + $0x10] sm:$0xff]
  %v351 = vld [vmem:[%s347 + $0x18] sm:$0xff]
  %s352 = scalar_lea.vmem %s9, 1
  %v353 = vld [vmem:[%s352] sm:$0x1]
  %v355 = vperm.slane %v353, 0
  %357 = vmatpush.msra.mxu0 0.0
  %358 = vmatpush.msra.mxu0 0.0
  %359 = vmatpush.msra.mxu0 0.0
  %360 = vmatpush.msra.mxu0 0.0
  %361 = vmatpush.msra.mxu0 0.0
  %362 = vmatpush.msra.mxu0 0.0
  %363 = vmatpush.msra.mxu0 0.0
  %364 = vmatpush.msra.mxu0 0.0
  %365 = vmatpush.msra.mxu0 0.0
  %366 = vmatpush.msra.mxu0 0.0
  %367 = vmatpush.msra.mxu0 0.0
  %368 = vmatpush.msra.mxu0 0.0
  %369 = vmatpush.msra.mxu0 %v351
  %370 = vmatpush.msra.mxu0 %v350
  %371 = vmatpush.msra.mxu0 %v349
  %372 = vmatpush.msra.mxu0 %v348
  %373 = vmatmul.f32.gmra.mxu0 %v123
  %v374 = vpop.f32.mrf.mxu0
  %v375 = vadd.f32 %v355, %v374
  %376 = vdwg.mxu0
  %v378 = vsel %vm83, %v315, 0
  %v381 = vsel %vm83, %v345, 0
  %383 = vmatpush.xpose.msra.mxu0 0.0
  %384 = vmatpush.xpose.msra.mxu0 0.0
  %385 = vmatpush.xpose.msra.mxu0 0.0
  %386 = vmatpush.xpose.msra.mxu0 0.0
  %387 = vmatpush.xpose.msra.mxu0 0.0
  %388 = vmatpush.xpose.msra.mxu0 0.0
  %389 = vmatpush.xpose.msra.mxu0 0.0
  %390 = vmatpush.xpose.msra.mxu0 0.0
  %391 = vmatpush.xpose.msra.mxu0 0.0
  %392 = vmatpush.xpose.msra.mxu0 0.0
  %393 = vmatpush.xpose.msra.mxu0 0.0
  %394 = vmatpush.xpose.msra.mxu0 0.0
  %395 = vmatpush.xpose.msra.mxu0 0.0
  %396 = vmatpush.xpose.msra.mxu0 0.0
  %397 = vmatpush.xpose.msra.mxu0 0.0
  %398 = vmatpush.xpose.msra.mxu0 %v381
  %399 = vmatmul.f32.gmra.mxu0 %v378
  %v400 = vpop.f32.mrf.mxu0
  %v401 = vadd.f32 0.0, %v400
  %402 = vdwg.mxu0
  %v403 = vmul.f32 %v401, 0.35355338
  %v404 = vsel %vm83, %v403, -inf
  %405 = vmax.xlane.f32.xlu0 %v404
  %v406 = vpop.xlane.xlu0 %405
  %v407 = vsub.f32 %v403, %v406
  %v408 = vmul.f32 %v407, 1.442695
  %v409 = vpow.pop %v408
  %v410 = vsel %vm83, %v409, 0.0
  %411 = vadd.xlane.f32.xlu0 %v410
  %v412 = vpop.xlane.xlu0 %411
  %v413 = vrcp.pop %v412
  %v414 = vmul.f32 %v409, %v413
  %v416 = vsel %vm83, %v414, 0
  %418 = vmatpush.msra.mxu0 0.0
  %419 = vmatpush.msra.mxu0 0.0
  %420 = vmatpush.msra.mxu0 0.0
  %421 = vmatpush.msra.mxu0 0.0
  %422 = vmatpush.msra.mxu0 0.0
  %423 = vmatpush.msra.mxu0 0.0
  %424 = vmatpush.msra.mxu0 0.0
  %425 = vmatpush.msra.mxu0 0.0
  %426 = vmatpush.msra.mxu0 0.0
  %427 = vmatpush.msra.mxu0 0.0
  %428 = vmatpush.msra.mxu0 0.0
  %429 = vmatpush.msra.mxu0 0.0
  %430 = vmatpush.msra.mxu0 0.0
  %431 = vmatpush.msra.mxu0 0.0
  %432 = vmatpush.msra.mxu0 0.0
  %433 = vmatpush.msra.mxu0 %v375
  %434 = vmatmul.f32.gmra.mxu0 %v416
  %v435 = vpop.f32.mrf.mxu0
  %v436 = vadd.f32 0.0, %v435
  %437 = vdwg.mxu0
  %s438 = scalar_lea.vmem %s10, 8
  %v439 = vld [vmem:[%s438] sm:$0xff]
  %v441 = vsel %vm83, %v436, 0
  %443 = vmatpush.msra.mxu0 0.0
  %444 = vmatpush.msra.mxu0 0.0
  %445 = vmatpush.msra.mxu0 0.0
  %446 = vmatpush.msra.mxu0 0.0
  %447 = vmatpush.msra.mxu0 0.0
  %448 = vmatpush.msra.mxu0 0.0
  %449 = vmatpush.msra.mxu0 0.0
  %450 = vmatpush.msra.mxu0 0.0
  %451 = vmatpush.msra.mxu0 0.0
  %452 = vmatpush.msra.mxu0 0.0
  %453 = vmatpush.msra.mxu0 0.0
  %454 = vmatpush.msra.mxu0 0.0
  %455 = vmatpush.msra.mxu0 0.0
  %456 = vmatpush.msra.mxu0 0.0
  %457 = vmatpush.msra.mxu0 0.0
  %458 = vmatpush.msra.mxu0 %v439
  %459 = vmatmul.f32.gmra.mxu0 %v441
  %v460 = vpop.f32.mrf.mxu0
  %v461 = vadd.f32 0.0, %v460
  %462 = vdwg.mxu0
  %v463 = vadd.f32 %v286, %v461
  %s464 = scalar_lea.vmem %s4, 64
  %v465 = vld [vmem:[%s464] sm:$0xff]
  %v466 = vld [vmem:[%s464 + $0x8] sm:$0xff]
  %v467 = vld [vmem:[%s464 + $0x10] sm:$0xff]
  %v468 = vld [vmem:[%s464 + $0x18] sm:$0xff]
  %s469 = scalar_lea.vmem %s7, 2
  %v470 = vld [vmem:[%s469] sm:$0x1]
  %v472 = vperm.slane %v470, 0
  %474 = vmatpush.msra.mxu0 0.0
  %475 = vmatpush.msra.mxu0 0.0
  %476 = vmatpush.msra.mxu0 0.0
  %477 = vmatpush.msra.mxu0 0.0
  %478 = vmatpush.msra.mxu0 0.0
  %479 = vmatpush.msra.mxu0 0.0
  %480 = vmatpush.msra.mxu0 0.0
  %481 = vmatpush.msra.mxu0 0.0
  %482 = vmatpush.msra.mxu0 0.0
  %483 = vmatpush.msra.mxu0 0.0
  %484 = vmatpush.msra.mxu0 0.0
  %485 = vmatpush.msra.mxu0 0.0
  %486 = vmatpush.msra.mxu0 %v468
  %487 = vmatpush.msra.mxu0 %v467
  %488 = vmatpush.msra.mxu0 %v466
  %489 = vmatpush.msra.mxu0 %v465
  %490 = vmatmul.f32.gmra.mxu0 %v123
  %v491 = vpop.f32.mrf.mxu0
  %v492 = vadd.f32 %v472, %v491
  %493 = vdwg.mxu0
  %s494 = scalar_lea.vmem %s5, 64
  %v495 = vld [vmem:[%s494] sm:$0xff]
  %v496 = vld [vmem:[%s494 + $0x8] sm:$0xff]
  %v497 = vld [vmem:[%s494 + $0x10] sm:$0xff]
  %v498 = vld [vmem:[%s494 + $0x18] sm:$0xff]
  %s499 = scalar_lea.vmem %s8, 2
  %v500 = vld [vmem:[%s499] sm:$0x1]
  %v502 = vperm.slane %v500, 0
  %504 = vmatpush.msra.mxu0 0.0
  %505 = vmatpush.msra.mxu0 0.0
  %506 = vmatpush.msra.mxu0 0.0
  %507 = vmatpush.msra.mxu0 0.0
  %508 = vmatpush.msra.mxu0 0.0
  %509 = vmatpush.msra.mxu0 0.0
  %510 = vmatpush.msra.mxu0 0.0
  %511 = vmatpush.msra.mxu0 0.0
  %512 = vmatpush.msra.mxu0 0.0
  %513 = vmatpush.msra.mxu0 0.0
  %514 = vmatpush.msra.mxu0 0.0
  %515 = vmatpush.msra.mxu0 0.0
  %516 = vmatpush.msra.mxu0 %v498
  %517 = vmatpush.msra.mxu0 %v497
  %518 = vmatpush.msra.mxu0 %v496
  %519 = vmatpush.msra.mxu0 %v495
  %520 = vmatmul.f32.gmra.mxu0 %v123
  %v521 = vpop.f32.mrf.mxu0
  %v522 = vadd.f32 %v502, %v521
  %523 = vdwg.mxu0
  %s524 = scalar_lea.vmem %s6, 64
  %v525 = vld [vmem:[%s524] sm:$0xff]
  %v526 = vld [vmem:[%s524 + $0x8] sm:$0xff]
  %v527 = vld [vmem:[%s524 + $0x10] sm:$0xff]
  %v528 = vld [vmem:[%s524 + $0x18] sm:$0xff]
  %s529 = scalar_lea.vmem %s9, 2
  %v530 = vld [vmem:[%s529] sm:$0x1]
  %v532 = vperm.slane %v530, 0
  %534 = vmatpush.msra.mxu0 0.0
  %535 = vmatpush.msra.mxu0 0.0
  %536 = vmatpush.msra.mxu0 0.0
  %537 = vmatpush.msra.mxu0 0.0
  %538 = vmatpush.msra.mxu0 0.0
  %539 = vmatpush.msra.mxu0 0.0
  %540 = vmatpush.msra.mxu0 0.0
  %541 = vmatpush.msra.mxu0 0.0
  %542 = vmatpush.msra.mxu0 0.0
  %543 = vmatpush.msra.mxu0 0.0
  %544 = vmatpush.msra.mxu0 0.0
  %545 = vmatpush.msra.mxu0 0.0
  %546 = vmatpush.msra.mxu0 %v528
  %547 = vmatpush.msra.mxu0 %v527
  %548 = vmatpush.msra.mxu0 %v526
  %549 = vmatpush.msra.mxu0 %v525
  %550 = vmatmul.f32.gmra.mxu0 %v123
  %v551 = vpop.f32.mrf.mxu0
  %v552 = vadd.f32 %v532, %v551
  %553 = vdwg.mxu0
  %v555 = vsel %vm83, %v492, 0
  %v558 = vsel %vm83, %v522, 0
  %560 = vmatpush.xpose.msra.mxu0 0.0
  %561 = vmatpush.xpose.msra.mxu0 0.0
  %562 = vmatpush.xpose.msra.mxu0 0.0
  %563 = vmatpush.xpose.msra.mxu0 0.0
  %564 = vmatpush.xpose.msra.mxu0 0.0
  %565 = vmatpush.xpose.msra.mxu0 0.0
  %566 = vmatpush.xpose.msra.mxu0 0.0
  %567 = vmatpush.xpose.msra.mxu0 0.0
  %568 = vmatpush.xpose.msra.mxu0 0.0
  %569 = vmatpush.xpose.msra.mxu0 0.0
  %570 = vmatpush.xpose.msra.mxu0 0.0
  %571 = vmatpush.xpose.msra.mxu0 0.0
  %572 = vmatpush.xpose.msra.mxu0 0.0
  %573 = vmatpush.xpose.msra.mxu0 0.0
  %574 = vmatpush.xpose.msra.mxu0 0.0
  %575 = vmatpush.xpose.msra.mxu0 %v558
  %576 = vmatmul.f32.gmra.mxu0 %v555
  %v577 = vpop.f32.mrf.mxu0
  %v578 = vadd.f32 0.0, %v577
  %579 = vdwg.mxu0
  %v580 = vmul.f32 %v578, 0.35355338
  %v581 = vsel %vm83, %v580, -inf
  %582 = vmax.xlane.f32.xlu0 %v581
  %v583 = vpop.xlane.xlu0 %582
  %v584 = vsub.f32 %v580, %v583
  %v585 = vmul.f32 %v584, 1.442695
  %v586 = vpow.pop %v585
  %v587 = vsel %vm83, %v586, 0.0
  %588 = vadd.xlane.f32.xlu0 %v587
  %v589 = vpop.xlane.xlu0 %588
  %v590 = vrcp.pop %v589
  %v591 = vmul.f32 %v586, %v590
  %v593 = vsel %vm83, %v591, 0
  %595 = vmatpush.msra.mxu0 0.0
  %596 = vmatpush.msra.mxu0 0.0
  %597 = vmatpush.msra.mxu0 0.0
  %598 = vmatpush.msra.mxu0 0.0
  %599 = vmatpush.msra.mxu0 0.0
  %600 = vmatpush.msra.mxu0 0.0
  %601 = vmatpush.msra.mxu0 0.0
  %602 = vmatpush.msra.mxu0 0.0
  %603 = vmatpush.msra.mxu0 0.0
  %604 = vmatpush.msra.mxu0 0.0
  %605 = vmatpush.msra.mxu0 0.0
  %606 = vmatpush.msra.mxu0 0.0
  %607 = vmatpush.msra.mxu0 0.0
  %608 = vmatpush.msra.mxu0 0.0
  %609 = vmatpush.msra.mxu0 0.0
  %610 = vmatpush.msra.mxu0 %v552
  %611 = vmatmul.f32.gmra.mxu0 %v593
  %v612 = vpop.f32.mrf.mxu0
  %v613 = vadd.f32 0.0, %v612
  %614 = vdwg.mxu0
  %s615 = scalar_lea.vmem %s10, 16
  %v616 = vld [vmem:[%s615] sm:$0xff]
  %v618 = vsel %vm83, %v613, 0
  %620 = vmatpush.msra.mxu0 0.0
  %621 = vmatpush.msra.mxu0 0.0
  %622 = vmatpush.msra.mxu0 0.0
  %623 = vmatpush.msra.mxu0 0.0
  %624 = vmatpush.msra.mxu0 0.0
  %625 = vmatpush.msra.mxu0 0.0
  %626 = vmatpush.msra.mxu0 0.0
  %627 = vmatpush.msra.mxu0 0.0
  %628 = vmatpush.msra.mxu0 0.0
  %629 = vmatpush.msra.mxu0 0.0
  %630 = vmatpush.msra.mxu0 0.0
  %631 = vmatpush.msra.mxu0 0.0
  %632 = vmatpush.msra.mxu0 0.0
  %633 = vmatpush.msra.mxu0 0.0
  %634 = vmatpush.msra.mxu0 0.0
  %635 = vmatpush.msra.mxu0 %v616
  %636 = vmatmul.f32.gmra.mxu0 %v618
  %v637 = vpop.f32.mrf.mxu0
  %v638 = vadd.f32 0.0, %v637
  %639 = vdwg.mxu0
  %v640 = vadd.f32 %v463, %v638
  %s641 = scalar_lea.vmem %s4, 96
  %v642 = vld [vmem:[%s641] sm:$0xff]
  %v643 = vld [vmem:[%s641 + $0x8] sm:$0xff]
  %v644 = vld [vmem:[%s641 + $0x10] sm:$0xff]
  %v645 = vld [vmem:[%s641 + $0x18] sm:$0xff]
  %s646 = scalar_lea.vmem %s7, 3
  %v647 = vld [vmem:[%s646] sm:$0x1]
  %v649 = vperm.slane %v647, 0
  %651 = vmatpush.msra.mxu0 0.0
  %652 = vmatpush.msra.mxu0 0.0
  %653 = vmatpush.msra.mxu0 0.0
  %654 = vmatpush.msra.mxu0 0.0
  %655 = vmatpush.msra.mxu0 0.0
  %656 = vmatpush.msra.mxu0 0.0
  %657 = vmatpush.msra.mxu0 0.0
  %658 = vmatpush.msra.mxu0 0.0
  %659 = vmatpush.msra.mxu0 0.0
  %660 = vmatpush.msra.mxu0 0.0
  %661 = vmatpush.msra.mxu0 0.0
  %662 = vmatpush.msra.mxu0 0.0
  %663 = vmatpush.msra.mxu0 %v645
  %664 = vmatpush.msra.mxu0 %v644
  %665 = vmatpush.msra.mxu0 %v643
  %666 = vmatpush.msra.mxu0 %v642
  %667 = vmatmul.f32.gmra.mxu0 %v123
  %v668 = vpop.f32.mrf.mxu0
  %v669 = vadd.f32 %v649, %v668
  %670 = vdwg.mxu0
  %s671 = scalar_lea.vmem %s5, 96
  %v672 = vld [vmem:[%s671] sm:$0xff]
  %v673 = vld [vmem:[%s671 + $0x8] sm:$0xff]
  %v674 = vld [vmem:[%s671 + $0x10] sm:$0xff]
  %v675 = vld [vmem:[%s671 + $0x18] sm:$0xff]
  %s676 = scalar_lea.vmem %s8, 3
  %v677 = vld [vmem:[%s676] sm:$0x1]
  %v679 = vperm.slane %v677, 0
  %681 = vmatpush.msra.mxu0 0.0
  %682 = vmatpush.msra.mxu0 0.0
  %683 = vmatpush.msra.mxu0 0.0
  %684 = vmatpush.msra.mxu0 0.0
  %685 = vmatpush.msra.mxu0 0.0
  %686 = vmatpush.msra.mxu0 0.0
  %687 = vmatpush.msra.mxu0 0.0
  %688 = vmatpush.msra.mxu0 0.0
  %689 = vmatpush.msra.mxu0 0.0
  %690 = vmatpush.msra.mxu0 0.0
  %691 = vmatpush.msra.mxu0 0.0
  %692 = vmatpush.msra.mxu0 0.0
  %693 = vmatpush.msra.mxu0 %v675
  %694 = vmatpush.msra.mxu0 %v674
  %695 = vmatpush.msra.mxu0 %v673
  %696 = vmatpush.msra.mxu0 %v672
  %697 = vmatmul.f32.gmra.mxu0 %v123
  %v698 = vpop.f32.mrf.mxu0
  %v699 = vadd.f32 %v679, %v698
  %700 = vdwg.mxu0
  %s701 = scalar_lea.vmem %s6, 96
  %v702 = vld [vmem:[%s701] sm:$0xff]
  %v703 = vld [vmem:[%s701 + $0x8] sm:$0xff]
  %v704 = vld [vmem:[%s701 + $0x10] sm:$0xff]
  %v705 = vld [vmem:[%s701 + $0x18] sm:$0xff]
  %s706 = scalar_lea.vmem %s9, 3
  %v707 = vld [vmem:[%s706] sm:$0x1]
  %v709 = vperm.slane %v707, 0
  %711 = vmatpush.msra.mxu0 0.0
  %712 = vmatpush.msra.mxu0 0.0
  %713 = vmatpush.msra.mxu0 0.0
  %714 = vmatpush.msra.mxu0 0.0
  %715 = vmatpush.msra.mxu0 0.0
  %716 = vmatpush.msra.mxu0 0.0
  %717 = vmatpush.msra.mxu0 0.0
  %718 = vmatpush.msra.mxu0 0.0
  %719 = vmatpush.msra.mxu0 0.0
  %720 = vmatpush.msra.mxu0 0.0
  %721 = vmatpush.msra.mxu0 0.0
  %722 = vmatpush.msra.mxu0 0.0
  %723 = vmatpush.msra.mxu0 %v705
  %724 = vmatpush.msra.mxu0 %v704
  %725 = vmatpush.msra.mxu0 %v703
  %726 = vmatpush.msra.mxu0 %v702
  %727 = vmatmul.f32.gmra.mxu0 %v123
  %v728 = vpop.f32.mrf.mxu0
  %v729 = vadd.f32 %v709, %v728
  %730 = vdwg.mxu0
  %v732 = vsel %vm83, %v669, 0
  %v735 = vsel %vm83, %v699, 0
  %737 = vmatpush.xpose.msra.mxu0 0.0
  %738 = vmatpush.xpose.msra.mxu0 0.0
  %739 = vmatpush.xpose.msra.mxu0 0.0
  %740 = vmatpush.xpose.msra.mxu0 0.0
  %741 = vmatpush.xpose.msra.mxu0 0.0
  %742 = vmatpush.xpose.msra.mxu0 0.0
  %743 = vmatpush.xpose.msra.mxu0 0.0
  %744 = vmatpush.xpose.msra.mxu0 0.0
  %745 = vmatpush.xpose.msra.mxu0 0.0
  %746 = vmatpush.xpose.msra.mxu0 0.0
  %747 = vmatpush.xpose.msra.mxu0 0.0
  %748 = vmatpush.xpose.msra.mxu0 0.0
  %749 = vmatpush.xpose.msra.mxu0 0.0
  %750 = vmatpush.xpose.msra.mxu0 0.0
  %751 = vmatpush.xpose.msra.mxu0 0.0
  %752 = vmatpush.xpose.msra.mxu0 %v735
  %753 = vmatmul.f32.gmra.mxu0 %v732
  %v754 = vpop.f32.mrf.mxu0
  %v755 = vadd.f32 0.0, %v754
  %756 = vdwg.mxu0
  %v757 = vmul.f32 %v755, 0.35355338
  %v758 = vsel %vm83, %v757, -inf
  %759 = vmax.xlane.f32.xlu0 %v758
  %v760 = vpop.xlane.xlu0 %759
  %v761 = vsub.f32 %v757, %v760
  %v762 = vmul.f32 %v761, 1.442695
  %v763 = vpow.pop %v762
  %v764 = vsel %vm83, %v763, 0.0
  %765 = vadd.xlane.f32.xlu0 %v764
  %v766 = vpop.xlane.xlu0 %765
  %v767 = vrcp.pop %v766
  %v768 = vmul.f32 %v763, %v767
  %v770 = vsel %vm83, %v768, 0
  %772 = vmatpush.msra.mxu0 0.0
  %773 = vmatpush.msra.mxu0 0.0
  %774 = vmatpush.msra.mxu0 0.0
  %775 = vmatpush.msra.mxu0 0.0
  %776 = vmatpush.msra.mxu0 0.0
  %777 = vmatpush.msra.mxu0 0.0
  %778 = vmatpush.msra.mxu0 0.0
  %779 = vmatpush.msra.mxu0 0.0
  %780 = vmatpush.msra.mxu0 0.0
  %781 = vmatpush.msra.mxu0 0.0
  %782 = vmatpush.msra.mxu0 0.0
  %783 = vmatpush.msra.mxu0 0.0
  %784 = vmatpush.msra.mxu0 0.0
  %785 = vmatpush.msra.mxu0 0.0
  %786 = vmatpush.msra.mxu0 0.0
  %787 = vmatpush.msra.mxu0 %v729
  %788 = vmatmul.f32.gmra.mxu0 %v770
  %v789 = vpop.f32.mrf.mxu0
  %v790 = vadd.f32 0.0, %v789
  %791 = vdwg.mxu0
  %s792 = scalar_lea.vmem %s10, 24
  %v793 = vld [vmem:[%s792] sm:$0xff]
  %v795 = vsel %vm83, %v790, 0
  %797 = vmatpush.msra.mxu0 0.0
  %798 = vmatpush.msra.mxu0 0.0
  %799 = vmatpush.msra.mxu0 0.0
  %800 = vmatpush.msra.mxu0 0.0
  %801 = vmatpush.msra.mxu0 0.0
  %802 = vmatpush.msra.mxu0 0.0
  %803 = vmatpush.msra.mxu0 0.0
  %804 = vmatpush.msra.mxu0 0.0
  %805 = vmatpush.msra.mxu0 0.0
  %806 = vmatpush.msra.mxu0 0.0
  %807 = vmatpush.msra.mxu0 0.0
  %808 = vmatpush.msra.mxu0 0.0
  %809 = vmatpush.msra.mxu0 0.0
  %810 = vmatpush.msra.mxu0 0.0
  %811 = vmatpush.msra.mxu0 0.0
  %812 = vmatpush.msra.mxu0 %v793
  %813 = vmatmul.f32.gmra.mxu0 %v795
  %v814 = vpop.f32.mrf.mxu0
  %v815 = vadd.f32 0.0, %v814
  %816 = vdwg.mxu0
  %v817 = vadd.f32 %v640, %v815
  %v818 = vsel %vm121, %v817, 0.0
  %819 = vadd.xlane.f32.xlu0 %v818
  %v820 = vpop.xlane.xlu0 %819
  %v821 = vrcp.pop 32.0
  %v822 = vmul.f32 32.0, %v821
  %v823 = vsub.f32 1.0, %v822
  %v824 = vmul.f32 %v821, %v823
  %v825 = vadd.f32 %v821, %v824
  %vm826 = vweird.f32 %v821
  %v827 = vsel %vm826, %v821, %v825
  %v828 = vmul.f32 %v820, %v827
  %v829 = vsub.f32 %v817, %v828
  %v830 = vmul.f32 %v829, %v829
  %v831 = vsel %vm121, %v830, 0.0
  %832 = vadd.xlane.f32.xlu0 %v831
  %v833 = vpop.xlane.xlu0 %832
  %v834 = vmul.f32 %v833, %v827
  %v835 = vadd.f32 %v834, 1e-05
  %v836 = vrsqrt.pop %v835
  %v837 = vmul.f32 %v836, %v835
  %v838 = vmul.f32 %v837, %v836
  %v839 = vmul.f32 0.5, %v838
  %v840 = vsub.f32 1.5, %v839
  %v841 = vmul.f32 %v836, %v840
  %vm842 = vweird.f32 %v835
  %vm843 = vweird.f32 %v836
  %vm844 = vmor %vm842, %vm843
  %v845 = vsel %vm844, %v836, %v841
  %v846 = vmul.f32 %v829, %v845
  %v847 = vld [vmem:[%s12] sm:$0x1]
  %v849 = vperm.slane %v847, 0
  %v851 = vmul.f32 %v846, %v849
  %v852 = vld [vmem:[%s13] sm:$0x1]
  %v854 = vperm.slane %v852, 0
  %v856 = vadd.f32 %v851, %v854
  %v857 = vld [vmem:[%s14] sm:$0xff]
  %v858 = vld [vmem:[%s14 + $0x8] sm:$0xff]
  %v859 = vld [vmem:[%s14 + $0x10] sm:$0xff]
  %v860 = vld [vmem:[%s14 + $0x18] sm:$0xff]
  %v861 = vld [vmem:[%s15] sm:$0x1]
  %v863 = vperm.slane %v861, 0
  %v866 = vsel %vm121, %v856, 0
  %868 = vmatpush.msra.mxu0 0.0
  %869 = vmatpush.msra.mxu0 0.0
  %870 = vmatpush.msra.mxu0 0.0
  %871 = vmatpush.msra.mxu0 0.0
  %872 = vmatpush.msra.mxu0 0.0
  %873 = vmatpush.msra.mxu0 0.0
  %874 = vmatpush.msra.mxu0 0.0
  %875 = vmatpush.msra.mxu0 0.0
  %876 = vmatpush.msra.mxu0 0.0
  %877 = vmatpush.msra.mxu0 0.0
  %878 = vmatpush.msra.mxu0 0.0
  %879 = vmatpush.msra.mxu0 0.0
  %880 = vmatpush.msra.mxu0 %v860
  %881 = vmatpush.msra.mxu0 %v859
  %882 = vmatpush.msra.mxu0 %v858
  %883 = vmatpush.msra.mxu0 %v857
  %884 = vmatmul.f32.gmra.mxu0 %v866
  %v885 = vpop.f32.mrf.mxu0
  %v886 = vadd.f32 %v863, %v885
  %887 = vdwg.mxu0
  %v888 = vmax.f32 %v886, 0.0
  %v889 = vld [vmem:[%s16] sm:$0xff]
  %v890 = vld [vmem:[%s16 + $0x8] sm:$0xff]
  %v891 = vld [vmem:[%s16 + $0x10] sm:$0xff]
  %v892 = vld [vmem:[%s16 + $0x18] sm:$0xff]
  %v893 = vld [vmem:[%s16 + $0x20] sm:$0xff]
  %v894 = vld [vmem:[%s16 + $0x28] sm:$0xff]
  %v895 = vld [vmem:[%s16 + $0x30] sm:$0xff]
  %v896 = vld [vmem:[%s16 + $0x38] sm:$0xff]
  %vm897 = vcmask 523264
  %v899 = vsel %vm897, %v888, 0
  %901 = vmatpush.msra.mxu0 0.0
  %902 = vmatpush.msra.mxu0 0.0
  %903 = vmatpush.msra.mxu0 0.0
  %904 = vmatpush.msra.mxu0 0.0
  %905 = vmatpush.msra.mxu0 0.0
  %906 = vmatpush.msra.mxu0 0.0
  %907 = vmatpush.msra.mxu0 0.0
  %908 = vmatpush.msra.mxu0 0.0
  %909 = vmatpush.msra.mxu0 %v896
  %910 = vmatpush.msra.mxu0 %v895
  %911 = vmatpush.msra.mxu0 %v894
  %912 = vmatpush.msra.mxu0 %v893
  %913 = vmatpush.msra.mxu0 %v892
  %914 = vmatpush.msra.mxu0 %v891
  %915 = vmatpush.msra.mxu0 %v890
  %916 = vmatpush.msra.mxu0 %v889
  %917 = vmatmul.f32.gmra.mxu0 %v899
  %v918 = vpop.f32.mrf.mxu0
  %v919 = vadd.f32 0.0, %v918
  %920 = vdwg.mxu0
  %v921 = vadd.f32 %v856, %v919
  %v922 = vld [vmem:[%s17] sm:$0x1]
  %v924 = vperm.slane %v922, 0
  %v926 = vadd.f32 %v921, %v924
  %v927 = vsel %vm121, %v926, 0.0
  %928 = vadd.xlane.f32.xlu0 %v927
  %v929 = vpop.xlane.xlu0 %928
  %v930 = vmul.f32 %v929, %v827
  %v931 = vsub.f32 %v926, %v930
  %v932 = vmul.f32 %v931, %v931
  %v933 = vsel %vm121, %v932, 0.0
  %934 = vadd.xlane.f32.xlu0 %v933
  %v935 = vpop.xlane.xlu0 %934
  %v936 = vmul.f32 %v935, %v827
  %v937 = vadd.f32 %v936, 1e-05
  %v938 = vrsqrt.pop %v937
  %v939 = vmul.f32 %v938, %v937
  %v940 = vmul.f32 %v939, %v938
  %v941 = vmul.f32 0.5, %v940
  %v942 = vsub.f32 1.5, %v941
  %v943 = vmul.f32 %v938, %v942
  %vm944 = vweird.f32 %v937
  %vm945 = vweird.f32 %v938
  %vm946 = vmor %vm944, %vm945
  %v947 = vsel %vm946, %v938, %v943
  %v948 = vmul.f32 %v931, %v947
  %v949 = vld [vmem:[%s18] sm:$0x1]
  %v951 = vperm.slane %v949, 0
  %v953 = vmul.f32 %v948, %v951
  %v954 = vld [vmem:[%s19] sm:$0x1]
  %v956 = vperm.slane %v954, 0
  %v958 = vadd.f32 %v953, %v956
  %s959 = scalar_lea.vmem %s11, 1
  %v960 = vld [vmem:[%s959] sm:$0x1]
  %v962 = vperm.slane %v960, 0
  %v964 = vadd.f32 %v958, %v962
  %s965 = scalar_lea.vmem %s4, 128
  %v966 = vld [vmem:[%s965] sm:$0xff]
  %v967 = vld [vmem:[%s965 + $0x8] sm:$0xff]
  %v968 = vld [vmem:[%s965 + $0x10] sm:$0xff]
  %v969 = vld [vmem:[%s965 + $0x18] sm:$0xff]
  %s970 = scalar_lea.vmem %s7, 4
  %v971 = vld [vmem:[%s970] sm:$0x1]
  %v973 = vperm.slane %v971, 0
  %v976 = vsel %vm121, %v958, 0
  %978 = vmatpush.msra.mxu0 0.0
  %979 = vmatpush.msra.mxu0 0.0
  %980 = vmatpush.msra.mxu0 0.0
  %981 = vmatpush.msra.mxu0 0.0
  %982 = vmatpush.msra.mxu0 0.0
  %983 = vmatpush.msra.mxu0 0.0
  %984 = vmatpush.msra.mxu0 0.0
  %985 = vmatpush.msra.mxu0 0.0
  %986 = vmatpush.msra.mxu0 0.0
  %987 = vmatpush.msra.mxu0 0.0
  %988 = vmatpush.msra.mxu0 0.0
  %989 = vmatpush.msra.mxu0 0.0
  %990 = vmatpush.msra.mxu0 %v969
  %991 = vmatpush.msra.mxu0 %v968
  %992 = vmatpush.msra.mxu0 %v967
  %993 = vmatpush.msra.mxu0 %v966
  %994 = vmatmul.f32.gmra.mxu0 %v976
  %v995 = vpop.f32.mrf.mxu0
  %v996 = vadd.f32 %v973, %v995
  %997 = vdwg.mxu0
  %s998 = scalar_lea.vmem %s5, 128
  %v999 = vld [vmem:[%s998] sm:$0xff]
  %v1000 = vld [vmem:[%s998 + $0x8] sm:$0xff]
  %v1001 = vld [vmem:[%s998 + $0x10] sm:$0xff]
  %v1002 = vld [vmem:[%s998 + $0x18] sm:$0xff]
  %s1003 = scalar_lea.vmem %s8, 4
  %v1004 = vld [vmem:[%s1003] sm:$0x1]
  %v1006 = vperm.slane %v1004, 0
  %1008 = vmatpush.msra.mxu0 0.0
  %1009 = vmatpush.msra.mxu0 0.0
  %1010 = vmatpush.msra.mxu0 0.0
  %1011 = vmatpush.msra.mxu0 0.0
  %1012 = vmatpush.msra.mxu0 0.0
  %1013 = vmatpush.msra.mxu0 0.0
  %1014 = vmatpush.msra.mxu0 0.0
  %1015 = vmatpush.msra.mxu0 0.0
  %1016 = vmatpush.msra.mxu0 0.0
  %1017 = vmatpush.msra.mxu0 0.0
  %1018 = vmatpush.msra.mxu0 0.0
  %1019 = vmatpush.msra.mxu0 0.0
  %1020 = vmatpush.msra.mxu0 %v1002
  %1021 = vmatpush.msra.mxu0 %v1001
  %1022 = vmatpush.msra.mxu0 %v1000
  %1023 = vmatpush.msra.mxu0 %v999
  %1024 = vmatmul.f32.gmra.mxu0 %v976
  %v1025 = vpop.f32.mrf.mxu0
  %v1026 = vadd.f32 %v1006, %v1025
  %1027 = vdwg.mxu0
  %s1028 = scalar_lea.vmem %s6, 128
  %v1029 = vld [vmem:[%s1028] sm:$0xff]
  %v1030 = vld [vmem:[%s1028 + $0x8] sm:$0xff]
  %v1031 = vld [vmem:[%s1028 + $0x10] sm:$0xff]
  %v1032 = vld [vmem:[%s1028 + $0x18] sm:$0xff]
  %s1033 = scalar_lea.vmem %s9, 4
  %v1034 = vld [vmem:[%s1033] sm:$0x1]
  %v1036 = vperm.slane %v1034, 0
  %1038 = vmatpush.msra.mxu0 0.0
  %1039 = vmatpush.msra.mxu0 0.0
  %1040 = vmatpush.msra.mxu0 0.0
  %1041 = vmatpush.msra.mxu0 0.0
  %1042 = vmatpush.msra.mxu0 0.0
  %1043 = vmatpush.msra.mxu0 0.0
  %1044 = vmatpush.msra.mxu0 0.0
  %1045 = vmatpush.msra.mxu0 0.0
  %1046 = vmatpush.msra.mxu0 0.0
  %1047 = vmatpush.msra.mxu0 0.0
  %1048 = vmatpush.msra.mxu0 0.0
  %1049 = vmatpush.msra.mxu0 0.0
  %1050 = vmatpush.msra.mxu0 %v1032
  %1051 = vmatpush.msra.mxu0 %v1031
  %1052 = vmatpush.msra.mxu0 %v1030
  %1053 = vmatpush.msra.mxu0 %v1029
  %1054 = vmatmul.f32.gmra.mxu0 %v976
  %v1055 = vpop.f32.mrf.mxu0
  %v1056 = vadd.f32 %v1036, %v1055
  %1057 = vdwg.mxu0
  %v1059 = vsel %vm83, %v996, 0
  %v1062 = vsel %vm83, %v1026, 0
  %1064 = vmatpush.xpose.msra.mxu0 0.0
  %1065 = vmatpush.xpose.msra.mxu0 0.0
  %1066 = vmatpush.xpose.msra.mxu0 0.0
  %1067 = vmatpush.xpose.msra.mxu0 0.0
  %1068 = vmatpush.xpose.msra.mxu0 0.0
  %1069 = vmatpush.xpose.msra.mxu0 0.0
  %1070 = vmatpush.xpose.msra.mxu0 0.0
  %1071 = vmatpush.xpose.msra.mxu0 0.0
  %1072 = vmatpush.xpose.msra.mxu0 0.0
  %1073 = vmatpush.xpose.msra.mxu0 0.0
  %1074 = vmatpush.xpose.msra.mxu0 0.0
  %1075 = vmatpush.xpose.msra.mxu0 0.0
  %1076 = vmatpush.xpose.msra.mxu0 0.0
  %1077 = vmatpush.xpose.msra.mxu0 0.0
  %1078 = vmatpush.xpose.msra.mxu0 0.0
  %1079 = vmatpush.xpose.msra.mxu0 %v1062
  %1080 = vmatmul.f32.gmra.mxu0 %v1059
  %v1081 = vpop.f32.mrf.mxu0
  %v1082 = vadd.f32 0.0, %v1081
  %1083 = vdwg.mxu0
  %v1084 = vmul.f32 %v1082, 0.35355338
  %v1085 = vsel %vm83, %v1084, -inf
  %1086 = vmax.xlane.f32.xlu0 %v1085
  %v1087 = vpop.xlane.xlu0 %1086
  %v1088 = vsub.f32 %v1084, %v1087
  %v1089 = vmul.f32 %v1088, 1.442695
  %v1090 = vpow.pop %v1089
  %v1091 = vsel %vm83, %v1090, 0.0
  %1092 = vadd.xlane.f32.xlu0 %v1091
  %v1093 = vpop.xlane.xlu0 %1092
  %v1094 = vrcp.pop %v1093
  %v1095 = vmul.f32 %v1090, %v1094
  %v1097 = vsel %vm83, %v1095, 0
  %1099 = vmatpush.msra.mxu0 0.0
  %1100 = vmatpush.msra.mxu0 0.0
  %1101 = vmatpush.msra.mxu0 0.0
  %1102 = vmatpush.msra.mxu0 0.0
  %1103 = vmatpush.msra.mxu0 0.0
  %1104 = vmatpush.msra.mxu0 0.0
  %1105 = vmatpush.msra.mxu0 0.0
  %1106 = vmatpush.msra.mxu0 0.0
  %1107 = vmatpush.msra.mxu0 0.0
  %1108 = vmatpush.msra.mxu0 0.0
  %1109 = vmatpush.msra.mxu0 0.0
  %1110 = vmatpush.msra.mxu0 0.0
  %1111 = vmatpush.msra.mxu0 0.0
  %1112 = vmatpush.msra.mxu0 0.0
  %1113 = vmatpush.msra.mxu0 0.0
  %1114 = vmatpush.msra.mxu0 %v1056
  %1115 = vmatmul.f32.gmra.mxu0 %v1097
  %v1116 = vpop.f32.mrf.mxu0
  %v1117 = vadd.f32 0.0, %v1116
  %1118 = vdwg.mxu0
  %s1119 = scalar_lea.vmem %s10, 32
  %v1120 = vld [vmem:[%s1119] sm:$0xff]
  %v1122 = vsel %vm83, %v1117, 0
  %1124 = vmatpush.msra.mxu0 0.0
  %1125 = vmatpush.msra.mxu0 0.0
  %1126 = vmatpush.msra.mxu0 0.0
  %1127 = vmatpush.msra.mxu0 0.0
  %1128 = vmatpush.msra.mxu0 0.0
  %1129 = vmatpush.msra.mxu0 0.0
  %1130 = vmatpush.msra.mxu0 0.0
  %1131 = vmatpush.msra.mxu0 0.0
  %1132 = vmatpush.msra.mxu0 0.0
  %1133 = vmatpush.msra.mxu0 0.0
  %1134 = vmatpush.msra.mxu0 0.0
  %1135 = vmatpush.msra.mxu0 0.0
  %1136 = vmatpush.msra.mxu0 0.0
  %1137 = vmatpush.msra.mxu0 0.0
  %1138 = vmatpush.msra.mxu0 0.0
  %1139 = vmatpush.msra.mxu0 %v1120
  %1140 = vmatmul.f32.gmra.mxu0 %v1122
  %v1141 = vpop.f32.mrf.mxu0
  %v1142 = vadd.f32 0.0, %v1141
  %1143 = vdwg.mxu0
  %v1144 = vadd.f32 %v964, %v1142
  %s1145 = scalar_lea.vmem %s4, 160
  %v1146 = vld [vmem:[%s1145] sm:$0xff]
  %v1147 = vld [vmem:[%s1145 + $0x8] sm:$0xff]
  %v1148 = vld [vmem:[%s1145 + $0x10] sm:$0xff]
  %v1149 = vld [vmem:[%s1145 + $0x18] sm:$0xff]
  %s1150 = scalar_lea.vmem %s7, 5
  %v1151 = vld [vmem:[%s1150] sm:$0x1]
  %v1153 = vperm.slane %v1151, 0
  %1155 = vmatpush.msra.mxu0 0.0
  %1156 = vmatpush.msra.mxu0 0.0
  %1157 = vmatpush.msra.mxu0 0.0
  %1158 = vmatpush.msra.mxu0 0.0
  %1159 = vmatpush.msra.mxu0 0.0
  %1160 = vmatpush.msra.mxu0 0.0
  %1161 = vmatpush.msra.mxu0 0.0
  %1162 = vmatpush.msra.mxu0 0.0
  %1163 = vmatpush.msra.mxu0 0.0
  %1164 = vmatpush.msra.mxu0 0.0
  %1165 = vmatpush.msra.mxu0 0.0
  %1166 = vmatpush.msra.mxu0 0.0
  %1167 = vmatpush.msra.mxu0 %v1149
  %1168 = vmatpush.msra.mxu0 %v1148
  %1169 = vmatpush.msra.mxu0 %v1147
  %1170 = vmatpush.msra.mxu0 %v1146
  %1171 = vmatmul.f32.gmra.mxu0 %v976
  %v1172 = vpop.f32.mrf.mxu0
  %v1173 = vadd.f32 %v1153, %v1172
  %1174 = vdwg.mxu0
  %s1175 = scalar_lea.vmem %s5, 160
  %v1176 = vld [vmem:[%s1175] sm:$0xff]
  %v1177 = vld [vmem:[%s1175 + $0x8] sm:$0xff]
  %v1178 = vld [vmem:[%s1175 + $0x10] sm:$0xff]
  %v1179 = vld [vmem:[%s1175 + $0x18] sm:$0xff]
  %s1180 = scalar_lea.vmem %s8, 5
  %v1181 = vld [vmem:[%s1180] sm:$0x1]
  %v1183 = vperm.slane %v1181, 0
  %1185 = vmatpush.msra.mxu0 0.0
  %1186 = vmatpush.msra.mxu0 0.0
  %1187 = vmatpush.msra.mxu0 0.0
  %1188 = vmatpush.msra.mxu0 0.0
  %1189 = vmatpush.msra.mxu0 0.0
  %1190 = vmatpush.msra.mxu0 0.0
  %1191 = vmatpush.msra.mxu0 0.0
  %1192 = vmatpush.msra.mxu0 0.0
  %1193 = vmatpush.msra.mxu0 0.0
  %1194 = vmatpush.msra.mxu0 0.0
  %1195 = vmatpush.msra.mxu0 0.0
  %1196 = vmatpush.msra.mxu0 0.0
  %1197 = vmatpush.msra.mxu0 %v1179
  %1198 = vmatpush.msra.mxu0 %v1178
  %1199 = vmatpush.msra.mxu0 %v1177
  %1200 = vmatpush.msra.mxu0 %v1176
  %1201 = vmatmul.f32.gmra.mxu0 %v976
  %v1202 = vpop.f32.mrf.mxu0
  %v1203 = vadd.f32 %v1183, %v1202
  %1204 = vdwg.mxu0
  %s1205 = scalar_lea.vmem %s6, 160
  %v1206 = vld [vmem:[%s1205] sm:$0xff]
  %v1207 = vld [vmem:[%s1205 + $0x8] sm:$0xff]
  %v1208 = vld [vmem:[%s1205 + $0x10] sm:$0xff]
  %v1209 = vld [vmem:[%s1205 + $0x18] sm:$0xff]
  %s1210 = scalar_lea.vmem %s9, 5
  %v1211 = vld [vmem:[%s1210] sm:$0x1]
  %v1213 = vperm.slane %v1211, 0
  %1215 = vmatpush.msra.mxu0 0.0
  %1216 = vmatpush.msra.mxu0 0.0
  %1217 = vmatpush.msra.mxu0 0.0
  %1218 = vmatpush.msra.mxu0 0.0
  %1219 = vmatpush.msra.mxu0 0.0
  %1220 = vmatpush.msra.mxu0 0.0
  %1221 = vmatpush.msra.mxu0 0.0
  %1222 = vmatpush.msra.mxu0 0.0
  %1223 = vmatpush.msra.mxu0 0.0
  %1224 = vmatpush.msra.mxu0 0.0
  %1225 = vmatpush.msra.mxu0 0.0
  %1226 = vmatpush.msra.mxu0 0.0
  %1227 = vmatpush.msra.mxu0 %v1209
  %1228 = vmatpush.msra.mxu0 %v1208
  %1229 = vmatpush.msra.mxu0 %v1207
  %1230 = vmatpush.msra.mxu0 %v1206
  %1231 = vmatmul.f32.gmra.mxu0 %v976
  %v1232 = vpop.f32.mrf.mxu0
  %v1233 = vadd.f32 %v1213, %v1232
  %1234 = vdwg.mxu0
  %v1236 = vsel %vm83, %v1173, 0
  %v1239 = vsel %vm83, %v1203, 0
  %1241 = vmatpush.xpose.msra.mxu0 0.0
  %1242 = vmatpush.xpose.msra.mxu0 0.0
  %1243 = vmatpush.xpose.msra.mxu0 0.0
  %1244 = vmatpush.xpose.msra.mxu0 0.0
  %1245 = vmatpush.xpose.msra.mxu0 0.0
  %1246 = vmatpush.xpose.msra.mxu0 0.0
  %1247 = vmatpush.xpose.msra.mxu0 0.0
  %1248 = vmatpush.xpose.msra.mxu0 0.0
  %1249 = vmatpush.xpose.msra.mxu0 0.0
  %1250 = vmatpush.xpose.msra.mxu0 0.0
  %1251 = vmatpush.xpose.msra.mxu0 0.0
  %1252 = vmatpush.xpose.msra.mxu0 0.0
  %1253 = vmatpush.xpose.msra.mxu0 0.0
  %1254 = vmatpush.xpose.msra.mxu0 0.0
  %1255 = vmatpush.xpose.msra.mxu0 0.0
  %1256 = vmatpush.xpose.msra.mxu0 %v1239
  %1257 = vmatmul.f32.gmra.mxu0 %v1236
  %v1258 = vpop.f32.mrf.mxu0
  %v1259 = vadd.f32 0.0, %v1258
  %1260 = vdwg.mxu0
  %v1261 = vmul.f32 %v1259, 0.35355338
  %v1262 = vsel %vm83, %v1261, -inf
  %1263 = vmax.xlane.f32.xlu0 %v1262
  %v1264 = vpop.xlane.xlu0 %1263
  %v1265 = vsub.f32 %v1261, %v1264
  %v1266 = vmul.f32 %v1265, 1.442695
  %v1267 = vpow.pop %v1266
  %v1268 = vsel %vm83, %v1267, 0.0
  %1269 = vadd.xlane.f32.xlu0 %v1268
  %v1270 = vpop.xlane.xlu0 %1269
  %v1271 = vrcp.pop %v1270
  %v1272 = vmul.f32 %v1267, %v1271
  %v1274 = vsel %vm83, %v1272, 0
  %1276 = vmatpush.msra.mxu0 0.0
  %1277 = vmatpush.msra.mxu0 0.0
  %1278 = vmatpush.msra.mxu0 0.0
  %1279 = vmatpush.msra.mxu0 0.0
  %1280 = vmatpush.msra.mxu0 0.0
  %1281 = vmatpush.msra.mxu0 0.0
  %1282 = vmatpush.msra.mxu0 0.0
  %1283 = vmatpush.msra.mxu0 0.0
  %1284 = vmatpush.msra.mxu0 0.0
  %1285 = vmatpush.msra.mxu0 0.0
  %1286 = vmatpush.msra.mxu0 0.0
  %1287 = vmatpush.msra.mxu0 0.0
  %1288 = vmatpush.msra.mxu0 0.0
  %1289 = vmatpush.msra.mxu0 0.0
  %1290 = vmatpush.msra.mxu0 0.0
  %1291 = vmatpush.msra.mxu0 %v1233
  %1292 = vmatmul.f32.gmra.mxu0 %v1274
  %v1293 = vpop.f32.mrf.mxu0
  %v1294 = vadd.f32 0.0, %v1293
  %1295 = vdwg.mxu0
  %s1296 = scalar_lea.vmem %s10, 40
  %v1297 = vld [vmem:[%s1296] sm:$0xff]
  %v1299 = vsel %vm83, %v1294, 0
  %1301 = vmatpush.msra.mxu0 0.0
  %1302 = vmatpush.msra.mxu0 0.0
  %1303 = vmatpush.msra.mxu0 0.0
  %1304 = vmatpush.msra.mxu0 0.0
  %1305 = vmatpush.msra.mxu0 0.0
  %1306 = vmatpush.msra.mxu0 0.0
  %1307 = vmatpush.msra.mxu0 0.0
  %1308 = vmatpush.msra.mxu0 0.0
  %1309 = vmatpush.msra.mxu0 0.0
  %1310 = vmatpush.msra.mxu0 0.0
  %1311 = vmatpush.msra.mxu0 0.0
  %1312 = vmatpush.msra.mxu0 0.0
  %1313 = vmatpush.msra.mxu0 0.0
  %1314 = vmatpush.msra.mxu0 0.0
  %1315 = vmatpush.msra.mxu0 0.0
  %1316 = vmatpush.msra.mxu0 %v1297
  %1317 = vmatmul.f32.gmra.mxu0 %v1299
  %v1318 = vpop.f32.mrf.mxu0
  %v1319 = vadd.f32 0.0, %v1318
  %1320 = vdwg.mxu0
  %v1321 = vadd.f32 %v1144, %v1319
  %s1322 = scalar_lea.vmem %s4, 192
  %v1323 = vld [vmem:[%s1322] sm:$0xff]
  %v1324 = vld [vmem:[%s1322 + $0x8] sm:$0xff]
  %v1325 = vld [vmem:[%s1322 + $0x10] sm:$0xff]
  %v1326 = vld [vmem:[%s1322 + $0x18] sm:$0xff]
  %s1327 = scalar_lea.vmem %s7, 6
  %v1328 = vld [vmem:[%s1327] sm:$0x1]
  %v1330 = vperm.slane %v1328, 0
  %1332 = vmatpush.msra.mxu0 0.0
  %1333 = vmatpush.msra.mxu0 0.0
  %1334 = vmatpush.msra.mxu0 0.0
  %1335 = vmatpush.msra.mxu0 0.0
  %1336 = vmatpush.msra.mxu0 0.0
  %1337 = vmatpush.msra.mxu0 0.0
  %1338 = vmatpush.msra.mxu0 0.0
  %1339 = vmatpush.msra.mxu0 0.0
  %1340 = vmatpush.msra.mxu0 0.0
  %1341 = vmatpush.msra.mxu0 0.0
  %1342 = vmatpush.msra.mxu0 0.0
  %1343 = vmatpush.msra.mxu0 0.0
  %1344 = vmatpush.msra.mxu0 %v1326
  %1345 = vmatpush.msra.mxu0 %v1325
  %1346 = vmatpush.msra.mxu0 %v1324
  %1347 = vmatpush.msra.mxu0 %v1323
  %1348 = vmatmul.f32.gmra.mxu0 %v976
  %v1349 = vpop.f32.mrf.mxu0
  %v1350 = vadd.f32 %v1330, %v1349
  %1351 = vdwg.mxu0
  %s1352 = scalar_lea.vmem %s5, 192
  %v1353 = vld [vmem:[%s1352] sm:$0xff]
  %v1354 = vld [vmem:[%s1352 + $0x8] sm:$0xff]
  %v1355 = vld [vmem:[%s1352 + $0x10] sm:$0xff]
  %v1356 = vld [vmem:[%s1352 + $0x18] sm:$0xff]
  %s1357 = scalar_lea.vmem %s8, 6
  %v1358 = vld [vmem:[%s1357] sm:$0x1]
  %v1360 = vperm.slane %v1358, 0
  %1362 = vmatpush.msra.mxu0 0.0
  %1363 = vmatpush.msra.mxu0 0.0
  %1364 = vmatpush.msra.mxu0 0.0
  %1365 = vmatpush.msra.mxu0 0.0
  %1366 = vmatpush.msra.mxu0 0.0
  %1367 = vmatpush.msra.mxu0 0.0
  %1368 = vmatpush.msra.mxu0 0.0
  %1369 = vmatpush.msra.mxu0 0.0
  %1370 = vmatpush.msra.mxu0 0.0
  %1371 = vmatpush.msra.mxu0 0.0
  %1372 = vmatpush.msra.mxu0 0.0
  %1373 = vmatpush.msra.mxu0 0.0
  %1374 = vmatpush.msra.mxu0 %v1356
  %1375 = vmatpush.msra.mxu0 %v1355
  %1376 = vmatpush.msra.mxu0 %v1354
  %1377 = vmatpush.msra.mxu0 %v1353
  %1378 = vmatmul.f32.gmra.mxu0 %v976
  %v1379 = vpop.f32.mrf.mxu0
  %v1380 = vadd.f32 %v1360, %v1379
  %1381 = vdwg.mxu0
  %s1382 = scalar_lea.vmem %s6, 192
  %v1383 = vld [vmem:[%s1382] sm:$0xff]
  %v1384 = vld [vmem:[%s1382 + $0x8] sm:$0xff]
  %v1385 = vld [vmem:[%s1382 + $0x10] sm:$0xff]
  %v1386 = vld [vmem:[%s1382 + $0x18] sm:$0xff]
  %s1387 = scalar_lea.vmem %s9, 6
  %v1388 = vld [vmem:[%s1387] sm:$0x1]
  %v1390 = vperm.slane %v1388, 0
  %1392 = vmatpush.msra.mxu0 0.0
  %1393 = vmatpush.msra.mxu0 0.0
  %1394 = vmatpush.msra.mxu0 0.0
  %1395 = vmatpush.msra.mxu0 0.0
  %1396 = vmatpush.msra.mxu0 0.0
  %1397 = vmatpush.msra.mxu0 0.0
  %1398 = vmatpush.msra.mxu0 0.0
  %1399 = vmatpush.msra.mxu0 0.0
  %1400 = vmatpush.msra.mxu0 0.0
  %1401 = vmatpush.msra.mxu0 0.0
  %1402 = vmatpush.msra.mxu0 0.0
  %1403 = vmatpush.msra.mxu0 0.0
  %1404 = vmatpush.msra.mxu0 %v1386
  %1405 = vmatpush.msra.mxu0 %v1385
  %1406 = vmatpush.msra.mxu0 %v1384
  %1407 = vmatpush.msra.mxu0 %v1383
  %1408 = vmatmul.f32.gmra.mxu0 %v976
  %v1409 = vpop.f32.mrf.mxu0
  %v1410 = vadd.f32 %v1390, %v1409
  %1411 = vdwg.mxu0
  %v1413 = vsel %vm83, %v1350, 0
  %v1416 = vsel %vm83, %v1380, 0
  %1418 = vmatpush.xpose.msra.mxu0 0.0
  %1419 = vmatpush.xpose.msra.mxu0 0.0
  %1420 = vmatpush.xpose.msra.mxu0 0.0
  %1421 = vmatpush.xpose.msra.mxu0 0.0
  %1422 = vmatpush.xpose.msra.mxu0 0.0
  %1423 = vmatpush.xpose.msra.mxu0 0.0
  %1424 = vmatpush.xpose.msra.mxu0 0.0
  %1425 = vmatpush.xpose.msra.mxu0 0.0
  %1426 = vmatpush.xpose.msra.mxu0 0.0
  %1427 = vmatpush.xpose.msra.mxu0 0.0
  %1428 = vmatpush.xpose.msra.mxu0 0.0
  %1429 = vmatpush.xpose.msra.mxu0 0.0
  %1430 = vmatpush.xpose.msra.mxu0 0.0
  %1431 = vmatpush.xpose.msra.mxu0 0.0
  %1432 = vmatpush.xpose.msra.mxu0 0.0
  %1433 = vmatpush.xpose.msra.mxu0 %v1416
  %1434 = vmatmul.f32.gmra.mxu0 %v1413
  %v1435 = vpop.f32.mrf.mxu0
  %v1436 = vadd.f32 0.0, %v1435
  %1437 = vdwg.mxu0
  %v1438 = vmul.f32 %v1436, 0.35355338
  %v1439 = vsel %vm83, %v1438, -inf
  %1440 = vmax.xlane.f32.xlu0 %v1439
  %v1441 = vpop.xlane.xlu0 %1440
  %v1442 = vsub.f32 %v1438, %v1441
  %v1443 = vmul.f32 %v1442, 1.442695
  %v1444 = vpow.pop %v1443
  %v1445 = vsel %vm83, %v1444, 0.0
  %1446 = vadd.xlane.f32.xlu0 %v1445
  %v1447 = vpop.xlane.xlu0 %1446
  %v1448 = vrcp.pop %v1447
  %v1449 = vmul.f32 %v1444, %v1448
  %v1451 = vsel %vm83, %v1449, 0
  %1453 = vmatpush.msra.mxu0 0.0
  %1454 = vmatpush.msra.mxu0 0.0
  %1455 = vmatpush.msra.mxu0 0.0
  %1456 = vmatpush.msra.mxu0 0.0
  %1457 = vmatpush.msra.mxu0 0.0
  %1458 = vmatpush.msra.mxu0 0.0
  %1459 = vmatpush.msra.mxu0 0.0
  %1460 = vmatpush.msra.mxu0 0.0
  %1461 = vmatpush.msra.mxu0 0.0
  %1462 = vmatpush.msra.mxu0 0.0
  %1463 = vmatpush.msra.mxu0 0.0
  %1464 = vmatpush.msra.mxu0 0.0
  %1465 = vmatpush.msra.mxu0 0.0
  %1466 = vmatpush.msra.mxu0 0.0
  %1467 = vmatpush.msra.mxu0 0.0
  %1468 = vmatpush.msra.mxu0 %v1410
  %1469 = vmatmul.f32.gmra.mxu0 %v1451
  %v1470 = vpop.f32.mrf.mxu0
  %v1471 = vadd.f32 0.0, %v1470
  %1472 = vdwg.mxu0
  %s1473 = scalar_lea.vmem %s10, 48
  %v1474 = vld [vmem:[%s1473] sm:$0xff]
  %v1476 = vsel %vm83, %v1471, 0
  %1478 = vmatpush.msra.mxu0 0.0
  %1479 = vmatpush.msra.mxu0 0.0
  %1480 = vmatpush.msra.mxu0 0.0
  %1481 = vmatpush.msra.mxu0 0.0
  %1482 = vmatpush.msra.mxu0 0.0
  %1483 = vmatpush.msra.mxu0 0.0
  %1484 = vmatpush.msra.mxu0 0.0
  %1485 = vmatpush.msra.mxu0 0.0
  %1486 = vmatpush.msra.mxu0 0.0
  %1487 = vmatpush.msra.mxu0 0.0
  %1488 = vmatpush.msra.mxu0 0.0
  %1489 = vmatpush.msra.mxu0 0.0
  %1490 = vmatpush.msra.mxu0 0.0
  %1491 = vmatpush.msra.mxu0 0.0
  %1492 = vmatpush.msra.mxu0 0.0
  %1493 = vmatpush.msra.mxu0 %v1474
  %1494 = vmatmul.f32.gmra.mxu0 %v1476
  %v1495 = vpop.f32.mrf.mxu0
  %v1496 = vadd.f32 0.0, %v1495
  %1497 = vdwg.mxu0
  %v1498 = vadd.f32 %v1321, %v1496
  %s1499 = scalar_lea.vmem %s4, 224
  %v1500 = vld [vmem:[%s1499] sm:$0xff]
  %v1501 = vld [vmem:[%s1499 + $0x8] sm:$0xff]
  %v1502 = vld [vmem:[%s1499 + $0x10] sm:$0xff]
  %v1503 = vld [vmem:[%s1499 + $0x18] sm:$0xff]
  %s1504 = scalar_lea.vmem %s7, 7
  %v1505 = vld [vmem:[%s1504] sm:$0x1]
  %v1507 = vperm.slane %v1505, 0
  %1509 = vmatpush.msra.mxu0 0.0
  %1510 = vmatpush.msra.mxu0 0.0
  %1511 = vmatpush.msra.mxu0 0.0
  %1512 = vmatpush.msra.mxu0 0.0
  %1513 = vmatpush.msra.mxu0 0.0
  %1514 = vmatpush.msra.mxu0 0.0
  %1515 = vmatpush.msra.mxu0 0.0
  %1516 = vmatpush.msra.mxu0 0.0
  %1517 = vmatpush.msra.mxu0 0.0
  %1518 = vmatpush.msra.mxu0 0.0
  %1519 = vmatpush.msra.mxu0 0.0
  %1520 = vmatpush.msra.mxu0 0.0
  %1521 = vmatpush.msra.mxu0 %v1503
  %1522 = vmatpush.msra.mxu0 %v1502
  %1523 = vmatpush.msra.mxu0 %v1501
  %1524 = vmatpush.msra.mxu0 %v1500
  %1525 = vmatmul.f32.gmra.mxu0 %v976
  %v1526 = vpop.f32.mrf.mxu0
  %v1527 = vadd.f32 %v1507, %v1526
  %1528 = vdwg.mxu0
  %s1529 = scalar_lea.vmem %s5, 224
  %v1530 = vld [vmem:[%s1529] sm:$0xff]
  %v1531 = vld [vmem:[%s1529 + $0x8] sm:$0xff]
  %v1532 = vld [vmem:[%s1529 + $0x10] sm:$0xff]
  %v1533 = vld [vmem:[%s1529 + $0x18] sm:$0xff]
  %s1534 = scalar_lea.vmem %s8, 7
  %v1535 = vld [vmem:[%s1534] sm:$0x1]
  %v1537 = vperm.slane %v1535, 0
  %1539 = vmatpush.msra.mxu0 0.0
  %1540 = vmatpush.msra.mxu0 0.0
  %1541 = vmatpush.msra.mxu0 0.0
  %1542 = vmatpush.msra.mxu0 0.0
  %1543 = vmatpush.msra.mxu0 0.0
  %1544 = vmatpush.msra.mxu0 0.0
  %1545 = vmatpush.msra.mxu0 0.0
  %1546 = vmatpush.msra.mxu0 0.0
  %1547 = vmatpush.msra.mxu0 0.0
  %1548 = vmatpush.msra.mxu0 0.0
  %1549 = vmatpush.msra.mxu0 0.0
  %1550 = vmatpush.msra.mxu0 0.0
  %1551 = vmatpush.msra.mxu0 %v1533
  %1552 = vmatpush.msra.mxu0 %v1532
  %1553 = vmatpush.msra.mxu0 %v1531
  %1554 = vmatpush.msra.mxu0 %v1530
  %1555 = vmatmul.f32.gmra.mxu0 %v976
  %v1556 = vpop.f32.mrf.mxu0
  %v1557 = vadd.f32 %v1537, %v1556
  %1558 = vdwg.mxu0
  %s1559 = scalar_lea.vmem %s6, 224
  %v1560 = vld [vmem:[%s1559] sm:$0xff]
  %v1561 = vld [vmem:[%s1559 + $0x8] sm:$0xff]
  %v1562 = vld [vmem:[%s1559 + $0x10] sm:$0xff]
  %v1563 = vld [vmem:[%s1559 + $0x18] sm:$0xff]
  %s1564 = scalar_lea.vmem %s9, 7
  %v1565 = vld [vmem:[%s1564] sm:$0x1]
  %v1567 = vperm.slane %v1565, 0
  %1569 = vmatpush.msra.mxu0 0.0
  %1570 = vmatpush.msra.mxu0 0.0
  %1571 = vmatpush.msra.mxu0 0.0
  %1572 = vmatpush.msra.mxu0 0.0
  %1573 = vmatpush.msra.mxu0 0.0
  %1574 = vmatpush.msra.mxu0 0.0
  %1575 = vmatpush.msra.mxu0 0.0
  %1576 = vmatpush.msra.mxu0 0.0
  %1577 = vmatpush.msra.mxu0 0.0
  %1578 = vmatpush.msra.mxu0 0.0
  %1579 = vmatpush.msra.mxu0 0.0
  %1580 = vmatpush.msra.mxu0 0.0
  %1581 = vmatpush.msra.mxu0 %v1563
  %1582 = vmatpush.msra.mxu0 %v1562
  %1583 = vmatpush.msra.mxu0 %v1561
  %1584 = vmatpush.msra.mxu0 %v1560
  %1585 = vmatmul.f32.gmra.mxu0 %v976
  %v1586 = vpop.f32.mrf.mxu0
  %v1587 = vadd.f32 %v1567, %v1586
  %1588 = vdwg.mxu0
  %v1590 = vsel %vm83, %v1527, 0
  %v1593 = vsel %vm83, %v1557, 0
  %1595 = vmatpush.xpose.msra.mxu0 0.0
  %1596 = vmatpush.xpose.msra.mxu0 0.0
  %1597 = vmatpush.xpose.msra.mxu0 0.0
  %1598 = vmatpush.xpose.msra.mxu0 0.0
  %1599 = vmatpush.xpose.msra.mxu0 0.0
  %1600 = vmatpush.xpose.msra.mxu0 0.0
  %1601 = vmatpush.xpose.msra.mxu0 0.0
  %1602 = vmatpush.xpose.msra.mxu0 0.0
  %1603 = vmatpush.xpose.msra.mxu0 0.0
  %1604 = vmatpush.xpose.msra.mxu0 0.0
  %1605 = vmatpush.xpose.msra.mxu0 0.0
  %1606 = vmatpush.xpose.msra.mxu0 0.0
  %1607 = vmatpush.xpose.msra.mxu0 0.0
  %1608 = vmatpush.xpose.msra.mxu0 0.0
  %1609 = vmatpush.xpose.msra.mxu0 0.0
  %1610 = vmatpush.xpose.msra.mxu0 %v1593
  %1611 = vmatmul.f32.gmra.mxu0 %v1590
  %v1612 = vpop.f32.mrf.mxu0
  %v1613 = vadd.f32 0.0, %v1612
  %1614 = vdwg.mxu0
  %v1615 = vmul.f32 %v1613, 0.35355338
  %v1616 = vsel %vm83, %v1615, -inf
  %1617 = vmax.xlane.f32.xlu0 %v1616
  %v1618 = vpop.xlane.xlu0 %1617
  %v1619 = vsub.f32 %v1615, %v1618
  %v1620 = vmul.f32 %v1619, 1.442695
  %v1621 = vpow.pop %v1620
  %v1622 = vsel %vm83, %v1621, 0.0
  %1623 = vadd.xlane.f32.xlu0 %v1622
  %v1624 = vpop.xlane.xlu0 %1623
  %v1625 = vrcp.pop %v1624
  %v1626 = vmul.f32 %v1621, %v1625
  %v1628 = vsel %vm83, %v1626, 0
  %1630 = vmatpush.msra.mxu0 0.0
  %1631 = vmatpush.msra.mxu0 0.0
  %1632 = vmatpush.msra.mxu0 0.0
  %1633 = vmatpush.msra.mxu0 0.0
  %1634 = vmatpush.msra.mxu0 0.0
  %1635 = vmatpush.msra.mxu0 0.0
  %1636 = vmatpush.msra.mxu0 0.0
  %1637 = vmatpush.msra.mxu0 0.0
  %1638 = vmatpush.msra.mxu0 0.0
  %1639 = vmatpush.msra.mxu0 0.0
  %1640 = vmatpush.msra.mxu0 0.0
  %1641 = vmatpush.msra.mxu0 0.0
  %1642 = vmatpush.msra.mxu0 0.0
  %1643 = vmatpush.msra.mxu0 0.0
  %1644 = vmatpush.msra.mxu0 0.0
  %1645 = vmatpush.msra.mxu0 %v1587
  %1646 = vmatmul.f32.gmra.mxu0 %v1628
  %v1647 = vpop.f32.mrf.mxu0
  %v1648 = vadd.f32 0.0, %v1647
  %1649 = vdwg.mxu0
  %s1650 = scalar_lea.vmem %s10, 56
  %v1651 = vld [vmem:[%s1650] sm:$0xff]
  %v1653 = vsel %vm83, %v1648, 0
  %1655 = vmatpush.msra.mxu0 0.0
  %1656 = vmatpush.msra.mxu0 0.0
  %1657 = vmatpush.msra.mxu0 0.0
  %1658 = vmatpush.msra.mxu0 0.0
  %1659 = vmatpush.msra.mxu0 0.0
  %1660 = vmatpush.msra.mxu0 0.0
  %1661 = vmatpush.msra.mxu0 0.0
  %1662 = vmatpush.msra.mxu0 0.0
  %1663 = vmatpush.msra.mxu0 0.0
  %1664 = vmatpush.msra.mxu0 0.0
  %1665 = vmatpush.msra.mxu0 0.0
  %1666 = vmatpush.msra.mxu0 0.0
  %1667 = vmatpush.msra.mxu0 0.0
  %1668 = vmatpush.msra.mxu0 0.0
  %1669 = vmatpush.msra.mxu0 0.0
  %1670 = vmatpush.msra.mxu0 %v1651
  %1671 = vmatmul.f32.gmra.mxu0 %v1653
  %v1672 = vpop.f32.mrf.mxu0
  %v1673 = vadd.f32 0.0, %v1672
  %1674 = vdwg.mxu0
  %v1675 = vadd.f32 %v1498, %v1673
  %v1676 = vsel %vm121, %v1675, 0.0
  %1677 = vadd.xlane.f32.xlu0 %v1676
  %v1678 = vpop.xlane.xlu0 %1677
  %v1679 = vmul.f32 %v1678, %v827
  %v1680 = vsub.f32 %v1675, %v1679
  %v1681 = vmul.f32 %v1680, %v1680
  %v1682 = vsel %vm121, %v1681, 0.0
  %1683 = vadd.xlane.f32.xlu0 %v1682
  %v1684 = vpop.xlane.xlu0 %1683
  %v1685 = vmul.f32 %v1684, %v827
  %v1686 = vadd.f32 %v1685, 1e-05
  %v1687 = vrsqrt.pop %v1686
  %v1688 = vmul.f32 %v1687, %v1686
  %v1689 = vmul.f32 %v1688, %v1687
  %v1690 = vmul.f32 0.5, %v1689
  %v1691 = vsub.f32 1.5, %v1690
  %v1692 = vmul.f32 %v1687, %v1691
  %vm1693 = vweird.f32 %v1686
  %vm1694 = vweird.f32 %v1687
  %vm1695 = vmor %vm1693, %vm1694
  %v1696 = vsel %vm1695, %v1687, %v1692
  %v1697 = vmul.f32 %v1680, %v1696
  %s1698 = scalar_lea.vmem %s12, 1
  %v1699 = vld [vmem:[%s1698] sm:$0x1]
  %v1701 = vperm.slane %v1699, 0
  %v1703 = vmul.f32 %v1697, %v1701
  %s1704 = scalar_lea.vmem %s13, 1
  %v1705 = vld [vmem:[%s1704] sm:$0x1]
  %v1707 = vperm.slane %v1705, 0
  %v1709 = vadd.f32 %v1703, %v1707
  %s1710 = scalar_lea.vmem %s14, 32
  %v1711 = vld [vmem:[%s1710] sm:$0xff]
  %v1712 = vld [vmem:[%s1710 + $0x8] sm:$0xff]
  %v1713 = vld [vmem:[%s1710 + $0x10] sm:$0xff]
  %v1714 = vld [vmem:[%s1710 + $0x18] sm:$0xff]
  %s1715 = scalar_lea.vmem %s15, 1
  %v1716 = vld [vmem:[%s1715] sm:$0x1]
  %v1718 = vperm.slane %v1716, 0
  %v1721 = vsel %vm121, %v1709, 0
  %1723 = vmatpush.msra.mxu0 0.0
  %1724 = vmatpush.msra.mxu0 0.0
  %1725 = vmatpush.msra.mxu0 0.0
  %1726 = vmatpush.msra.mxu0 0.0
  %1727 = vmatpush.msra.mxu0 0.0
  %1728 = vmatpush.msra.mxu0 0.0
  %1729 = vmatpush.msra.mxu0 0.0
  %1730 = vmatpush.msra.mxu0 0.0
  %1731 = vmatpush.msra.mxu0 0.0
  %1732 = vmatpush.msra.mxu0 0.0
  %1733 = vmatpush.msra.mxu0 0.0
  %1734 = vmatpush.msra.mxu0 0.0
  %1735 = vmatpush.msra.mxu0 %v1714
  %1736 = vmatpush.msra.mxu0 %v1713
  %1737 = vmatpush.msra.mxu0 %v1712
  %1738 = vmatpush.msra.mxu0 %v1711
  %1739 = vmatmul.f32.gmra.mxu0 %v1721
  %v1740 = vpop.f32.mrf.mxu0
  %v1741 = vadd.f32 %v1718, %v1740
  %1742 = vdwg.mxu0
  %v1743 = vmax.f32 %v1741, 0.0
  %s1744 = scalar_lea.vmem %s16, 64
  %v1745 = vld [vmem:[%s1744] sm:$0xff]
  %v1746 = vld [vmem:[%s1744 + $0x8] sm:$0xff]
  %v1747 = vld [vmem:[%s1744 + $0x10] sm:$0xff]
  %v1748 = vld [vmem:[%s1744 + $0x18] sm:$0xff]
  %v1749 = vld [vmem:[%s1744 + $0x20] sm:$0xff]
  %v1750 = vld [vmem:[%s1744 + $0x28] sm:$0xff]
  %v1751 = vld [vmem:[%s1744 + $0x30] sm:$0xff]
  %v1752 = vld [vmem:[%s1744 + $0x38] sm:$0xff]
  %v1754 = vsel %vm897, %v1743, 0
  %1756 = vmatpush.msra.mxu0 0.0
  %1757 = vmatpush.msra.mxu0 0.0
  %1758 = vmatpush.msra.mxu0 0.0
  %1759 = vmatpush.msra.mxu0 0.0
  %1760 = vmatpush.msra.mxu0 0.0
  %1761 = vmatpush.msra.mxu0 0.0
  %1762 = vmatpush.msra.mxu0 0.0
  %1763 = vmatpush.msra.mxu0 0.0
  %1764 = vmatpush.msra.mxu0 %v1752
  %1765 = vmatpush.msra.mxu0 %v1751
  %1766 = vmatpush.msra.mxu0 %v1750
  %1767 = vmatpush.msra.mxu0 %v1749
  %1768 = vmatpush.msra.mxu0 %v1748
  %1769 = vmatpush.msra.mxu0 %v1747
  %1770 = vmatpush.msra.mxu0 %v1746
  %1771 = vmatpush.msra.mxu0 %v1745
  %1772 = vmatmul.f32.gmra.mxu0 %v1754
  %v1773 = vpop.f32.mrf.mxu0
  %v1774 = vadd.f32 0.0, %v1773
  %1775 = vdwg.mxu0
  %v1776 = vadd.f32 %v1709, %v1774
  %s1777 = scalar_lea.vmem %s17, 1
  %v1778 = vld [vmem:[%s1777] sm:$0x1]
  %v1780 = vperm.slane %v1778, 0
  %v1782 = vadd.f32 %v1776, %v1780
  %v1783 = vsel %vm121, %v1782, 0.0
  %1784 = vadd.xlane.f32.xlu0 %v1783
  %v1785 = vpop.xlane.xlu0 %1784
  %v1786 = vmul.f32 %v1785, %v827
  %v1787 = vsub.f32 %v1782, %v1786
  %v1788 = vmul.f32 %v1787, %v1787
  %v1789 = vsel %vm121, %v1788, 0.0
  %1790 = vadd.xlane.f32.xlu0 %v1789
  %v1791 = vpop.xlane.xlu0 %1790
  %v1792 = vmul.f32 %v1791, %v827
  %v1793 = vadd.f32 %v1792, 1e-05
  %v1794 = vrsqrt.pop %v1793
  %v1795 = vmul.f32 %v1794, %v1793
  %v1796 = vmul.f32 %v1795, %v1794
  %v1797 = vmul.f32 0.5, %v1796
  %v1798 = vsub.f32 1.5, %v1797
  %v1799 = vmul.f32 %v1794, %v1798
  %vm1800 = vweird.f32 %v1793
  %vm1801 = vweird.f32 %v1794
  %vm1802 = vmor %vm1800, %vm1801
  %v1803 = vsel %vm1802, %v1794, %v1799
  %v1804 = vmul.f32 %v1787, %v1803
  %s1805 = scalar_lea.vmem %s18, 1
  %v1806 = vld [vmem:[%s1805] sm:$0x1]
  %v1808 = vperm.slane %v1806, 0
  %v1810 = vmul.f32 %v1804, %v1808
  %s1811 = scalar_lea.vmem %s19, 1
  %v1812 = vld [vmem:[%s1811] sm:$0x1]
  %v1814 = vperm.slane %v1812, 0
  %v1816 = vadd.f32 %v1810, %v1814
  %v1818 = vperm.slane %v78, 0
  %v1821 = vsel %vm121, %v1816, 0
  %1823 = vmatpush.msra.mxu0 0.0
  %1824 = vmatpush.msra.mxu0 0.0
  %1825 = vmatpush.msra.mxu0 0.0
  %1826 = vmatpush.msra.mxu0 0.0
  %1827 = vmatpush.msra.mxu0 0.0
  %1828 = vmatpush.msra.mxu0 0.0
  %1829 = vmatpush.msra.mxu0 0.0
  %1830 = vmatpush.msra.mxu0 0.0
  %1831 = vmatpush.msra.mxu0 0.0
  %1832 = vmatpush.msra.mxu0 0.0
  %1833 = vmatpush.msra.mxu0 0.0
  %1834 = vmatpush.msra.mxu0 0.0
  %1835 = vmatpush.msra.mxu0 %v77
  %1836 = vmatpush.msra.mxu0 %v76
  %1837 = vmatpush.msra.mxu0 %v75
  %1838 = vmatpush.msra.mxu0 %v74
  %1839 = vmatmul.f32.gmra.mxu0 %v1821
  %v1840 = vpop.f32.mrf.mxu0
  %v1841 = vadd.f32 %v1818, %v1840
  %1842 = vdwg.mxu0
  %1843 = vst [vmem:[%s22] sm:$0xff] %v1841
  %v1844 = vld [vmem:[%s0] sm:$0xff]
  %1846 = vrot.lane.b32.xlu0 %v1844, 120
  %v1847 = vpop.permute.xlu0 %1846
  %v1848 = vsel %vm83, %v1847, 0
  %1850 = vmatpush.msra.mxu0 0.0
  %1851 = vmatpush.msra.mxu0 0.0
  %1852 = vmatpush.msra.mxu0 0.0
  %1853 = vmatpush.msra.mxu0 0.0
  %1854 = vmatpush.msra.mxu0 0.0
  %1855 = vmatpush.msra.mxu0 0.0
  %1856 = vmatpush.msra.mxu0 0.0
  %1857 = vmatpush.msra.mxu0 0.0
  %1858 = vmatpush.msra.mxu0 0.0
  %1859 = vmatpush.msra.mxu0 0.0
  %1860 = vmatpush.msra.mxu0 0.0
  %1861 = vmatpush.msra.mxu0 0.0
  %1862 = vmatpush.msra.mxu0 0.0
  %1863 = vmatpush.msra.mxu0 0.0
  %1864 = vmatpush.msra.mxu0 0.0
  %1865 = vmatpush.msra.mxu0 %v72
  %1866 = vmatmul.f32.gmra.mxu0 %v1848
  %v1867 = vpop.f32.mrf.mxu0
  %v1868 = vadd.f32 %v81, %v1867
  %1869 = vdwg.mxu0
  %v1870 = vadd.f32 %v1868, %v71
  %v1871 = vld [vmem:[%s11] sm:$0x1]
  %v1873 = vperm.slane %v1871, 0
  %v1875 = vadd.f32 %v1870, %v1873
  %v1876 = vld [vmem:[%s4] sm:$0xff]
  %v1877 = vld [vmem:[%s4 + $0x8] sm:$0xff]
  %v1878 = vld [vmem:[%s4 + $0x10] sm:$0xff]
  %v1879 = vld [vmem:[%s4 + $0x18] sm:$0xff]
  %v1880 = vld [vmem:[%s7] sm:$0x1]
  %v1882 = vperm.slane %v1880, 0
  %v1885 = vsel %vm121, %v1870, 0
  %1887 = vmatpush.msra.mxu0 0.0
  %1888 = vmatpush.msra.mxu0 0.0
  %1889 = vmatpush.msra.mxu0 0.0
  %1890 = vmatpush.msra.mxu0 0.0
  %1891 = vmatpush.msra.mxu0 0.0
  %1892 = vmatpush.msra.mxu0 0.0
  %1893 = vmatpush.msra.mxu0 0.0
  %1894 = vmatpush.msra.mxu0 0.0
  %1895 = vmatpush.msra.mxu0 0.0
  %1896 = vmatpush.msra.mxu0 0.0
  %1897 = vmatpush.msra.mxu0 0.0
  %1898 = vmatpush.msra.mxu0 0.0
  %1899 = vmatpush.msra.mxu0 %v1879
  %1900 = vmatpush.msra.mxu0 %v1878
  %1901 = vmatpush.msra.mxu0 %v1877
  %1902 = vmatpush.msra.mxu0 %v1876
  %1903 = vmatmul.f32.gmra.mxu0 %v1885
  %v1904 = vpop.f32.mrf.mxu0
  %v1905 = vadd.f32 %v1882, %v1904
  %1906 = vdwg.mxu0
  %v1907 = vld [vmem:[%s5] sm:$0xff]
  %v1908 = vld [vmem:[%s5 + $0x8] sm:$0xff]
  %v1909 = vld [vmem:[%s5 + $0x10] sm:$0xff]
  %v1910 = vld [vmem:[%s5 + $0x18] sm:$0xff]
  %v1911 = vld [vmem:[%s8] sm:$0x1]
  %v1913 = vperm.slane %v1911, 0
  %1915 = vmatpush.msra.mxu0 0.0
  %1916 = vmatpush.msra.mxu0 0.0
  %1917 = vmatpush.msra.mxu0 0.0
  %1918 = vmatpush.msra.mxu0 0.0
  %1919 = vmatpush.msra.mxu0 0.0
  %1920 = vmatpush.msra.mxu0 0.0
  %1921 = vmatpush.msra.mxu0 0.0
  %1922 = vmatpush.msra.mxu0 0.0
  %1923 = vmatpush.msra.mxu0 0.0
  %1924 = vmatpush.msra.mxu0 0.0
  %1925 = vmatpush.msra.mxu0 0.0
  %1926 = vmatpush.msra.mxu0 0.0
  %1927 = vmatpush.msra.mxu0 %v1910
  %1928 = vmatpush.msra.mxu0 %v1909
  %1929 = vmatpush.msra.mxu0 %v1908
  %1930 = vmatpush.msra.mxu0 %v1907
  %1931 = vmatmul.f32.gmra.mxu0 %v1885
  %v1932 = vpop.f32.mrf.mxu0
  %v1933 = vadd.f32 %v1913, %v1932
  %1934 = vdwg.mxu0
  %v1935 = vld [vmem:[%s6] sm:$0xff]
  %v1936 = vld [vmem:[%s6 + $0x8] sm:$0xff]
  %v1937 = vld [vmem:[%s6 + $0x10] sm:$0xff]
  %v1938 = vld [vmem:[%s6 + $0x18] sm:$0xff]
  %v1939 = vld [vmem:[%s9] sm:$0x1]
  %v1941 = vperm.slane %v1939, 0
  %1943 = vmatpush.msra.mxu0 0.0
  %1944 = vmatpush.msra.mxu0 0.0
  %1945 = vmatpush.msra.mxu0 0.0
  %1946 = vmatpush.msra.mxu0 0.0
  %1947 = vmatpush.msra.mxu0 0.0
  %1948 = vmatpush.msra.mxu0 0.0
  %1949 = vmatpush.msra.mxu0 0.0
  %1950 = vmatpush.msra.mxu0 0.0
  %1951 = vmatpush.msra.mxu0 0.0
  %1952 = vmatpush.msra.mxu0 0.0
  %1953 = vmatpush.msra.mxu0 0.0
  %1954 = vmatpush.msra.mxu0 0.0
  %1955 = vmatpush.msra.mxu0 %v1938
  %1956 = vmatpush.msra.mxu0 %v1937
  %1957 = vmatpush.msra.mxu0 %v1936
  %1958 = vmatpush.msra.mxu0 %v1935
  %1959 = vmatmul.f32.gmra.mxu0 %v1885
  %v1960 = vpop.f32.mrf.mxu0
  %v1961 = vadd.f32 %v1941, %v1960
  %1962 = vdwg.mxu0
  %v1964 = vsel %vm83, %v1905, 0
  %v1967 = vsel %vm83, %v1933, 0
  %1969 = vmatpush.xpose.msra.mxu0 0.0
  %1970 = vmatpush.xpose.msra.mxu0 0.0
  %1971 = vmatpush.xpose.msra.mxu0 0.0
  %1972 = vmatpush.xpose.msra.mxu0 0.0
  %1973 = vmatpush.xpose.msra.mxu0 0.0
  %1974 = vmatpush.xpose.msra.mxu0 0.0
  %1975 = vmatpush.xpose.msra.mxu0 0.0
  %1976 = vmatpush.xpose.msra.mxu0 0.0
  %1977 = vmatpush.xpose.msra.mxu0 0.0
  %1978 = vmatpush.xpose.msra.mxu0 0.0
  %1979 = vmatpush.xpose.msra.mxu0 0.0
  %1980 = vmatpush.xpose.msra.mxu0 0.0
  %1981 = vmatpush.xpose.msra.mxu0 0.0
  %1982 = vmatpush.xpose.msra.mxu0 0.0
  %1983 = vmatpush.xpose.msra.mxu0 0.0
  %1984 = vmatpush.xpose.msra.mxu0 %v1967
  %1985 = vmatmul.f32.gmra.mxu0 %v1964
  %v1986 = vpop.f32.mrf.mxu0
  %v1987 = vadd.f32 0.0, %v1986
  %1988 = vdwg.mxu0
  %v1989 = vmul.f32 %v1987, 0.35355338
  %v1990 = vsel %vm83, %v1989, -inf
  %1991 = vmax.xlane.f32.xlu0 %v1990
  %v1992 = vpop.xlane.xlu0 %1991
  %v1993 = vsub.f32 %v1989, %v1992
  %v1994 = vmul.f32 %v1993, 1.442695
  %v1995 = vpow.pop %v1994
  %v1996 = vsel %vm83, %v1995, 0.0
  %1997 = vadd.xlane.f32.xlu0 %v1996
  %v1998 = vpop.xlane.xlu0 %1997
  %v1999 = vrcp.pop %v1998
  %v2000 = vmul.f32 %v1995, %v1999
  %v2002 = vsel %vm83, %v2000, 0
  %2004 = vmatpush.msra.mxu0 0.0
  %2005 = vmatpush.msra.mxu0 0.0
  %2006 = vmatpush.msra.mxu0 0.0
  %2007 = vmatpush.msra.mxu0 0.0
  %2008 = vmatpush.msra.mxu0 0.0
  %2009 = vmatpush.msra.mxu0 0.0
  %2010 = vmatpush.msra.mxu0 0.0
  %2011 = vmatpush.msra.mxu0 0.0
  %2012 = vmatpush.msra.mxu0 0.0
  %2013 = vmatpush.msra.mxu0 0.0
  %2014 = vmatpush.msra.mxu0 0.0
  %2015 = vmatpush.msra.mxu0 0.0
  %2016 = vmatpush.msra.mxu0 0.0
  %2017 = vmatpush.msra.mxu0 0.0
  %2018 = vmatpush.msra.mxu0 0.0
  %2019 = vmatpush.msra.mxu0 %v1961
  %2020 = vmatmul.f32.gmra.mxu0 %v2002
  %v2021 = vpop.f32.mrf.mxu0
  %v2022 = vadd.f32 0.0, %v2021
  %2023 = vdwg.mxu0
  %v2024 = vld [vmem:[%s10] sm:$0xff]
  %v2026 = vsel %vm83, %v2022, 0
  %2028 = vmatpush.msra.mxu0 0.0
  %2029 = vmatpush.msra.mxu0 0.0
  %2030 = vmatpush.msra.mxu0 0.0
  %2031 = vmatpush.msra.mxu0 0.0
  %2032 = vmatpush.msra.mxu0 0.0
  %2033 = vmatpush.msra.mxu0 0.0
  %2034 = vmatpush.msra.mxu0 0.0
  %2035 = vmatpush.msra.mxu0 0.0
  %2036 = vmatpush.msra.mxu0 0.0
  %2037 = vmatpush.msra.mxu0 0.0
  %2038 = vmatpush.msra.mxu0 0.0
  %2039 = vmatpush.msra.mxu0 0.0
  %2040 = vmatpush.msra.mxu0 0.0
  %2041 = vmatpush.msra.mxu0 0.0
  %2042 = vmatpush.msra.mxu0 0.0
  %2043 = vmatpush.msra.mxu0 %v2024
  %2044 = vmatmul.f32.gmra.mxu0 %v2026
  %v2045 = vpop.f32.mrf.mxu0
  %v2046 = vadd.f32 0.0, %v2045
  %2047 = vdwg.mxu0
  %v2048 = vadd.f32 %v1875, %v2046
  %v2049 = vld [vmem:[%s287] sm:$0xff]
  %v2050 = vld [vmem:[%s287 + $0x8] sm:$0xff]
  %v2051 = vld [vmem:[%s287 + $0x10] sm:$0xff]
  %v2052 = vld [vmem:[%s287 + $0x18] sm:$0xff]
  %v2053 = vld [vmem:[%s292] sm:$0x1]
  %v2055 = vperm.slane %v2053, 0
  %2057 = vmatpush.msra.mxu0 0.0
  %2058 = vmatpush.msra.mxu0 0.0
  %2059 = vmatpush.msra.mxu0 0.0
  %2060 = vmatpush.msra.mxu0 0.0
  %2061 = vmatpush.msra.mxu0 0.0
  %2062 = vmatpush.msra.mxu0 0.0
  %2063 = vmatpush.msra.mxu0 0.0
  %2064 = vmatpush.msra.mxu0 0.0
  %2065 = vmatpush.msra.mxu0 0.0
  %2066 = vmatpush.msra.mxu0 0.0
  %2067 = vmatpush.msra.mxu0 0.0
  %2068 = vmatpush.msra.mxu0 0.0
  %2069 = vmatpush.msra.mxu0 %v2052
  %2070 = vmatpush.msra.mxu0 %v2051
  %2071 = vmatpush.msra.mxu0 %v2050
  %2072 = vmatpush.msra.mxu0 %v2049
  %2073 = vmatmul.f32.gmra.mxu0 %v1885
  %v2074 = vpop.f32.mrf.mxu0
  %v2075 = vadd.f32 %v2055, %v2074
  %2076 = vdwg.mxu0
  %v2077 = vld [vmem:[%s317] sm:$0xff]
  %v2078 = vld [vmem:[%s317 + $0x8] sm:$0xff]
  %v2079 = vld [vmem:[%s317 + $0x10] sm:$0xff]
  %v2080 = vld [vmem:[%s317 + $0x18] sm:$0xff]
  %v2081 = vld [vmem:[%s322] sm:$0x1]
  %v2083 = vperm.slane %v2081, 0
  %2085 = vmatpush.msra.mxu0 0.0
  %2086 = vmatpush.msra.mxu0 0.0
  %2087 = vmatpush.msra.mxu0 0.0
  %2088 = vmatpush.msra.mxu0 0.0
  %2089 = vmatpush.msra.mxu0 0.0
  %2090 = vmatpush.msra.mxu0 0.0
  %2091 = vmatpush.msra.mxu0 0.0
  %2092 = vmatpush.msra.mxu0 0.0
  %2093 = vmatpush.msra.mxu0 0.0
  %2094 = vmatpush.msra.mxu0 0.0
  %2095 = vmatpush.msra.mxu0 0.0
  %2096 = vmatpush.msra.mxu0 0.0
  %2097 = vmatpush.msra.mxu0 %v2080
  %2098 = vmatpush.msra.mxu0 %v2079
  %2099 = vmatpush.msra.mxu0 %v2078
  %2100 = vmatpush.msra.mxu0 %v2077
  %2101 = vmatmul.f32.gmra.mxu0 %v1885
  %v2102 = vpop.f32.mrf.mxu0
  %v2103 = vadd.f32 %v2083, %v2102
  %2104 = vdwg.mxu0
  %v2105 = vld [vmem:[%s347] sm:$0xff]
  %v2106 = vld [vmem:[%s347 + $0x8] sm:$0xff]
  %v2107 = vld [vmem:[%s347 + $0x10] sm:$0xff]
  %v2108 = vld [vmem:[%s347 + $0x18] sm:$0xff]
  %v2109 = vld [vmem:[%s352] sm:$0x1]
  %v2111 = vperm.slane %v2109, 0
  %2113 = vmatpush.msra.mxu0 0.0
  %2114 = vmatpush.msra.mxu0 0.0
  %2115 = vmatpush.msra.mxu0 0.0
  %2116 = vmatpush.msra.mxu0 0.0
  %2117 = vmatpush.msra.mxu0 0.0
  %2118 = vmatpush.msra.mxu0 0.0
  %2119 = vmatpush.msra.mxu0 0.0
  %2120 = vmatpush.msra.mxu0 0.0
  %2121 = vmatpush.msra.mxu0 0.0
  %2122 = vmatpush.msra.mxu0 0.0
  %2123 = vmatpush.msra.mxu0 0.0
  %2124 = vmatpush.msra.mxu0 0.0
  %2125 = vmatpush.msra.mxu0 %v2108
  %2126 = vmatpush.msra.mxu0 %v2107
  %2127 = vmatpush.msra.mxu0 %v2106
  %2128 = vmatpush.msra.mxu0 %v2105
  %2129 = vmatmul.f32.gmra.mxu0 %v1885
  %v2130 = vpop.f32.mrf.mxu0
  %v2131 = vadd.f32 %v2111, %v2130
  %2132 = vdwg.mxu0
  %v2134 = vsel %vm83, %v2075, 0
  %v2137 = vsel %vm83, %v2103, 0
  %2139 = vmatpush.xpose.msra.mxu0 0.0
  %2140 = vmatpush.xpose.msra.mxu0 0.0
  %2141 = vmatpush.xpose.msra.mxu0 0.0
  %2142 = vmatpush.xpose.msra.mxu0 0.0
  %2143 = vmatpush.xpose.msra.mxu0 0.0
  %2144 = vmatpush.xpose.msra.mxu0 0.0
  %2145 = vmatpush.xpose.msra.mxu0 0.0
  %2146 = vmatpush.xpose.msra.mxu0 0.0
  %2147 = vmatpush.xpose.msra.mxu0 0.0
  %2148 = vmatpush.xpose.msra.mxu0 0.0
  %2149 = vmatpush.xpose.msra.mxu0 0.0
  %2150 = vmatpush.xpose.msra.mxu0 0.0
  %2151 = vmatpush.xpose.msra.mxu0 0.0
  %2152 = vmatpush.xpose.msra.mxu0 0.0
  %2153 = vmatpush.xpose.msra.mxu0 0.0
  %2154 = vmatpush.xpose.msra.mxu0 %v2137
  %2155 = vmatmul.f32.gmra.mxu0 %v2134
  %v2156 = vpop.f32.mrf.mxu0
  %v2157 = vadd.f32 0.0, %v2156
  %2158 = vdwg.mxu0
  %v2159 = vmul.f32 %v2157, 0.35355338
  %v2160 = vsel %vm83, %v2159, -inf
  %2161 = vmax.xlane.f32.xlu0 %v2160
  %v2162 = vpop.xlane.xlu0 %2161
  %v2163 = vsub.f32 %v2159, %v2162
  %v2164 = vmul.f32 %v2163, 1.442695
  %v2165 = vpow.pop %v2164
  %v2166 = vsel %vm83, %v2165, 0.0
  %2167 = vadd.xlane.f32.xlu0 %v2166
  %v2168 = vpop.xlane.xlu0 %2167
  %v2169 = vrcp.pop %v2168
  %v2170 = vmul.f32 %v2165, %v2169
  %v2172 = vsel %vm83, %v2170, 0
  %2174 = vmatpush.msra.mxu0 0.0
  %2175 = vmatpush.msra.mxu0 0.0
  %2176 = vmatpush.msra.mxu0 0.0
  %2177 = vmatpush.msra.mxu0 0.0
  %2178 = vmatpush.msra.mxu0 0.0
  %2179 = vmatpush.msra.mxu0 0.0
  %2180 = vmatpush.msra.mxu0 0.0
  %2181 = vmatpush.msra.mxu0 0.0
  %2182 = vmatpush.msra.mxu0 0.0
  %2183 = vmatpush.msra.mxu0 0.0
  %2184 = vmatpush.msra.mxu0 0.0
  %2185 = vmatpush.msra.mxu0 0.0
  %2186 = vmatpush.msra.mxu0 0.0
  %2187 = vmatpush.msra.mxu0 0.0
  %2188 = vmatpush.msra.mxu0 0.0
  %2189 = vmatpush.msra.mxu0 %v2131
  %2190 = vmatmul.f32.gmra.mxu0 %v2172
  %v2191 = vpop.f32.mrf.mxu0
  %v2192 = vadd.f32 0.0, %v2191
  %2193 = vdwg.mxu0
  %v2194 = vld [vmem:[%s438] sm:$0xff]
  %v2196 = vsel %vm83, %v2192, 0
  %2198 = vmatpush.msra.mxu0 0.0
  %2199 = vmatpush.msra.mxu0 0.0
  %2200 = vmatpush.msra.mxu0 0.0
  %2201 = vmatpush.msra.mxu0 0.0
  %2202 = vmatpush.msra.mxu0 0.0
  %2203 = vmatpush.msra.mxu0 0.0
  %2204 = vmatpush.msra.mxu0 0.0
  %2205 = vmatpush.msra.mxu0 0.0
  %2206 = vmatpush.msra.mxu0 0.0
  %2207 = vmatpush.msra.mxu0 0.0
  %2208 = vmatpush.msra.mxu0 0.0
  %2209 = vmatpush.msra.mxu0 0.0
  %2210 = vmatpush.msra.mxu0 0.0
  %2211 = vmatpush.msra.mxu0 0.0
  %2212 = vmatpush.msra.mxu0 0.0
  %2213 = vmatpush.msra.mxu0 %v2194
  %2214 = vmatmul.f32.gmra.mxu0 %v2196
  %v2215 = vpop.f32.mrf.mxu0
  %v2216 = vadd.f32 0.0, %v2215
  %2217 = vdwg.mxu0
  %v2218 = vadd.f32 %v2048, %v2216
  %v2219 = vld [vmem:[%s464] sm:$0xff]
  %v2220 = vld [vmem:[%s464 + $0x8] sm:$0xff]
  %v2221 = vld [vmem:[%s464 + $0x10] sm:$0xff]
  %v2222 = vld [vmem:[%s464 + $0x18] sm:$0xff]
  %v2223 = vld [vmem:[%s469] sm:$0x1]
  %v2225 = vperm.slane %v2223, 0
  %2227 = vmatpush.msra.mxu0 0.0
  %2228 = vmatpush.msra.mxu0 0.0
  %2229 = vmatpush.msra.mxu0 0.0
  %2230 = vmatpush.msra.mxu0 0.0
  %2231 = vmatpush.msra.mxu0 0.0
  %2232 = vmatpush.msra.mxu0 0.0
  %2233 = vmatpush.msra.mxu0 0.0
  %2234 = vmatpush.msra.mxu0 0.0
  %2235 = vmatpush.msra.mxu0 0.0
  %2236 = vmatpush.msra.mxu0 0.0
  %2237 = vmatpush.msra.mxu0 0.0
  %2238 = vmatpush.msra.mxu0 0.0
  %2239 = vmatpush.msra.mxu0 %v2222
  %2240 = vmatpush.msra.mxu0 %v2221
  %2241 = vmatpush.msra.mxu0 %v2220
  %2242 = vmatpush.msra.mxu0 %v2219
  %2243 = vmatmul.f32.gmra.mxu0 %v1885
  %v2244 = vpop.f32.mrf.mxu0
  %v2245 = vadd.f32 %v2225, %v2244
  %2246 = vdwg.mxu0
  %v2247 = vld [vmem:[%s494] sm:$0xff]
  %v2248 = vld [vmem:[%s494 + $0x8] sm:$0xff]
  %v2249 = vld [vmem:[%s494 + $0x10] sm:$0xff]
  %v2250 = vld [vmem:[%s494 + $0x18] sm:$0xff]
  %v2251 = vld [vmem:[%s499] sm:$0x1]
  %v2253 = vperm.slane %v2251, 0
  %2255 = vmatpush.msra.mxu0 0.0
  %2256 = vmatpush.msra.mxu0 0.0
  %2257 = vmatpush.msra.mxu0 0.0
  %2258 = vmatpush.msra.mxu0 0.0
  %2259 = vmatpush.msra.mxu0 0.0
  %2260 = vmatpush.msra.mxu0 0.0
  %2261 = vmatpush.msra.mxu0 0.0
  %2262 = vmatpush.msra.mxu0 0.0
  %2263 = vmatpush.msra.mxu0 0.0
  %2264 = vmatpush.msra.mxu0 0.0
  %2265 = vmatpush.msra.mxu0 0.0
  %2266 = vmatpush.msra.mxu0 0.0
  %2267 = vmatpush.msra.mxu0 %v2250
  %2268 = vmatpush.msra.mxu0 %v2249
  %2269 = vmatpush.msra.mxu0 %v2248
  %2270 = vmatpush.msra.mxu0 %v2247
  %2271 = vmatmul.f32.gmra.mxu0 %v1885
  %v2272 = vpop.f32.mrf.mxu0
  %v2273 = vadd.f32 %v2253, %v2272
  %2274 = vdwg.mxu0
  %v2275 = vld [vmem:[%s524] sm:$0xff]
  %v2276 = vld [vmem:[%s524 + $0x8] sm:$0xff]
  %v2277 = vld [vmem:[%s524 + $0x10] sm:$0xff]
  %v2278 = vld [vmem:[%s524 + $0x18] sm:$0xff]
  %v2279 = vld [vmem:[%s529] sm:$0x1]
  %v2281 = vperm.slane %v2279, 0
  %2283 = vmatpush.msra.mxu0 0.0
  %2284 = vmatpush.msra.mxu0 0.0
  %2285 = vmatpush.msra.mxu0 0.0
  %2286 = vmatpush.msra.mxu0 0.0
  %2287 = vmatpush.msra.mxu0 0.0
  %2288 = vmatpush.msra.mxu0 0.0
  %2289 = vmatpush.msra.mxu0 0.0
  %2290 = vmatpush.msra.mxu0 0.0
  %2291 = vmatpush.msra.mxu0 0.0
  %2292 = vmatpush.msra.mxu0 0.0
  %2293 = vmatpush.msra.mxu0 0.0
  %2294 = vmatpush.msra.mxu0 0.0
  %2295 = vmatpush.msra.mxu0 %v2278
  %2296 = vmatpush.msra.mxu0 %v2277
  %2297 = vmatpush.msra.mxu0 %v2276
  %2298 = vmatpush.msra.mxu0 %v2275
  %2299 = vmatmul.f32.gmra.mxu0 %v1885
  %v2300 = vpop.f32.mrf.mxu0
  %v2301 = vadd.f32 %v2281, %v2300
  %2302 = vdwg.mxu0
  %v2304 = vsel %vm83, %v2245, 0
  %v2307 = vsel %vm83, %v2273, 0
  %2309 = vmatpush.xpose.msra.mxu0 0.0
  %2310 = vmatpush.xpose.msra.mxu0 0.0
  %2311 = vmatpush.xpose.msra.mxu0 0.0
  %2312 = vmatpush.xpose.msra.mxu0 0.0
  %2313 = vmatpush.xpose.msra.mxu0 0.0
  %2314 = vmatpush.xpose.msra.mxu0 0.0
  %2315 = vmatpush.xpose.msra.mxu0 0.0
  %2316 = vmatpush.xpose.msra.mxu0 0.0
  %2317 = vmatpush.xpose.msra.mxu0 0.0
  %2318 = vmatpush.xpose.msra.mxu0 0.0
  %2319 = vmatpush.xpose.msra.mxu0 0.0
  %2320 = vmatpush.xpose.msra.mxu0 0.0
  %2321 = vmatpush.xpose.msra.mxu0 0.0
  %2322 = vmatpush.xpose.msra.mxu0 0.0
  %2323 = vmatpush.xpose.msra.mxu0 0.0
  %2324 = vmatpush.xpose.msra.mxu0 %v2307
  %2325 = vmatmul.f32.gmra.mxu0 %v2304
  %v2326 = vpop.f32.mrf.mxu0
  %v2327 = vadd.f32 0.0, %v2326
  %2328 = vdwg.mxu0
  %v2329 = vmul.f32 %v2327, 0.35355338
  %v2330 = vsel %vm83, %v2329, -inf
  %2331 = vmax.xlane.f32.xlu0 %v2330
  %v2332 = vpop.xlane.xlu0 %2331
  %v2333 = vsub.f32 %v2329, %v2332
  %v2334 = vmul.f32 %v2333, 1.442695
  %v2335 = vpow.pop %v2334
  %v2336 = vsel %vm83, %v2335, 0.0
  %2337 = vadd.xlane.f32.xlu0 %v2336
  %v2338 = vpop.xlane.xlu0 %2337
  %v2339 = vrcp.pop %v2338
  %v2340 = vmul.f32 %v2335, %v2339
  %v2342 = vsel %vm83, %v2340, 0
  %2344 = vmatpush.msra.mxu0 0.0
  %2345 = vmatpush.msra.mxu0 0.0
  %2346 = vmatpush.msra.mxu0 0.0
  %2347 = vmatpush.msra.mxu0 0.0
  %2348 = vmatpush.msra.mxu0 0.0
  %2349 = vmatpush.msra.mxu0 0.0
  %2350 = vmatpush.msra.mxu0 0.0
  %2351 = vmatpush.msra.mxu0 0.0
  %2352 = vmatpush.msra.mxu0 0.0
  %2353 = vmatpush.msra.mxu0 0.0
  %2354 = vmatpush.msra.mxu0 0.0
  %2355 = vmatpush.msra.mxu0 0.0
  %2356 = vmatpush.msra.mxu0 0.0
  %2357 = vmatpush.msra.mxu0 0.0
  %2358 = vmatpush.msra.mxu0 0.0
  %2359 = vmatpush.msra.mxu0 %v2301
  %2360 = vmatmul.f32.gmra.mxu0 %v2342
  %v2361 = vpop.f32.mrf.mxu0
  %v2362 = vadd.f32 0.0, %v2361
  %2363 = vdwg.mxu0
  %v2364 = vld [vmem:[%s615] sm:$0xff]
  %v2366 = vsel %vm83, %v2362, 0
  %2368 = vmatpush.msra.mxu0 0.0
  %2369 = vmatpush.msra.mxu0 0.0
  %2370 = vmatpush.msra.mxu0 0.0
  %2371 = vmatpush.msra.mxu0 0.0
  %2372 = vmatpush.msra.mxu0 0.0
  %2373 = vmatpush.msra.mxu0 0.0
  %2374 = vmatpush.msra.mxu0 0.0
  %2375 = vmatpush.msra.mxu0 0.0
  %2376 = vmatpush.msra.mxu0 0.0
  %2377 = vmatpush.msra.mxu0 0.0
  %2378 = vmatpush.msra.mxu0 0.0
  %2379 = vmatpush.msra.mxu0 0.0
  %2380 = vmatpush.msra.mxu0 0.0
  %2381 = vmatpush.msra.mxu0 0.0
  %2382 = vmatpush.msra.mxu0 0.0
  %2383 = vmatpush.msra.mxu0 %v2364
  %2384 = vmatmul.f32.gmra.mxu0 %v2366
  %v2385 = vpop.f32.mrf.mxu0
  %v2386 = vadd.f32 0.0, %v2385
  %2387 = vdwg.mxu0
  %v2388 = vadd.f32 %v2218, %v2386
  %v2389 = vld [vmem:[%s641] sm:$0xff]
  %v2390 = vld [vmem:[%s641 + $0x8] sm:$0xff]
  %v2391 = vld [vmem:[%s641 + $0x10] sm:$0xff]
  %v2392 = vld [vmem:[%s641 + $0x18] sm:$0xff]
  %v2393 = vld [vmem:[%s646] sm:$0x1]
  %v2395 = vperm.slane %v2393, 0
  %2397 = vmatpush.msra.mxu0 0.0
  %2398 = vmatpush.msra.mxu0 0.0
  %2399 = vmatpush.msra.mxu0 0.0
  %2400 = vmatpush.msra.mxu0 0.0
  %2401 = vmatpush.msra.mxu0 0.0
  %2402 = vmatpush.msra.mxu0 0.0
  %2403 = vmatpush.msra.mxu0 0.0
  %2404 = vmatpush.msra.mxu0 0.0
  %2405 = vmatpush.msra.mxu0 0.0
  %2406 = vmatpush.msra.mxu0 0.0
  %2407 = vmatpush.msra.mxu0 0.0
  %2408 = vmatpush.msra.mxu0 0.0
  %2409 = vmatpush.msra.mxu0 %v2392
  %2410 = vmatpush.msra.mxu0 %v2391
  %2411 = vmatpush.msra.mxu0 %v2390
  %2412 = vmatpush.msra.mxu0 %v2389
  %2413 = vmatmul.f32.gmra.mxu0 %v1885
  %v2414 = vpop.f32.mrf.mxu0
  %v2415 = vadd.f32 %v2395, %v2414
  %2416 = vdwg.mxu0
  %v2417 = vld [vmem:[%s671] sm:$0xff]
  %v2418 = vld [vmem:[%s671 + $0x8] sm:$0xff]
  %v2419 = vld [vmem:[%s671 + $0x10] sm:$0xff]
  %v2420 = vld [vmem:[%s671 + $0x18] sm:$0xff]
  %v2421 = vld [vmem:[%s676] sm:$0x1]
  %v2423 = vperm.slane %v2421, 0
  %2425 = vmatpush.msra.mxu0 0.0
  %2426 = vmatpush.msra.mxu0 0.0
  %2427 = vmatpush.msra.mxu0 0.0
  %2428 = vmatpush.msra.mxu0 0.0
  %2429 = vmatpush.msra.mxu0 0.0
  %2430 = vmatpush.msra.mxu0 0.0
  %2431 = vmatpush.msra.mxu0 0.0
  %2432 = vmatpush.msra.mxu0 0.0
  %2433 = vmatpush.msra.mxu0 0.0
  %2434 = vmatpush.msra.mxu0 0.0
  %2435 = vmatpush.msra.mxu0 0.0
  %2436 = vmatpush.msra.mxu0 0.0
  %2437 = vmatpush.msra.mxu0 %v2420
  %2438 = vmatpush.msra.mxu0 %v2419
  %2439 = vmatpush.msra.mxu0 %v2418
  %2440 = vmatpush.msra.mxu0 %v2417
  %2441 = vmatmul.f32.gmra.mxu0 %v1885
  %v2442 = vpop.f32.mrf.mxu0
  %v2443 = vadd.f32 %v2423, %v2442
  %2444 = vdwg.mxu0
  %v2445 = vld [vmem:[%s701] sm:$0xff]
  %v2446 = vld [vmem:[%s701 + $0x8] sm:$0xff]
  %v2447 = vld [vmem:[%s701 + $0x10] sm:$0xff]
  %v2448 = vld [vmem:[%s701 + $0x18] sm:$0xff]
  %v2449 = vld [vmem:[%s706] sm:$0x1]
  %v2451 = vperm.slane %v2449, 0
  %2453 = vmatpush.msra.mxu0 0.0
  %2454 = vmatpush.msra.mxu0 0.0
  %2455 = vmatpush.msra.mxu0 0.0
  %2456 = vmatpush.msra.mxu0 0.0
  %2457 = vmatpush.msra.mxu0 0.0
  %2458 = vmatpush.msra.mxu0 0.0
  %2459 = vmatpush.msra.mxu0 0.0
  %2460 = vmatpush.msra.mxu0 0.0
  %2461 = vmatpush.msra.mxu0 0.0
  %2462 = vmatpush.msra.mxu0 0.0
  %2463 = vmatpush.msra.mxu0 0.0
  %2464 = vmatpush.msra.mxu0 0.0
  %2465 = vmatpush.msra.mxu0 %v2448
  %2466 = vmatpush.msra.mxu0 %v2447
  %2467 = vmatpush.msra.mxu0 %v2446
  %2468 = vmatpush.msra.mxu0 %v2445
  %2469 = vmatmul.f32.gmra.mxu0 %v1885
  %v2470 = vpop.f32.mrf.mxu0
  %v2471 = vadd.f32 %v2451, %v2470
  %2472 = vdwg.mxu0
  %v2474 = vsel %vm83, %v2415, 0
  %v2477 = vsel %vm83, %v2443, 0
  %2479 = vmatpush.xpose.msra.mxu0 0.0
  %2480 = vmatpush.xpose.msra.mxu0 0.0
  %2481 = vmatpush.xpose.msra.mxu0 0.0
  %2482 = vmatpush.xpose.msra.mxu0 0.0
  %2483 = vmatpush.xpose.msra.mxu0 0.0
  %2484 = vmatpush.xpose.msra.mxu0 0.0
  %2485 = vmatpush.xpose.msra.mxu0 0.0
  %2486 = vmatpush.xpose.msra.mxu0 0.0
  %2487 = vmatpush.xpose.msra.mxu0 0.0
  %2488 = vmatpush.xpose.msra.mxu0 0.0
  %2489 = vmatpush.xpose.msra.mxu0 0.0
  %2490 = vmatpush.xpose.msra.mxu0 0.0
  %2491 = vmatpush.xpose.msra.mxu0 0.0
  %2492 = vmatpush.xpose.msra.mxu0 0.0
  %2493 = vmatpush.xpose.msra.mxu0 0.0
  %2494 = vmatpush.xpose.msra.mxu0 %v2477
  %2495 = vmatmul.f32.gmra.mxu0 %v2474
  %v2496 = vpop.f32.mrf.mxu0
  %v2497 = vadd.f32 0.0, %v2496
  %2498 = vdwg.mxu0
  %v2499 = vmul.f32 %v2497, 0.35355338
  %v2500 = vsel %vm83, %v2499, -inf
  %2501 = vmax.xlane.f32.xlu0 %v2500
  %v2502 = vpop.xlane.xlu0 %2501
  %v2503 = vsub.f32 %v2499, %v2502
  %v2504 = vmul.f32 %v2503, 1.442695
  %v2505 = vpow.pop %v2504
  %v2506 = vsel %vm83, %v2505, 0.0
  %2507 = vadd.xlane.f32.xlu0 %v2506
  %v2508 = vpop.xlane.xlu0 %2507
  %v2509 = vrcp.pop %v2508
  %v2510 = vmul.f32 %v2505, %v2509
  %v2512 = vsel %vm83, %v2510, 0
  %2514 = vmatpush.msra.mxu0 0.0
  %2515 = vmatpush.msra.mxu0 0.0
  %2516 = vmatpush.msra.mxu0 0.0
  %2517 = vmatpush.msra.mxu0 0.0
  %2518 = vmatpush.msra.mxu0 0.0
  %2519 = vmatpush.msra.mxu0 0.0
  %2520 = vmatpush.msra.mxu0 0.0
  %2521 = vmatpush.msra.mxu0 0.0
  %2522 = vmatpush.msra.mxu0 0.0
  %2523 = vmatpush.msra.mxu0 0.0
  %2524 = vmatpush.msra.mxu0 0.0
  %2525 = vmatpush.msra.mxu0 0.0
  %2526 = vmatpush.msra.mxu0 0.0
  %2527 = vmatpush.msra.mxu0 0.0
  %2528 = vmatpush.msra.mxu0 0.0
  %2529 = vmatpush.msra.mxu0 %v2471
  %2530 = vmatmul.f32.gmra.mxu0 %v2512
  %v2531 = vpop.f32.mrf.mxu0
  %v2532 = vadd.f32 0.0, %v2531
  %2533 = vdwg.mxu0
  %v2534 = vld [vmem:[%s792] sm:$0xff]
  %v2536 = vsel %vm83, %v2532, 0
  %2538 = vmatpush.msra.mxu0 0.0
  %2539 = vmatpush.msra.mxu0 0.0
  %2540 = vmatpush.msra.mxu0 0.0
  %2541 = vmatpush.msra.mxu0 0.0
  %2542 = vmatpush.msra.mxu0 0.0
  %2543 = vmatpush.msra.mxu0 0.0
  %2544 = vmatpush.msra.mxu0 0.0
  %2545 = vmatpush.msra.mxu0 0.0
  %2546 = vmatpush.msra.mxu0 0.0
  %2547 = vmatpush.msra.mxu0 0.0
  %2548 = vmatpush.msra.mxu0 0.0
  %2549 = vmatpush.msra.mxu0 0.0
  %2550 = vmatpush.msra.mxu0 0.0
  %2551 = vmatpush.msra.mxu0 0.0
  %2552 = vmatpush.msra.mxu0 0.0
  %2553 = vmatpush.msra.mxu0 %v2534
  %2554 = vmatmul.f32.gmra.mxu0 %v2536
  %v2555 = vpop.f32.mrf.mxu0
  %v2556 = vadd.f32 0.0, %v2555
  %2557 = vdwg.mxu0
  %v2558 = vadd.f32 %v2388, %v2556
  %v2559 = vsel %vm121, %v2558, 0.0
  %2560 = vadd.xlane.f32.xlu0 %v2559
  %v2561 = vpop.xlane.xlu0 %2560
  %v2562 = vmul.f32 %v2561, %v827
  %v2563 = vsub.f32 %v2558, %v2562
  %v2564 = vmul.f32 %v2563, %v2563
  %v2565 = vsel %vm121, %v2564, 0.0
  %2566 = vadd.xlane.f32.xlu0 %v2565
  %v2567 = vpop.xlane.xlu0 %2566
  %v2568 = vmul.f32 %v2567, %v827
  %v2569 = vadd.f32 %v2568, 1e-05
  %v2570 = vrsqrt.pop %v2569
  %v2571 = vmul.f32 %v2570, %v2569
  %v2572 = vmul.f32 %v2571, %v2570
  %v2573 = vmul.f32 0.5, %v2572
  %v2574 = vsub.f32 1.5, %v2573
  %v2575 = vmul.f32 %v2570, %v2574
  %vm2576 = vweird.f32 %v2569
  %vm2577 = vweird.f32 %v2570
  %vm2578 = vmor %vm2576, %vm2577
  %v2579 = vsel %vm2578, %v2570, %v2575
  %v2580 = vmul.f32 %v2563, %v2579
  %v2581 = vld [vmem:[%s12] sm:$0x1]
  %v2583 = vperm.slane %v2581, 0
  %v2585 = vmul.f32 %v2580, %v2583
  %v2586 = vld [vmem:[%s13] sm:$0x1]
  %v2588 = vperm.slane %v2586, 0
  %v2590 = vadd.f32 %v2585, %v2588
  %v2591 = vld [vmem:[%s14] sm:$0xff]
  %v2592 = vld [vmem:[%s14 + $0x8] sm:$0xff]
  %v2593 = vld [vmem:[%s14 + $0x10] sm:$0xff]
  %v2594 = vld [vmem:[%s14 + $0x18] sm:$0xff]
  %v2595 = vld [vmem:[%s15] sm:$0x1]
  %v2597 = vperm.slane %v2595, 0
  %v2600 = vsel %vm121, %v2590, 0
  %2602 = vmatpush.msra.mxu0 0.0
  %2603 = vmatpush.msra.mxu0 0.0
  %2604 = vmatpush.msra.mxu0 0.0
  %2605 = vmatpush.msra.mxu0 0.0
  %2606 = vmatpush.msra.mxu0 0.0
  %2607 = vmatpush.msra.mxu0 0.0
  %2608 = vmatpush.msra.mxu0 0.0
  %2609 = vmatpush.msra.mxu0 0.0
  %2610 = vmatpush.msra.mxu0 0.0
  %2611 = vmatpush.msra.mxu0 0.0
  %2612 = vmatpush.msra.mxu0 0.0
  %2613 = vmatpush.msra.mxu0 0.0
  %2614 = vmatpush.msra.mxu0 %v2594
  %2615 = vmatpush.msra.mxu0 %v2593
  %2616 = vmatpush.msra.mxu0 %v2592
  %2617 = vmatpush.msra.mxu0 %v2591
  %2618 = vmatmul.f32.gmra.mxu0 %v2600
  %v2619 = vpop.f32.mrf.mxu0
  %v2620 = vadd.f32 %v2597, %v2619
  %2621 = vdwg.mxu0
  %v2622 = vmax.f32 %v2620, 0.0
  %v2623 = vld [vmem:[%s16] sm:$0xff]
  %v2624 = vld [vmem:[%s16 + $0x8] sm:$0xff]
  %v2625 = vld [vmem:[%s16 + $0x10] sm:$0xff]
  %v2626 = vld [vmem:[%s16 + $0x18] sm:$0xff]
  %v2627 = vld [vmem:[%s16 + $0x20] sm:$0xff]
  %v2628 = vld [vmem:[%s16 + $0x28] sm:$0xff]
  %v2629 = vld [vmem:[%s16 + $0x30] sm:$0xff]
  %v2630 = vld [vmem:[%s16 + $0x38] sm:$0xff]
  %v2632 = vsel %vm897, %v2622, 0
  %2634 = vmatpush.msra.mxu0 0.0
  %2635 = vmatpush.msra.mxu0 0.0
  %2636 = vmatpush.msra.mxu0 0.0
  %2637 = vmatpush.msra.mxu0 0.0
  %2638 = vmatpush.msra.mxu0 0.0
  %2639 = vmatpush.msra.mxu0 0.0
  %2640 = vmatpush.msra.mxu0 0.0
  %2641 = vmatpush.msra.mxu0 0.0
  %2642 = vmatpush.msra.mxu0 %v2630
  %2643 = vmatpush.msra.mxu0 %v2629
  %2644 = vmatpush.msra.mxu0 %v2628
  %2645 = vmatpush.msra.mxu0 %v2627
  %2646 = vmatpush.msra.mxu0 %v2626
  %2647 = vmatpush.msra.mxu0 %v2625
  %2648 = vmatpush.msra.mxu0 %v2624
  %2649 = vmatpush.msra.mxu0 %v2623
  %2650 = vmatmul.f32.gmra.mxu0 %v2632
  %v2651 = vpop.f32.mrf.mxu0
  %v2652 = vadd.f32 0.0, %v2651
  %2653 = vdwg.mxu0
  %v2654 = vadd.f32 %v2590, %v2652
  %v2655 = vld [vmem:[%s17] sm:$0x1]
  %v2657 = vperm.slane %v2655, 0
  %v2659 = vadd.f32 %v2654, %v2657
  %v2660 = vsel %vm121, %v2659, 0.0
  %2661 = vadd.xlane.f32.xlu0 %v2660
  %v2662 = vpop.xlane.xlu0 %2661
  %v2663 = vmul.f32 %v2662, %v827
  %v2664 = vsub.f32 %v2659, %v2663
  %v2665 = vmul.f32 %v2664, %v2664
  %v2666 = vsel %vm121, %v2665, 0.0
  %2667 = vadd.xlane.f32.xlu0 %v2666
  %v2668 = vpop.xlane.xlu0 %2667
  %v2669 = vmul.f32 %v2668, %v827
  %v2670 = vadd.f32 %v2669, 1e-05
  %v2671 = vrsqrt.pop %v2670
  %v2672 = vmul.f32 %v2671, %v2670
  %v2673 = vmul.f32 %v2672, %v2671
  %v2674 = vmul.f32 0.5, %v2673
  %v2675 = vsub.f32 1.5, %v2674
  %v2676 = vmul.f32 %v2671, %v2675
  %vm2677 = vweird.f32 %v2670
  %vm2678 = vweird.f32 %v2671
  %vm2679 = vmor %vm2677, %vm2678
  %v2680 = vsel %vm2679, %v2671, %v2676
  %v2681 = vmul.f32 %v2664, %v2680
  %v2682 = vld [vmem:[%s18] sm:$0x1]
  %v2684 = vperm.slane %v2682, 0
  %v2686 = vmul.f32 %v2681, %v2684
  %v2687 = vld [vmem:[%s19] sm:$0x1]
  %v2689 = vperm.slane %v2687, 0
  %v2691 = vadd.f32 %v2686, %v2689
  %v2692 = vld [vmem:[%s959] sm:$0x1]
  %v2694 = vperm.slane %v2692, 0
  %v2696 = vadd.f32 %v2691, %v2694
  %v2697 = vld [vmem:[%s965] sm:$0xff]
  %v2698 = vld [vmem:[%s965 + $0x8] sm:$0xff]
  %v2699 = vld [vmem:[%s965 + $0x10] sm:$0xff]
  %v2700 = vld [vmem:[%s965 + $0x18] sm:$0xff]
  %v2701 = vld [vmem:[%s970] sm:$0x1]
  %v2703 = vperm.slane %v2701, 0
  %v2706 = vsel %vm121, %v2691, 0
  %2708 = vmatpush.msra.mxu0 0.0
  %2709 = vmatpush.msra.mxu0 0.0
  %2710 = vmatpush.msra.mxu0 0.0
  %2711 = vmatpush.msra.mxu0 0.0
  %2712 = vmatpush.msra.mxu0 0.0
  %2713 = vmatpush.msra.mxu0 0.0
  %2714 = vmatpush.msra.mxu0 0.0
  %2715 = vmatpush.msra.mxu0 0.0
  %2716 = vmatpush.msra.mxu0 0.0
  %2717 = vmatpush.msra.mxu0 0.0
  %2718 = vmatpush.msra.mxu0 0.0
  %2719 = vmatpush.msra.mxu0 0.0
  %2720 = vmatpush.msra.mxu0 %v2700
  %2721 = vmatpush.msra.mxu0 %v2699
  %2722 = vmatpush.msra.mxu0 %v2698
  %2723 = vmatpush.msra.mxu0 %v2697
  %2724 = vmatmul.f32.gmra.mxu0 %v2706
  %v2725 = vpop.f32.mrf.mxu0
  %v2726 = vadd.f32 %v2703, %v2725
  %2727 = vdwg.mxu0
  %v2728 = vld [vmem:[%s998] sm:$0xff]
  %v2729 = vld [vmem:[%s998 + $0x8] sm:$0xff]
  %v2730 = vld [vmem:[%s998 + $0x10] sm:$0xff]
  %v2731 = vld [vmem:[%s998 + $0x18] sm:$0xff]
  %v2732 = vld [vmem:[%s1003] sm:$0x1]
  %v2734 = vperm.slane %v2732, 0
  %2736 = vmatpush.msra.mxu0 0.0
  %2737 = vmatpush.msra.mxu0 0.0
  %2738 = vmatpush.msra.mxu0 0.0
  %2739 = vmatpush.msra.mxu0 0.0
  %2740 = vmatpush.msra.mxu0 0.0
  %2741 = vmatpush.msra.mxu0 0.0
  %2742 = vmatpush.msra.mxu0 0.0
  %2743 = vmatpush.msra.mxu0 0.0
  %2744 = vmatpush.msra.mxu0 0.0
  %2745 = vmatpush.msra.mxu0 0.0
  %2746 = vmatpush.msra.mxu0 0.0
  %2747 = vmatpush.msra.mxu0 0.0
  %2748 = vmatpush.msra.mxu0 %v2731
  %2749 = vmatpush.msra.mxu0 %v2730
  %2750 = vmatpush.msra.mxu0 %v2729
  %2751 = vmatpush.msra.mxu0 %v2728
  %2752 = vmatmul.f32.gmra.mxu0 %v2706
  %v2753 = vpop.f32.mrf.mxu0
  %v2754 = vadd.f32 %v2734, %v2753
  %2755 = vdwg.mxu0
  %v2756 = vld [vmem:[%s1028] sm:$0xff]
  %v2757 = vld [vmem:[%s1028 + $0x8] sm:$0xff]
  %v2758 = vld [vmem:[%s1028 + $0x10] sm:$0xff]
  %v2759 = vld [vmem:[%s1028 + $0x18] sm:$0xff]
  %v2760 = vld [vmem:[%s1033] sm:$0x1]
  %v2762 = vperm.slane %v2760, 0
  %2764 = vmatpush.msra.mxu0 0.0
  %2765 = vmatpush.msra.mxu0 0.0
  %2766 = vmatpush.msra.mxu0 0.0
  %2767 = vmatpush.msra.mxu0 0.0
  %2768 = vmatpush.msra.mxu0 0.0
  %2769 = vmatpush.msra.mxu0 0.0
  %2770 = vmatpush.msra.mxu0 0.0
  %2771 = vmatpush.msra.mxu0 0.0
  %2772 = vmatpush.msra.mxu0 0.0
  %2773 = vmatpush.msra.mxu0 0.0
  %2774 = vmatpush.msra.mxu0 0.0
  %2775 = vmatpush.msra.mxu0 0.0
  %2776 = vmatpush.msra.mxu0 %v2759
  %2777 = vmatpush.msra.mxu0 %v2758
  %2778 = vmatpush.msra.mxu0 %v2757
  %2779 = vmatpush.msra.mxu0 %v2756
  %2780 = vmatmul.f32.gmra.mxu0 %v2706
  %v2781 = vpop.f32.mrf.mxu0
  %v2782 = vadd.f32 %v2762, %v2781
  %2783 = vdwg.mxu0
  %v2785 = vsel %vm83, %v2726, 0
  %v2788 = vsel %vm83, %v2754, 0
  %2790 = vmatpush.xpose.msra.mxu0 0.0
  %2791 = vmatpush.xpose.msra.mxu0 0.0
  %2792 = vmatpush.xpose.msra.mxu0 0.0
  %2793 = vmatpush.xpose.msra.mxu0 0.0
  %2794 = vmatpush.xpose.msra.mxu0 0.0
  %2795 = vmatpush.xpose.msra.mxu0 0.0
  %2796 = vmatpush.xpose.msra.mxu0 0.0
  %2797 = vmatpush.xpose.msra.mxu0 0.0
  %2798 = vmatpush.xpose.msra.mxu0 0.0
  %2799 = vmatpush.xpose.msra.mxu0 0.0
  %2800 = vmatpush.xpose.msra.mxu0 0.0
  %2801 = vmatpush.xpose.msra.mxu0 0.0
  %2802 = vmatpush.xpose.msra.mxu0 0.0
  %2803 = vmatpush.xpose.msra.mxu0 0.0
  %2804 = vmatpush.xpose.msra.mxu0 0.0
  %2805 = vmatpush.xpose.msra.mxu0 %v2788
  %2806 = vmatmul.f32.gmra.mxu0 %v2785
  %v2807 = vpop.f32.mrf.mxu0
  %v2808 = vadd.f32 0.0, %v2807
  %2809 = vdwg.mxu0
  %v2810 = vmul.f32 %v2808, 0.35355338
  %v2811 = vsel %vm83, %v2810, -inf
  %2812 = vmax.xlane.f32.xlu0 %v2811
  %v2813 = vpop.xlane.xlu0 %2812
  %v2814 = vsub.f32 %v2810, %v2813
  %v2815 = vmul.f32 %v2814, 1.442695
  %v2816 = vpow.pop %v2815
  %v2817 = vsel %vm83, %v2816, 0.0
  %2818 = vadd.xlane.f32.xlu0 %v2817
  %v2819 = vpop.xlane.xlu0 %2818
  %v2820 = vrcp.pop %v2819
  %v2821 = vmul.f32 %v2816, %v2820
  %v2823 = vsel %vm83, %v2821, 0
  %2825 = vmatpush.msra.mxu0 0.0
  %2826 = vmatpush.msra.mxu0 0.0
  %2827 = vmatpush.msra.mxu0 0.0
  %2828 = vmatpush.msra.mxu0 0.0
  %2829 = vmatpush.msra.mxu0 0.0
  %2830 = vmatpush.msra.mxu0 0.0
  %2831 = vmatpush.msra.mxu0 0.0
  %2832 = vmatpush.msra.mxu0 0.0
  %2833 = vmatpush.msra.mxu0 0.0
  %2834 = vmatpush.msra.mxu0 0.0
  %2835 = vmatpush.msra.mxu0 0.0
  %2836 = vmatpush.msra.mxu0 0.0
  %2837 = vmatpush.msra.mxu0 0.0
  %2838 = vmatpush.msra.mxu0 0.0
  %2839 = vmatpush.msra.mxu0 0.0
  %2840 = vmatpush.msra.mxu0 %v2782
  %2841 = vmatmul.f32.gmra.mxu0 %v2823
  %v2842 = vpop.f32.mrf.mxu0
  %v2843 = vadd.f32 0.0, %v2842
  %2844 = vdwg.mxu0
  %v2845 = vld [vmem:[%s1119] sm:$0xff]
  %v2847 = vsel %vm83, %v2843, 0
  %2849 = vmatpush.msra.mxu0 0.0
  %2850 = vmatpush.msra.mxu0 0.0
  %2851 = vmatpush.msra.mxu0 0.0
  %2852 = vmatpush.msra.mxu0 0.0
  %2853 = vmatpush.msra.mxu0 0.0
  %2854 = vmatpush.msra.mxu0 0.0
  %2855 = vmatpush.msra.mxu0 0.0
  %2856 = vmatpush.msra.mxu0 0.0
  %2857 = vmatpush.msra.mxu0 0.0
  %2858 = vmatpush.msra.mxu0 0.0
  %2859 = vmatpush.msra.mxu0 0.0
  %2860 = vmatpush.msra.mxu0 0.0
  %2861 = vmatpush.msra.mxu0 0.0
  %2862 = vmatpush.msra.mxu0 0.0
  %2863 = vmatpush.msra.mxu0 0.0
  %2864 = vmatpush.msra.mxu0 %v2845
  %2865 = vmatmul.f32.gmra.mxu0 %v2847
  %v2866 = vpop.f32.mrf.mxu0
  %v2867 = vadd.f32 0.0, %v2866
  %2868 = vdwg.mxu0
  %v2869 = vadd.f32 %v2696, %v2867
  %v2870 = vld [vmem:[%s1145] sm:$0xff]
  %v2871 = vld [vmem:[%s1145 + $0x8] sm:$0xff]
  %v2872 = vld [vmem:[%s1145 + $0x10] sm:$0xff]
  %v2873 = vld [vmem:[%s1145 + $0x18] sm:$0xff]
  %v2874 = vld [vmem:[%s1150] sm:$0x1]
  %v2876 = vperm.slane %v2874, 0
  %2878 = vmatpush.msra.mxu0 0.0
  %2879 = vmatpush.msra.mxu0 0.0
  %2880 = vmatpush.msra.mxu0 0.0
  %2881 = vmatpush.msra.mxu0 0.0
  %2882 = vmatpush.msra.mxu0 0.0
  %2883 = vmatpush.msra.mxu0 0.0
  %2884 = vmatpush.msra.mxu0 0.0
  %2885 = vmatpush.msra.mxu0 0.0
  %2886 = vmatpush.msra.mxu0 0.0
  %2887 = vmatpush.msra.mxu0 0.0
  %2888 = vmatpush.msra.mxu0 0.0
  %2889 = vmatpush.msra.mxu0 0.0
  %2890 = vmatpush.msra.mxu0 %v2873
  %2891 = vmatpush.msra.mxu0 %v2872
  %2892 = vmatpush.msra.mxu0 %v2871
  %2893 = vmatpush.msra.mxu0 %v2870
  %2894 = vmatmul.f32.gmra.mxu0 %v2706
  %v2895 = vpop.f32.mrf.mxu0
  %v2896 = vadd.f32 %v2876, %v2895
  %2897 = vdwg.mxu0
  %v2898 = vld [vmem:[%s1175] sm:$0xff]
  %v2899 = vld [vmem:[%s1175 + $0x8] sm:$0xff]
  %v2900 = vld [vmem:[%s1175 + $0x10] sm:$0xff]
  %v2901 = vld [vmem:[%s1175 + $0x18] sm:$0xff]
  %v2902 = vld [vmem:[%s1180] sm:$0x1]
  %v2904 = vperm.slane %v2902, 0
  %2906 = vmatpush.msra.mxu0 0.0
  %2907 = vmatpush.msra.mxu0 0.0
  %2908 = vmatpush.msra.mxu0 0.0
  %2909 = vmatpush.msra.mxu0 0.0
  %2910 = vmatpush.msra.mxu0 0.0
  %2911 = vmatpush.msra.mxu0 0.0
  %2912 = vmatpush.msra.mxu0 0.0
  %2913 = vmatpush.msra.mxu0 0.0
  %2914 = vmatpush.msra.mxu0 0.0
  %2915 = vmatpush.msra.mxu0 0.0
  %2916 = vmatpush.msra.mxu0 0.0
  %2917 = vmatpush.msra.mxu0 0.0
  %2918 = vmatpush.msra.mxu0 %v2901
  %2919 = vmatpush.msra.mxu0 %v2900
  %2920 = vmatpush.msra.mxu0 %v2899
  %2921 = vmatpush.msra.mxu0 %v2898
  %2922 = vmatmul.f32.gmra.mxu0 %v2706
  %v2923 = vpop.f32.mrf.mxu0
  %v2924 = vadd.f32 %v2904, %v2923
  %2925 = vdwg.mxu0
  %v2926 = vld [vmem:[%s1205] sm:$0xff]
  %v2927 = vld [vmem:[%s1205 + $0x8] sm:$0xff]
  %v2928 = vld [vmem:[%s1205 + $0x10] sm:$0xff]
  %v2929 = vld [vmem:[%s1205 + $0x18] sm:$0xff]
  %v2930 = vld [vmem:[%s1210] sm:$0x1]
  %v2932 = vperm.slane %v2930, 0
  %2934 = vmatpush.msra.mxu0 0.0
  %2935 = vmatpush.msra.mxu0 0.0
  %2936 = vmatpush.msra.mxu0 0.0
  %2937 = vmatpush.msra.mxu0 0.0
  %2938 = vmatpush.msra.mxu0 0.0
  %2939 = vmatpush.msra.mxu0 0.0
  %2940 = vmatpush.msra.mxu0 0.0
  %2941 = vmatpush.msra.mxu0 0.0
  %2942 = vmatpush.msra.mxu0 0.0
  %2943 = vmatpush.msra.mxu0 0.0
  %2944 = vmatpush.msra.mxu0 0.0
  %2945 = vmatpush.msra.mxu0 0.0
  %2946 = vmatpush.msra.mxu0 %v2929
  %2947 = vmatpush.msra.mxu0 %v2928
  %2948 = vmatpush.msra.mxu0 %v2927
  %2949 = vmatpush.msra.mxu0 %v2926
  %2950 = vmatmul.f32.gmra.mxu0 %v2706
  %v2951 = vpop.f32.mrf.mxu0
  %v2952 = vadd.f32 %v2932, %v2951
  %2953 = vdwg.mxu0
  %v2955 = vsel %vm83, %v2896, 0
  %v2958 = vsel %vm83, %v2924, 0
  %2960 = vmatpush.xpose.msra.mxu0 0.0
  %2961 = vmatpush.xpose.msra.mxu0 0.0
  %2962 = vmatpush.xpose.msra.mxu0 0.0
  %2963 = vmatpush.xpose.msra.mxu0 0.0
  %2964 = vmatpush.xpose.msra.mxu0 0.0
  %2965 = vmatpush.xpose.msra.mxu0 0.0
  %2966 = vmatpush.xpose.msra.mxu0 0.0
  %2967 = vmatpush.xpose.msra.mxu0 0.0
  %2968 = vmatpush.xpose.msra.mxu0 0.0
  %2969 = vmatpush.xpose.msra.mxu0 0.0
  %2970 = vmatpush.xpose.msra.mxu0 0.0
  %2971 = vmatpush.xpose.msra.mxu0 0.0
  %2972 = vmatpush.xpose.msra.mxu0 0.0
  %2973 = vmatpush.xpose.msra.mxu0 0.0
  %2974 = vmatpush.xpose.msra.mxu0 0.0
  %2975 = vmatpush.xpose.msra.mxu0 %v2958
  %2976 = vmatmul.f32.gmra.mxu0 %v2955
  %v2977 = vpop.f32.mrf.mxu0
  %v2978 = vadd.f32 0.0, %v2977
  %2979 = vdwg.mxu0
  %v2980 = vmul.f32 %v2978, 0.35355338
  %v2981 = vsel %vm83, %v2980, -inf
  %2982 = vmax.xlane.f32.xlu0 %v2981
  %v2983 = vpop.xlane.xlu0 %2982
  %v2984 = vsub.f32 %v2980, %v2983
  %v2985 = vmul.f32 %v2984, 1.442695
  %v2986 = vpow.pop %v2985
  %v2987 = vsel %vm83, %v2986, 0.0
  %2988 = vadd.xlane.f32.xlu0 %v2987
  %v2989 = vpop.xlane.xlu0 %2988
  %v2990 = vrcp.pop %v2989
  %v2991 = vmul.f32 %v2986, %v2990
  %v2993 = vsel %vm83, %v2991, 0
  %2995 = vmatpush.msra.mxu0 0.0
  %2996 = vmatpush.msra.mxu0 0.0
  %2997 = vmatpush.msra.mxu0 0.0
  %2998 = vmatpush.msra.mxu0 0.0
  %2999 = vmatpush.msra.mxu0 0.0
  %3000 = vmatpush.msra.mxu0 0.0
  %3001 = vmatpush.msra.mxu0 0.0
  %3002 = vmatpush.msra.mxu0 0.0
  %3003 = vmatpush.msra.mxu0 0.0
  %3004 = vmatpush.msra.mxu0 0.0
  %3005 = vmatpush.msra.mxu0 0.0
  %3006 = vmatpush.msra.mxu0 0.0
  %3007 = vmatpush.msra.mxu0 0.0
  %3008 = vmatpush.msra.mxu0 0.0
  %3009 = vmatpush.msra.mxu0 0.0
  %3010 = vmatpush.msra.mxu0 %v2952
  %3011 = vmatmul.f32.gmra.mxu0 %v2993
  %v3012 = vpop.f32.mrf.mxu0
  %v3013 = vadd.f32 0.0, %v3012
  %3014 = vdwg.mxu0
  %v3015 = vld [vmem:[%s1296] sm:$0xff]
  %v3017 = vsel %vm83, %v3013, 0
  %3019 = vmatpush.msra.mxu0 0.0
  %3020 = vmatpush.msra.mxu0 0.0
  %3021 = vmatpush.msra.mxu0 0.0
  %3022 = vmatpush.msra.mxu0 0.0
  %3023 = vmatpush.msra.mxu0 0.0
  %3024 = vmatpush.msra.mxu0 0.0
  %3025 = vmatpush.msra.mxu0 0.0
  %3026 = vmatpush.msra.mxu0 0.0
  %3027 = vmatpush.msra.mxu0 0.0
  %3028 = vmatpush.msra.mxu0 0.0
  %3029 = vmatpush.msra.mxu0 0.0
  %3030 = vmatpush.msra.mxu0 0.0
  %3031 = vmatpush.msra.mxu0 0.0
  %3032 = vmatpush.msra.mxu0 0.0
  %3033 = vmatpush.msra.mxu0 0.0
  %3034 = vmatpush.msra.mxu0 %v3015
  %3035 = vmatmul.f32.gmra.mxu0 %v3017
  %v3036 = vpop.f32.mrf.mxu0
  %v3037 = vadd.f32 0.0, %v3036
  %3038 = vdwg.mxu0
  %v3039 = vadd.f32 %v2869, %v3037
  %v3040 = vld [vmem:[%s1322] sm:$0xff]
  %v3041 = vld [vmem:[%s1322 + $0x8] sm:$0xff]
  %v3042 = vld [vmem:[%s1322 + $0x10] sm:$0xff]
  %v3043 = vld [vmem:[%s1322 + $0x18] sm:$0xff]
  %v3044 = vld [vmem:[%s1327] sm:$0x1]
  %v3046 = vperm.slane %v3044, 0
  %3048 = vmatpush.msra.mxu0 0.0
  %3049 = vmatpush.msra.mxu0 0.0
  %3050 = vmatpush.msra.mxu0 0.0
  %3051 = vmatpush.msra.mxu0 0.0
  %3052 = vmatpush.msra.mxu0 0.0
  %3053 = vmatpush.msra.mxu0 0.0
  %3054 = vmatpush.msra.mxu0 0.0
  %3055 = vmatpush.msra.mxu0 0.0
  %3056 = vmatpush.msra.mxu0 0.0
  %3057 = vmatpush.msra.mxu0 0.0
  %3058 = vmatpush.msra.mxu0 0.0
  %3059 = vmatpush.msra.mxu0 0.0
  %3060 = vmatpush.msra.mxu0 %v3043
  %3061 = vmatpush.msra.mxu0 %v3042
  %3062 = vmatpush.msra.mxu0 %v3041
  %3063 = vmatpush.msra.mxu0 %v3040
  %3064 = vmatmul.f32.gmra.mxu0 %v2706
  %v3065 = vpop.f32.mrf.mxu0
  %v3066 = vadd.f32 %v3046, %v3065
  %3067 = vdwg.mxu0
  %v3068 = vld [vmem:[%s1352] sm:$0xff]
  %v3069 = vld [vmem:[%s1352 + $0x8] sm:$0xff]
  %v3070 = vld [vmem:[%s1352 + $0x10] sm:$0xff]
  %v3071 = vld [vmem:[%s1352 + $0x18] sm:$0xff]
  %v3072 = vld [vmem:[%s1357] sm:$0x1]
  %v3074 = vperm.slane %v3072, 0
  %3076 = vmatpush.msra.mxu0 0.0
  %3077 = vmatpush.msra.mxu0 0.0
  %3078 = vmatpush.msra.mxu0 0.0
  %3079 = vmatpush.msra.mxu0 0.0
  %3080 = vmatpush.msra.mxu0 0.0
  %3081 = vmatpush.msra.mxu0 0.0
  %3082 = vmatpush.msra.mxu0 0.0
  %3083 = vmatpush.msra.mxu0 0.0
  %3084 = vmatpush.msra.mxu0 0.0
  %3085 = vmatpush.msra.mxu0 0.0
  %3086 = vmatpush.msra.mxu0 0.0
  %3087 = vmatpush.msra.mxu0 0.0
  %3088 = vmatpush.msra.mxu0 %v3071
  %3089 = vmatpush.msra.mxu0 %v3070
  %3090 = vmatpush.msra.mxu0 %v3069
  %3091 = vmatpush.msra.mxu0 %v3068
  %3092 = vmatmul.f32.gmra.mxu0 %v2706
  %v3093 = vpop.f32.mrf.mxu0
  %v3094 = vadd.f32 %v3074, %v3093
  %3095 = vdwg.mxu0
  %v3096 = vld [vmem:[%s1382] sm:$0xff]
  %v3097 = vld [vmem:[%s1382 + $0x8] sm:$0xff]
  %v3098 = vld [vmem:[%s1382 + $0x10] sm:$0xff]
  %v3099 = vld [vmem:[%s1382 + $0x18] sm:$0xff]
  %v3100 = vld [vmem:[%s1387] sm:$0x1]
  %v3102 = vperm.slane %v3100, 0
  %3104 = vmatpush.msra.mxu0 0.0
  %3105 = vmatpush.msra.mxu0 0.0
  %3106 = vmatpush.msra.mxu0 0.0
  %3107 = vmatpush.msra.mxu0 0.0
  %3108 = vmatpush.msra.mxu0 0.0
  %3109 = vmatpush.msra.mxu0 0.0
  %3110 = vmatpush.msra.mxu0 0.0
  %3111 = vmatpush.msra.mxu0 0.0
  %3112 = vmatpush.msra.mxu0 0.0
  %3113 = vmatpush.msra.mxu0 0.0
  %3114 = vmatpush.msra.mxu0 0.0
  %3115 = vmatpush.msra.mxu0 0.0
  %3116 = vmatpush.msra.mxu0 %v3099
  %3117 = vmatpush.msra.mxu0 %v3098
  %3118 = vmatpush.msra.mxu0 %v3097
  %3119 = vmatpush.msra.mxu0 %v3096
  %3120 = vmatmul.f32.gmra.mxu0 %v2706
  %v3121 = vpop.f32.mrf.mxu0
  %v3122 = vadd.f32 %v3102, %v3121
  %3123 = vdwg.mxu0
  %v3125 = vsel %vm83, %v3066, 0
  %v3128 = vsel %vm83, %v3094, 0
  %3130 = vmatpush.xpose.msra.mxu0 0.0
  %3131 = vmatpush.xpose.msra.mxu0 0.0
  %3132 = vmatpush.xpose.msra.mxu0 0.0
  %3133 = vmatpush.xpose.msra.mxu0 0.0
  %3134 = vmatpush.xpose.msra.mxu0 0.0
  %3135 = vmatpush.xpose.msra.mxu0 0.0
  %3136 = vmatpush.xpose.msra.mxu0 0.0
  %3137 = vmatpush.xpose.msra.mxu0 0.0
  %3138 = vmatpush.xpose.msra.mxu0 0.0
  %3139 = vmatpush.xpose.msra.mxu0 0.0
  %3140 = vmatpush.xpose.msra.mxu0 0.0
  %3141 = vmatpush.xpose.msra.mxu0 0.0
  %3142 = vmatpush.xpose.msra.mxu0 0.0
  %3143 = vmatpush.xpose.msra.mxu0 0.0
  %3144 = vmatpush.xpose.msra.mxu0 0.0
  %3145 = vmatpush.xpose.msra.mxu0 %v3128
  %3146 = vmatmul.f32.gmra.mxu0 %v3125
  %v3147 = vpop.f32.mrf.mxu0
  %v3148 = vadd.f32 0.0, %v3147
  %3149 = vdwg.mxu0
  %v3150 = vmul.f32 %v3148, 0.35355338
  %v3151 = vsel %vm83, %v3150, -inf
  %3152 = vmax.xlane.f32.xlu0 %v3151
  %v3153 = vpop.xlane.xlu0 %3152
  %v3154 = vsub.f32 %v3150, %v3153
  %v3155 = vmul.f32 %v3154, 1.442695
  %v3156 = vpow.pop %v3155
  %v3157 = vsel %vm83, %v3156, 0.0
  %3158 = vadd.xlane.f32.xlu0 %v3157
  %v3159 = vpop.xlane.xlu0 %3158
  %v3160 = vrcp.pop %v3159
  %v3161 = vmul.f32 %v3156, %v3160
  %v3163 = vsel %vm83, %v3161, 0
  %3165 = vmatpush.msra.mxu0 0.0
  %3166 = vmatpush.msra.mxu0 0.0
  %3167 = vmatpush.msra.mxu0 0.0
  %3168 = vmatpush.msra.mxu0 0.0
  %3169 = vmatpush.msra.mxu0 0.0
  %3170 = vmatpush.msra.mxu0 0.0
  %3171 = vmatpush.msra.mxu0 0.0
  %3172 = vmatpush.msra.mxu0 0.0
  %3173 = vmatpush.msra.mxu0 0.0
  %3174 = vmatpush.msra.mxu0 0.0
  %3175 = vmatpush.msra.mxu0 0.0
  %3176 = vmatpush.msra.mxu0 0.0
  %3177 = vmatpush.msra.mxu0 0.0
  %3178 = vmatpush.msra.mxu0 0.0
  %3179 = vmatpush.msra.mxu0 0.0
  %3180 = vmatpush.msra.mxu0 %v3122
  %3181 = vmatmul.f32.gmra.mxu0 %v3163
  %v3182 = vpop.f32.mrf.mxu0
  %v3183 = vadd.f32 0.0, %v3182
  %3184 = vdwg.mxu0
  %v3185 = vld [vmem:[%s1473] sm:$0xff]
  %v3187 = vsel %vm83, %v3183, 0
  %3189 = vmatpush.msra.mxu0 0.0
  %3190 = vmatpush.msra.mxu0 0.0
  %3191 = vmatpush.msra.mxu0 0.0
  %3192 = vmatpush.msra.mxu0 0.0
  %3193 = vmatpush.msra.mxu0 0.0
  %3194 = vmatpush.msra.mxu0 0.0
  %3195 = vmatpush.msra.mxu0 0.0
  %3196 = vmatpush.msra.mxu0 0.0
  %3197 = vmatpush.msra.mxu0 0.0
  %3198 = vmatpush.msra.mxu0 0.0
  %3199 = vmatpush.msra.mxu0 0.0
  %3200 = vmatpush.msra.mxu0 0.0
  %3201 = vmatpush.msra.mxu0 0.0
  %3202 = vmatpush.msra.mxu0 0.0
  %3203 = vmatpush.msra.mxu0 0.0
  %3204 = vmatpush.msra.mxu0 %v3185
  %3205 = vmatmul.f32.gmra.mxu0 %v3187
  %v3206 = vpop.f32.mrf.mxu0
  %v3207 = vadd.f32 0.0, %v3206
  %3208 = vdwg.mxu0
  %v3209 = vadd.f32 %v3039, %v3207
  %v3210 = vld [vmem:[%s1499] sm:$0xff]
  %v3211 = vld [vmem:[%s1499 + $0x8] sm:$0xff]
  %v3212 = vld [vmem:[%s1499 + $0x10] sm:$0xff]
  %v3213 = vld [vmem:[%s1499 + $0x18] sm:$0xff]
  %v3214 = vld [vmem:[%s1504] sm:$0x1]
  %v3216 = vperm.slane %v3214, 0
  %3218 = vmatpush.msra.mxu0 0.0
  %3219 = vmatpush.msra.mxu0 0.0
  %3220 = vmatpush.msra.mxu0 0.0
  %3221 = vmatpush.msra.mxu0 0.0
  %3222 = vmatpush.msra.mxu0 0.0
  %3223 = vmatpush.msra.mxu0 0.0
  %3224 = vmatpush.msra.mxu0 0.0
  %3225 = vmatpush.msra.mxu0 0.0
  %3226 = vmatpush.msra.mxu0 0.0
  %3227 = vmatpush.msra.mxu0 0.0
  %3228 = vmatpush.msra.mxu0 0.0
  %3229 = vmatpush.msra.mxu0 0.0
  %3230 = vmatpush.msra.mxu0 %v3213
  %3231 = vmatpush.msra.mxu0 %v3212
  %3232 = vmatpush.msra.mxu0 %v3211
  %3233 = vmatpush.msra.mxu0 %v3210
  %3234 = vmatmul.f32.gmra.mxu0 %v2706
  %v3235 = vpop.f32.mrf.mxu0
  %v3236 = vadd.f32 %v3216, %v3235
  %3237 = vdwg.mxu0
  %v3238 = vld [vmem:[%s1529] sm:$0xff]
  %v3239 = vld [vmem:[%s1529 + $0x8] sm:$0xff]
  %v3240 = vld [vmem:[%s1529 + $0x10] sm:$0xff]
  %v3241 = vld [vmem:[%s1529 + $0x18] sm:$0xff]
  %v3242 = vld [vmem:[%s1534] sm:$0x1]
  %v3244 = vperm.slane %v3242, 0
  %3246 = vmatpush.msra.mxu0 0.0
  %3247 = vmatpush.msra.mxu0 0.0
  %3248 = vmatpush.msra.mxu0 0.0
  %3249 = vmatpush.msra.mxu0 0.0
  %3250 = vmatpush.msra.mxu0 0.0
  %3251 = vmatpush.msra.mxu0 0.0
  %3252 = vmatpush.msra.mxu0 0.0
  %3253 = vmatpush.msra.mxu0 0.0
  %3254 = vmatpush.msra.mxu0 0.0
  %3255 = vmatpush.msra.mxu0 0.0
  %3256 = vmatpush.msra.mxu0 0.0
  %3257 = vmatpush.msra.mxu0 0.0
  %3258 = vmatpush.msra.mxu0 %v3241
  %3259 = vmatpush.msra.mxu0 %v3240
  %3260 = vmatpush.msra.mxu0 %v3239
  %3261 = vmatpush.msra.mxu0 %v3238
  %3262 = vmatmul.f32.gmra.mxu0 %v2706
  %v3263 = vpop.f32.mrf.mxu0
  %v3264 = vadd.f32 %v3244, %v3263
  %3265 = vdwg.mxu0
  %v3266 = vld [vmem:[%s1559] sm:$0xff]
  %v3267 = vld [vmem:[%s1559 + $0x8] sm:$0xff]
  %v3268 = vld [vmem:[%s1559 + $0x10] sm:$0xff]
  %v3269 = vld [vmem:[%s1559 + $0x18] sm:$0xff]
  %v3270 = vld [vmem:[%s1564] sm:$0x1]
  %v3272 = vperm.slane %v3270, 0
  %3274 = vmatpush.msra.mxu0 0.0
  %3275 = vmatpush.msra.mxu0 0.0
  %3276 = vmatpush.msra.mxu0 0.0
  %3277 = vmatpush.msra.mxu0 0.0
  %3278 = vmatpush.msra.mxu0 0.0
  %3279 = vmatpush.msra.mxu0 0.0
  %3280 = vmatpush.msra.mxu0 0.0
  %3281 = vmatpush.msra.mxu0 0.0
  %3282 = vmatpush.msra.mxu0 0.0
  %3283 = vmatpush.msra.mxu0 0.0
  %3284 = vmatpush.msra.mxu0 0.0
  %3285 = vmatpush.msra.mxu0 0.0
  %3286 = vmatpush.msra.mxu0 %v3269
  %3287 = vmatpush.msra.mxu0 %v3268
  %3288 = vmatpush.msra.mxu0 %v3267
  %3289 = vmatpush.msra.mxu0 %v3266
  %3290 = vmatmul.f32.gmra.mxu0 %v2706
  %v3291 = vpop.f32.mrf.mxu0
  %v3292 = vadd.f32 %v3272, %v3291
  %3293 = vdwg.mxu0
  %v3295 = vsel %vm83, %v3236, 0
  %v3298 = vsel %vm83, %v3264, 0
  %3300 = vmatpush.xpose.msra.mxu0 0.0
  %3301 = vmatpush.xpose.msra.mxu0 0.0
  %3302 = vmatpush.xpose.msra.mxu0 0.0
  %3303 = vmatpush.xpose.msra.mxu0 0.0
  %3304 = vmatpush.xpose.msra.mxu0 0.0
  %3305 = vmatpush.xpose.msra.mxu0 0.0
  %3306 = vmatpush.xpose.msra.mxu0 0.0
  %3307 = vmatpush.xpose.msra.mxu0 0.0
  %3308 = vmatpush.xpose.msra.mxu0 0.0
  %3309 = vmatpush.xpose.msra.mxu0 0.0
  %3310 = vmatpush.xpose.msra.mxu0 0.0
  %3311 = vmatpush.xpose.msra.mxu0 0.0
  %3312 = vmatpush.xpose.msra.mxu0 0.0
  %3313 = vmatpush.xpose.msra.mxu0 0.0
  %3314 = vmatpush.xpose.msra.mxu0 0.0
  %3315 = vmatpush.xpose.msra.mxu0 %v3298
  %3316 = vmatmul.f32.gmra.mxu0 %v3295
  %v3317 = vpop.f32.mrf.mxu0
  %v3318 = vadd.f32 0.0, %v3317
  %3319 = vdwg.mxu0
  %v3320 = vmul.f32 %v3318, 0.35355338
  %v3321 = vsel %vm83, %v3320, -inf
  %3322 = vmax.xlane.f32.xlu0 %v3321
  %v3323 = vpop.xlane.xlu0 %3322
  %v3324 = vsub.f32 %v3320, %v3323
  %v3325 = vmul.f32 %v3324, 1.442695
  %v3326 = vpow.pop %v3325
  %v3327 = vsel %vm83, %v3326, 0.0
  %3328 = vadd.xlane.f32.xlu0 %v3327
  %v3329 = vpop.xlane.xlu0 %3328
  %v3330 = vrcp.pop %v3329
  %v3331 = vmul.f32 %v3326, %v3330
  %v3333 = vsel %vm83, %v3331, 0
  %3335 = vmatpush.msra.mxu0 0.0
  %3336 = vmatpush.msra.mxu0 0.0
  %3337 = vmatpush.msra.mxu0 0.0
  %3338 = vmatpush.msra.mxu0 0.0
  %3339 = vmatpush.msra.mxu0 0.0
  %3340 = vmatpush.msra.mxu0 0.0
  %3341 = vmatpush.msra.mxu0 0.0
  %3342 = vmatpush.msra.mxu0 0.0
  %3343 = vmatpush.msra.mxu0 0.0
  %3344 = vmatpush.msra.mxu0 0.0
  %3345 = vmatpush.msra.mxu0 0.0
  %3346 = vmatpush.msra.mxu0 0.0
  %3347 = vmatpush.msra.mxu0 0.0
  %3348 = vmatpush.msra.mxu0 0.0
  %3349 = vmatpush.msra.mxu0 0.0
  %3350 = vmatpush.msra.mxu0 %v3292
  %3351 = vmatmul.f32.gmra.mxu0 %v3333
  %v3352 = vpop.f32.mrf.mxu0
  %v3353 = vadd.f32 0.0, %v3352
  %3354 = vdwg.mxu0
  %v3355 = vld [vmem:[%s1650] sm:$0xff]
  %v3357 = vsel %vm83, %v3353, 0
  %3359 = vmatpush.msra.mxu0 0.0
  %3360 = vmatpush.msra.mxu0 0.0
  %3361 = vmatpush.msra.mxu0 0.0
  %3362 = vmatpush.msra.mxu0 0.0
  %3363 = vmatpush.msra.mxu0 0.0
  %3364 = vmatpush.msra.mxu0 0.0
  %3365 = vmatpush.msra.mxu0 0.0
  %3366 = vmatpush.msra.mxu0 0.0
  %3367 = vmatpush.msra.mxu0 0.0
  %3368 = vmatpush.msra.mxu0 0.0
  %3369 = vmatpush.msra.mxu0 0.0
  %3370 = vmatpush.msra.mxu0 0.0
  %3371 = vmatpush.msra.mxu0 0.0
  %3372 = vmatpush.msra.mxu0 0.0
  %3373 = vmatpush.msra.mxu0 0.0
  %3374 = vmatpush.msra.mxu0 %v3355
  %3375 = vmatmul.f32.gmra.mxu0 %v3357
  %v3376 = vpop.f32.mrf.mxu0
  %v3377 = vadd.f32 0.0, %v3376
  %3378 = vdwg.mxu0
  %v3379 = vadd.f32 %v3209, %v3377
  %v3380 = vsel %vm121, %v3379, 0.0
  %3381 = vadd.xlane.f32.xlu0 %v3380
  %v3382 = vpop.xlane.xlu0 %3381
  %v3383 = vmul.f32 %v3382, %v827
  %v3384 = vsub.f32 %v3379, %v3383
  %v3385 = vmul.f32 %v3384, %v3384
  %v3386 = vsel %vm121, %v3385, 0.0
  %3387 = vadd.xlane.f32.xlu0 %v3386
  %v3388 = vpop.xlane.xlu0 %3387
  %v3389 = vmul.f32 %v3388, %v827
  %v3390 = vadd.f32 %v3389, 1e-05
  %v3391 = vrsqrt.pop %v3390
  %v3392 = vmul.f32 %v3391, %v3390
  %v3393 = vmul.f32 %v3392, %v3391
  %v3394 = vmul.f32 0.5, %v3393
  %v3395 = vsub.f32 1.5, %v3394
  %v3396 = vmul.f32 %v3391, %v3395
  %vm3397 = vweird.f32 %v3390
  %vm3398 = vweird.f32 %v3391
  %vm3399 = vmor %vm3397, %vm3398
  %v3400 = vsel %vm3399, %v3391, %v3396
  %v3401 = vmul.f32 %v3384, %v3400
  %v3402 = vld [vmem:[%s1698] sm:$0x1]
  %v3404 = vperm.slane %v3402, 0
  %v3406 = vmul.f32 %v3401, %v3404
  %v3407 = vld [vmem:[%s1704] sm:$0x1]
  %v3409 = vperm.slane %v3407, 0
  %v3411 = vadd.f32 %v3406, %v3409
  %v3412 = vld [vmem:[%s1710] sm:$0xff]
  %v3413 = vld [vmem:[%s1710 + $0x8] sm:$0xff]
  %v3414 = vld [vmem:[%s1710 + $0x10] sm:$0xff]
  %v3415 = vld [vmem:[%s1710 + $0x18] sm:$0xff]
  %v3416 = vld [vmem:[%s1715] sm:$0x1]
  %v3418 = vperm.slane %v3416, 0
  %v3421 = vsel %vm121, %v3411, 0
  %3423 = vmatpush.msra.mxu0 0.0
  %3424 = vmatpush.msra.mxu0 0.0
  %3425 = vmatpush.msra.mxu0 0.0
  %3426 = vmatpush.msra.mxu0 0.0
  %3427 = vmatpush.msra.mxu0 0.0
  %3428 = vmatpush.msra.mxu0 0.0
  %3429 = vmatpush.msra.mxu0 0.0
  %3430 = vmatpush.msra.mxu0 0.0
  %3431 = vmatpush.msra.mxu0 0.0
  %3432 = vmatpush.msra.mxu0 0.0
  %3433 = vmatpush.msra.mxu0 0.0
  %3434 = vmatpush.msra.mxu0 0.0
  %3435 = vmatpush.msra.mxu0 %v3415
  %3436 = vmatpush.msra.mxu0 %v3414
  %3437 = vmatpush.msra.mxu0 %v3413
  %3438 = vmatpush.msra.mxu0 %v3412
  %3439 = vmatmul.f32.gmra.mxu0 %v3421
  %v3440 = vpop.f32.mrf.mxu0
  %v3441 = vadd.f32 %v3418, %v3440
  %3442 = vdwg.mxu0
  %v3443 = vmax.f32 %v3441, 0.0
  %v3444 = vld [vmem:[%s1744] sm:$0xff]
  %v3445 = vld [vmem:[%s1744 + $0x8] sm:$0xff]
  %v3446 = vld [vmem:[%s1744 + $0x10] sm:$0xff]
  %v3447 = vld [vmem:[%s1744 + $0x18] sm:$0xff]
  %v3448 = vld [vmem:[%s1744 + $0x20] sm:$0xff]
  %v3449 = vld [vmem:[%s1744 + $0x28] sm:$0xff]
  %v3450 = vld [vmem:[%s1744 + $0x30] sm:$0xff]
  %v3451 = vld [vmem:[%s1744 + $0x38] sm:$0xff]
  %v3453 = vsel %vm897, %v3443, 0
  %3455 = vmatpush.msra.mxu0 0.0
  %3456 = vmatpush.msra.mxu0 0.0
  %3457 = vmatpush.msra.mxu0 0.0
  %3458 = vmatpush.msra.mxu0 0.0
  %3459 = vmatpush.msra.mxu0 0.0
  %3460 = vmatpush.msra.mxu0 0.0
  %3461 = vmatpush.msra.mxu0 0.0
  %3462 = vmatpush.msra.mxu0 0.0
  %3463 = vmatpush.msra.mxu0 %v3451
  %3464 = vmatpush.msra.mxu0 %v3450
  %3465 = vmatpush.msra.mxu0 %v3449
  %3466 = vmatpush.msra.mxu0 %v3448
  %3467 = vmatpush.msra.mxu0 %v3447
  %3468 = vmatpush.msra.mxu0 %v3446
  %3469 = vmatpush.msra.mxu0 %v3445
  %3470 = vmatpush.msra.mxu0 %v3444
  %3471 = vmatmul.f32.gmra.mxu0 %v3453
  %v3472 = vpop.f32.mrf.mxu0
  %v3473 = vadd.f32 0.0, %v3472
  %3474 = vdwg.mxu0
  %v3475 = vadd.f32 %v3411, %v3473
  %v3476 = vld [vmem:[%s1777] sm:$0x1]
  %v3478 = vperm.slane %v3476, 0
  %v3480 = vadd.f32 %v3475, %v3478
  %v3481 = vsel %vm121, %v3480, 0.0
  %3482 = vadd.xlane.f32.xlu0 %v3481
  %v3483 = vpop.xlane.xlu0 %3482
  %v3484 = vmul.f32 %v3483, %v827
  %v3485 = vsub.f32 %v3480, %v3484
  %v3486 = vmul.f32 %v3485, %v3485
  %v3487 = vsel %vm121, %v3486, 0.0
  %3488 = vadd.xlane.f32.xlu0 %v3487
  %v3489 = vpop.xlane.xlu0 %3488
  %v3490 = vmul.f32 %v3489, %v827
  %v3491 = vadd.f32 %v3490, 1e-05
  %v3492 = vrsqrt.pop %v3491
  %v3493 = vmul.f32 %v3492, %v3491
  %v3494 = vmul.f32 %v3493, %v3492
  %v3495 = vmul.f32 0.5, %v3494
  %v3496 = vsub.f32 1.5, %v3495
  %v3497 = vmul.f32 %v3492, %v3496
  %vm3498 = vweird.f32 %v3491
  %vm3499 = vweird.f32 %v3492
  %vm3500 = vmor %vm3498, %vm3499
  %v3501 = vsel %vm3500, %v3492, %v3497
  %v3502 = vmul.f32 %v3485, %v3501
  %v3503 = vld [vmem:[%s1805] sm:$0x1]
  %v3505 = vperm.slane %v3503, 0
  %v3507 = vmul.f32 %v3502, %v3505
  %v3508 = vld [vmem:[%s1811] sm:$0x1]
  %v3510 = vperm.slane %v3508, 0
  %v3512 = vadd.f32 %v3507, %v3510
  %v3514 = vsel %vm121, %v3512, 0
  %3516 = vmatpush.msra.mxu0 0.0
  %3517 = vmatpush.msra.mxu0 0.0
  %3518 = vmatpush.msra.mxu0 0.0
  %3519 = vmatpush.msra.mxu0 0.0
  %3520 = vmatpush.msra.mxu0 0.0
  %3521 = vmatpush.msra.mxu0 0.0
  %3522 = vmatpush.msra.mxu0 0.0
  %3523 = vmatpush.msra.mxu0 0.0
  %3524 = vmatpush.msra.mxu0 0.0
  %3525 = vmatpush.msra.mxu0 0.0
  %3526 = vmatpush.msra.mxu0 0.0
  %3527 = vmatpush.msra.mxu0 0.0
  %3528 = vmatpush.msra.mxu0 %v77
  %3529 = vmatpush.msra.mxu0 %v76
  %3530 = vmatpush.msra.mxu0 %v75
  %3531 = vmatpush.msra.mxu0 %v74
  %3532 = vmatmul.f32.gmra.mxu0 %v3514
  %v3533 = vpop.f32.mrf.mxu0
  %v3534 = vadd.f32 %v1818, %v3533
  %3535 = vdwg.mxu0
  %3536 = vst [vmem:[%s22 + $0x8] sm:$0xff] %v3534
  // Predicated region
  $region90: #{smart_home_transformer.1} parent=0 // pred_check
    _
  $region91: #{smart_home_transformer.1} parent=0 // pred_check_branch
    %3538 = sbr.rel (0) target = $region93
  $region92: #{smart_home_transformer.1} parent=0 // pred_region
    _
  $region93: #{smart_home_transformer.1} parent=0 // pred_fallthru
    _
  // Predicated region
  $region94: #{smart_home_transformer.1} parent=0 // pred_check
    _
  $region95: #{smart_home_transformer.1} parent=0 // pred_check_branch
    %3540 = sbr.rel (0) target = $region97
  $region96: #{smart_home_transformer.1} parent=0 // pred_region
    _
  $region97: #{smart_home_transformer.1} parent=0 // pred_fallthru
    _

</llo_original>
